<compile_context>
chip_gen: v6e
topology: v6e:2x2x1
jax: 0.10.0
libtpu: 0.0.40
codegen_flags: <defaults>
</compile_context>

<pallas_src>
import functools

import jax
import jax.numpy as jnp
from jax.experimental import pallas as pl
from jax.experimental.pallas import tpu as pltpu


_COMPILER_PARAMS = pltpu.CompilerParams(
    dimension_semantics=("parallel",),
    vmem_limit_bytes=32 * 1024 * 1024,
)


# ----------------------------------------------------------------------------
# In-kernel math helpers
# ----------------------------------------------------------------------------
def _erf(x, fast=False):
    # Abramowitz & Stegun 7.1.26 polynomial, max abs error ~1.5e-7. Avoids
    # relying on an erf lowering inside Mosaic.  exp() goes to EUP; with
    # fast=True the divide also goes to EUP via approx reciprocal.
    a1 = 0.254829592
    a2 = -0.284496736
    a3 = 1.421413741
    a4 = -1.453152027
    a5 = 1.061405429
    p = 0.3275911
    sgn = jnp.where(x >= 0.0, 1.0, -1.0)
    ax = jnp.abs(x)
    d = 1.0 + p * ax
    t = pl.reciprocal(d, approx=True) if fast else 1.0 / d
    poly = ((((a5 * t + a4) * t + a3) * t + a2) * t + a1) * t
    return sgn * (1.0 - poly * jnp.exp(-ax * ax))


def _gelu(x, fast=False):
    # erf-based GELU, matching PyTorch F.gelu default.
    return 0.5 * x * (1.0 + _erf(x * 0.7071067811865476, fast))


# ----------------------------------------------------------------------------
# Static tiling / packing helpers (all trace-time Python on static shapes)
# ----------------------------------------------------------------------------
def _num_tensorcores():
    """Grid steps to shard across: 2 on multi-TC parts (v7x/v5p/v4), else 1."""
    try:
        kind = (jax.devices()[0].device_kind or "").lower()
    except Exception:
        return 1
    if "lite" in kind or "v5e" in kind or "v6e" in kind or "v6" in kind:
        return 1
    for tag in ("v7", "v5p", "v4"):
        if tag in kind:
            return 2
    return 1


def _row_pack(M, width, lane_target=128):
    """How many consecutive pixels to fold into one 128-lane packed row."""
    p = max(1, lane_target // max(1, width))
    while p > 1 and M % p != 0:
        p -= 1
    return p


def _pick_group(F, two_ci, lane_target=128):
    """Frequencies fused per block-diagonal spectral matmul (divides F)."""
    gmax = max(1, lane_target // max(1, two_ci))
    g = 1
    for t in range(1, gmax + 1):
        if F % t == 0:
            g = t
    return g


def _pick_tm(M, target, min_tiles=1):
    """Row-tile size (multiple of 8 when possible) and padding."""
    if M <= 8:
        return M, 0
    want = max(min_tiles, pl.cdiv(M, target))
    hi = max(8, min(M, M // want))
    best = None
    for t in range(8, hi + 1, 8):
        if M % t == 0:
            best = t
    if best is not None:
        return best, 0
    tm = max(8, (min(M, target) // 8) * 8)
    pad = pl.cdiv(M, tm) * tm - M
    return tm, pad


def _pick_tg(NG, target, min_tiles=1):
    """Frequency-groups per grid step (must divide NG)."""
    want = max(min_tiles, pl.cdiv(NG, target))
    if want >= NG:
        return 1
    best = 1
    for t in range(1, NG // want + 1):
        if NG % t == 0:
            best = t
    return best


# ----------------------------------------------------------------------------
# Pallas kernels
# ----------------------------------------------------------------------------
def _linear_kernel(x_ref, w_ref, b_ref, o_ref, *, apply_gelu, fast):
    lhs = x_ref[...].astype(w_ref.dtype)                 # bf16 MXU operand (fast)
    y = jnp.dot(lhs, w_ref[...], preferred_element_type=jnp.float32)
    y = y + b_ref[...]
    if apply_gelu:
        y = _gelu(y, fast)
    o_ref[...] = y.astype(o_ref.dtype)


def _linear_residual_gelu_kernel(x_ref, res_ref, w_ref, b_ref, o_ref, *, fast):
    # FNO block combine: gelu(conv1x1(x) + bias + spectral_out); residual and
    # elementwise math stay f32.
    lhs = x_ref[...].astype(w_ref.dtype)
    y = jnp.dot(lhs, w_ref[...], preferred_element_type=jnp.float32)
    y = y + b_ref[...] + res_ref[...]
    o_ref[...] = _gelu(y, fast).astype(o_ref.dtype)


def _mlp_head_kernel(x_ref, w1_ref, b1_ref, w2_ref, b2_ref, o_ref, *, fast):
    # Fused projection head fc2(gelu(fc1(x))); the wide intermediate never
    # leaves VMEM.  (Sub-chunking of h was left out: tiles are small enough
    # that it stays well under the spill threshold at these widths.)
    lhs = x_ref[...].astype(w1_ref.dtype)
    h = jnp.dot(lhs, w1_ref[...], preferred_element_type=jnp.float32)
    h = _gelu(h + b1_ref[...], fast)
    y = jnp.dot(h.astype(w2_ref.dtype), w2_ref[...],
                preferred_element_type=jnp.float32) + b2_ref[...]
    o_ref[...] = y.astype(o_ref.dtype)


def _spectral_kernel(x_ref, w_ref, o_ref):
    # Block-diagonal packed complex channel mixing:
    #   x: (TG, B, G*2Ci)   = [xr_0|xi_0|...|xr_{G-1}|xi_{G-1}] per group
    #   w: (TG, G*2Ci, G*2Co) block-diag of per-frequency 2x2 real forms
    #   o: (TG, B, G*2Co)
    # Lane-dense (128-wide) MXU matmuls; G frequencies fused per push.
    lhs = x_ref[...].astype(w_ref.dtype)
    o_ref[...] = jnp.einsum(
        "gbk,gko->gbo", lhs, w_ref[...],
        preferred_element_type=jnp.float32,
    ).astype(o_ref.dtype)


# ----------------------------------------------------------------------------
# pallas_call wrappers
# ----------------------------------------------------------------------------
def linear_pallas(x, w, b, *, residual=None, apply_gelu=False, fast=True,
                  min_tiles=1, row_target=512):
    """y = x @ w + b (+ residual) (+ gelu) over packed rows."""
    M, K = x.shape
    N = w.shape[1]
    tm, pad = _pick_tm(M, row_target, min_tiles)
    if pad:
        x = jnp.pad(x, ((0, pad), (0, 0)))
        if residual is not None:
            residual = jnp.pad(residual, ((0, pad), (0, 0)))
    Mt = M + pad
    grid = (Mt // tm,)

    x_spec = pl.BlockSpec((tm, K), lambda i: (i, 0))
    w_spec = pl.BlockSpec((K, N), lambda i: (0, 0))
    b_spec = pl.BlockSpec((1, N), lambda i: (0, 0))
    o_spec = pl.BlockSpec((tm, N), lambda i: (i, 0))

    if residual is None:
        kernel = functools.partial(_linear_kernel, apply_gelu=apply_gelu, fast=fast)
        in_specs = [x_spec, w_spec, b_spec]
        args = (x, w, b)
    else:
        kernel = functools.partial(_linear_residual_gelu_kernel, fast=fast)
        in_specs = [x_spec, o_spec, w_spec, b_spec]
        args = (x, residual, w, b)

    out = pl.pallas_call(
        kernel,
        grid=grid,
        in_specs=in_specs,
        out_specs=o_spec,
        out_shape=jax.ShapeDtypeStruct((Mt, N), jnp.float32),
        compiler_params=_COMPILER_PARAMS,
    )(*args)
    return out[:M] if pad else out


def mlp_head_pallas(x, w1, b1, w2, b2, *, fast=True, min_tiles=1, row_target=512):
    """Fused fc2(gelu(fc1(x))) over packed rows."""
    M, K = x.shape
    Hd = w1.shape[1]
    N = w2.shape[1]
    tm, pad = _pick_tm(M, row_target, min_tiles)
    if pad:
        x = jnp.pad(x, ((0, pad), (0, 0)))
    Mt = M + pad
    out = pl.pallas_call(
        functools.partial(_mlp_head_kernel, fast=fast),
        grid=(Mt // tm,),
        in_specs=[
            pl.BlockSpec((tm, K), lambda i: (i, 0)),
            pl.BlockSpec((K, Hd), lambda i: (0, 0)),
            pl.BlockSpec((1, Hd), lambda i: (0, 0)),
            pl.BlockSpec((Hd, N), lambda i: (0, 0)),
            pl.BlockSpec((1, N), lambda i: (0, 0)),
        ],
        out_specs=pl.BlockSpec((tm, N), lambda i: (i, 0)),
        out_shape=jax.ShapeDtypeStruct((Mt, N), jnp.float32),
        compiler_params=_COMPILER_PARAMS,
    )(x, w1, b1, w2, b2)
    return out[:M] if pad else out


def spectral_mul_pallas(x_grp, w_grp, *, min_tiles=1, tg_target=16):
    """Block-diagonal packed complex mixing, TG frequency-groups per step."""
    NG, B, GK = x_grp.shape
    GN = w_grp.shape[2]
    tg = _pick_tg(NG, tg_target, min_tiles)
    return pl.pallas_call(
        _spectral_kernel,
        grid=(NG // tg,),
        in_specs=[
            pl.BlockSpec((tg, B, GK), lambda g: (g, 0, 0)),
            pl.BlockSpec((tg, GK, GN), lambda g: (g, 0, 0)),
        ],
        out_specs=pl.BlockSpec((tg, B, GN), lambda g: (g, 0, 0)),
        out_shape=jax.ShapeDtypeStruct((NG, B, GN), jnp.float32),
        compiler_params=_COMPILER_PARAMS,
    )(x_grp, w_grp)


# ----------------------------------------------------------------------------
# Static weight packing (hoisted to init; never re-done in the forward)
# ----------------------------------------------------------------------------
def pack_spectral_weights(w1r, w1i, w2r, w2i, group=1):
    """(Ci,Co,m1,m2) x4 -> (F/G, G*2Ci, G*2Co) block-diagonal real form."""
    def fio(w):
        Ci, Co, a, b = w.shape
        return jnp.transpose(w, (2, 3, 0, 1)).reshape(a * b, Ci, Co)

    wr = jnp.concatenate([fio(w1r), fio(w2r)], axis=0)    # (F, Ci, Co)
    wi = jnp.concatenate([fio(w1i), fio(w2i)], axis=0)
    top = jnp.concatenate([wr, wi], axis=-1)               # (F, Ci, 2Co)
    bot = jnp.concatenate([-wi, wr], axis=-1)
    m = jnp.concatenate([top, bot], axis=1)                # (F, 2Ci, 2Co)
    F, K, N = m.shape
    G = group
    assert F % G == 0
    blocks = m.reshape(F // G, G, K, N)
    eye = jnp.eye(G, dtype=m.dtype)
    bd = blocks[:, :, None, :, :] * eye[None, :, :, None, None]  # (NG,G,G,K,N)
    bd = jnp.transpose(bd, (0, 1, 3, 2, 4)).reshape(F // G, G * K, G * N)
    return bd


def prepare_pallas_weights(W, *, batch, R, m1, m2, fast=True):
    """Kron row-packing for pointwise layers + block-diag spectral packing."""
    width = W["fc0_w"].shape[1]
    M = batch * R * R
    P = _row_pack(M, width)
    mat_dtype = jnp.bfloat16 if fast else jnp.float32

    def kron_pack(w, b):
        wp = jnp.kron(jnp.eye(P, dtype=w.dtype), w).astype(mat_dtype)
        bp = jnp.tile(b, P).reshape(1, -1).astype(jnp.float32)
        return wp, bp

    fc0_w, fc0_b = kron_pack(W["fc0_w"], W["fc0_b"])
    fc1_w, fc1_b = kron_pack(W["fc1_w"], W["fc1_b"])
    fc2_w, fc2_b = kron_pack(W["fc2_w"], W["fc2_b"])

    G = _pick_group(2 * m1 * m2, 2 * width)
    layers = []
    for layer in W["layers"]:
        conv_w, conv_b = kron_pack(layer["conv_w"], layer["conv_b"])
        w_spec = pack_spectral_weights(
            layer["w1r"], layer["w1i"], layer["w2r"], layer["w2i"], group=G
        ).astype(mat_dtype)
        layers.append(dict(conv_w=conv_w, conv_b=conv_b, w_spec=w_spec))

    return dict(fc0_w=fc0_w, fc0_b=fc0_b, fc1_w=fc1_w, fc1_b=fc1_b,
                fc2_w=fc2_w, fc2_b=fc2_b, layers=layers)


# ----------------------------------------------------------------------------
# SpectralConv2d (FFT glue in JAX, channel mixing in Pallas)
# ----------------------------------------------------------------------------
def spectral_conv_nhwc(x, w_grp, m1, m2, *, min_tiles=1):
    B, H, W, Ci = x.shape
    NG, GK, GN = w_grp.shape
    G = GK // (2 * Ci)
    Co = GN // (2 * G)
    F = NG * G
    assert F == 2 * m1 * m2, "spectral weight packing mismatch"
    assert 2 * m1 <= H, "modes1 too large for the input resolution"

    x_ft = jnp.fft.rfft2(x.astype(jnp.float32), axes=(1, 2))   # (B,H,Wf,Ci)
    Wf = x_ft.shape[2]
    assert m2 <= Wf, "modes2 too large for the input resolution"

    # single mode gather, pure reshapes on the batch-leading layout
    modes = jnp.concatenate(
        [x_ft[:, :m1, :m2, :], x_ft[:, H - m1:, :m2, :]], axis=1
    ).reshape(B, F, Ci)                                          # (B,F,Ci)
    x_packed = jnp.concatenate([jnp.real(modes), jnp.imag(modes)], axis=-1)
    x_grp = jnp.transpose(x_packed.reshape(B, NG, GK), (1, 0, 2))  # (NG,B,GK)

    o_grp = spectral_mul_pallas(x_grp, w_grp, min_tiles=min_tiles)  # (NG,B,GN)

    o = jnp.transpose(o_grp, (1, 0, 2)).reshape(B, F, 2 * Co)
    o_c = jax.lax.complex(o[..., :Co], o[..., Co:]).reshape(B, 2 * m1, m2, Co)

    out_ft = jnp.zeros((B, H, Wf, Co), jnp.complex64)
    out_ft = out_ft.at[:, :m1, :m2, :].set(o_c[:, :m1])
    out_ft = out_ft.at[:, H - m1:, :m2, :].set(o_c[:, m1:])
    return jnp.fft.irfft2(out_ft, s=(H, W), axes=(1, 2))        # (B,H,W,Co)


# ----------------------------------------------------------------------------
# Full FNO forward (Pallas path)
# ----------------------------------------------------------------------------
def make_grid(R):
    xs = jnp.linspace(-1.0, 1.0, R)
    X, Y = jnp.meshgrid(xs, xs, indexing="ij")
    return jnp.stack([X, Y], axis=-1)  # (R, R, 2)


def fno_forward(params_in, Wp, *, m1, m2, R, width, fast=True, min_tiles=1):
    B, input_dim = params_in.shape
    M = B * R * R
    P = _row_pack(M, width)
    K0 = input_dim + 2
    assert Wp["fc0_w"].shape[0] == P * K0, "packed-weight / batch mismatch"
    Mp = M // P
    row_target = max(64, 2048 // P)

    grid = make_grid(R)
    x = jnp.concatenate(
        [
            jnp.broadcast_to(params_in[:, None, None, :], (B, R, R, input_dim)),
            jnp.broadcast_to(grid[None], (B, R, R, 2)),
        ],
        axis=-1,
    )

    # lifting (fc0) on packed 128-lane rows
    x = linear_pallas(x.reshape(Mp, P * K0), Wp["fc0_w"], Wp["fc0_b"],
                      fast=fast, min_tiles=min_tiles, row_target=row_target)
    x = x.reshape(B, R, R, width)

    # FNO blocks: spectral conv (Pallas mixing) + fused 1x1conv/residual/GELU
    for layer in Wp["layers"]:
        x1 = spectral_conv_nhwc(x, layer["w_spec"], m1, m2, min_tiles=min_tiles)
        x = linear_pallas(
            x.reshape(Mp, P * width), layer["conv_w"], layer["conv_b"],
            residual=x1.reshape(Mp, P * width),
            fast=fast, min_tiles=min_tiles, row_target=row_target,
        ).reshape(B, R, R, width)

    # fused projection head fc2(gelu(fc1(x)))
    y = mlp_head_pallas(x.reshape(Mp, P * width), Wp["fc1_w"], Wp["fc1_b"],
                        Wp["fc2_w"], Wp["fc2_b"],
                        fast=fast, min_tiles=min_tiles, row_target=row_target)
    out_nhwc = y.reshape(B, R, R, -1)
    return jnp.transpose(out_nhwc, (0, 3, 1, 2))   # NCHW, as in the module


# ----------------------------------------------------------------------------
# Pure-JAX reference (same math, no Pallas) for the correctness check
# ----------------------------------------------------------------------------
def fno_reference(params_in, W, *, m1, m2, R):
    B, input_dim = params_in.shape
    grid = make_grid(R)
    x = jnp.concatenate(
        [
            jnp.broadcast_to(params_in[:, None, None, :], (B, R, R, input_dim)),
            jnp.broadcast_to(grid[None], (B, R, R, 2)),
        ],
        axis=-1,
    )
    x = x @ W["fc0_w"] + W["fc0_b"]
    for layer in W["layers"]:
        x_ft = jnp.fft.rfft2(x, axes=(1, 2))
        Wf = x_ft.shape[2]
        Co = layer["w1r"].shape[1]
        w1 = layer["w1r"] + 1j * layer["w1i"]
        w2 = layer["w2r"] + 1j * layer["w2i"]
        top = jnp.einsum("bxyi,ioxy->bxyo", x_ft[:, :m1, :m2, :], w1)
        bot = jnp.einsum("bxyi,ioxy->bxyo", x_ft[:, R - m1:, :m2, :], w2)
        out_ft = jnp.zeros((B, R, Wf, Co), dtype=jnp.complex64)
        out_ft = out_ft.at[:, :m1, :m2, :].set(top)
        out_ft = out_ft.at[:, R - m1:, :m2, :].set(bot)
        x1 = jnp.fft.irfft2(out_ft, s=(R, R), axes=(1, 2))
        x2 = x @ layer["conv_w"] + layer["conv_b"]
        x = _gelu(x1 + x2, fast=False)
    x = _gelu(x @ W["fc1_w"] + W["fc1_b"], fast=False)
    x = x @ W["fc2_w"] + W["fc2_b"]
    return jnp.transpose(x, (0, 3, 1, 2))


# ----------------------------------------------------------------------------
# Deterministic parameter init (shapes from the PyTorch module __init__)
# ----------------------------------------------------------------------------
def init_weights(key, input_dim, output_dim, m1, m2, width, num_layers):
    keys = jax.random.split(key, 3 + num_layers)

    def lin(k, fan_in, fan_out):
        kw, kb = jax.random.split(k)
        bound = 1.0 / (fan_in ** 0.5)
        w = jax.random.uniform(kw, (fan_in, fan_out), jnp.float32, -bound, bound)
        b = jax.random.uniform(kb, (fan_out,), jnp.float32, -bound, bound)
        return w, b

    fc0_w, fc0_b = lin(keys[0], input_dim + 2, width)
    fc1_w, fc1_b = lin(keys[1], width, 128)
    fc2_w, fc2_b = lin(keys[2], 128, output_dim)

    layers = []
    scale = 1.0 / (width * width)
    for l in range(num_layers):
        k = jax.random.split(keys[3 + l], 5)
        w1r = scale * jax.random.uniform(k[0], (width, width, m1, m2), jnp.float32)
        w1i = scale * jax.random.uniform(k[1], (width, width, m1, m2), jnp.float32)
        w2r = scale * jax.random.uniform(k[2], (width, width, m1, m2), jnp.float32)
        w2i = scale * jax.random.uniform(k[3], (width, width, m1, m2), jnp.float32)
        conv_w, conv_b = lin(k[4], width, width)  # nn.Conv2d(width,width,1) as (in,out)
        layers.append(dict(w1r=w1r, w1i=w1i, w2r=w2r, w2i=w2i,
                           conv_w=conv_w, conv_b=conv_b))
    return dict(fc0_w=fc0_w, fc0_b=fc0_b, fc1_w=fc1_w, fc1_b=fc1_b,
                fc2_w=fc2_w, fc2_b=fc2_b, layers=layers)


if __name__ == "__main__":
    # small shapes consistent with the module's forward
    B, input_dim, output_dim = 2, 3, 2
    m1 = m2 = 4
    width = 16
    num_layers = 2
    R = 16  # input_resolution

    key = jax.random.PRNGKey(0)
    kp, kw = jax.random.split(key)
    params_in = jax.random.normal(kp, (B, input_dim), jnp.float32)
    weights = init_weights(kw, input_dim, output_dim, m1, m2, width, num_layers)
    min_tiles = _num_tensorcores()

    ref = jax.block_until_ready(fno_reference(params_in, weights, m1=m1, m2=m2, R=R))
    ref_scale = float(jnp.max(jnp.abs(ref))) + 1e-6

    # 1) f32 validation path (exact reciprocal, f32 MXU operands): tight check
    wp_f32 = prepare_pallas_weights(weights, batch=B, R=R, m1=m1, m2=m2, fast=False)
    fwd_f32 = jax.jit(functools.partial(
        fno_forward, m1=m1, m2=m2, R=R, width=width, fast=False, min_tiles=min_tiles))
    out_f32 = jax.block_until_ready(fwd_f32(params_in, wp_f32))
    assert out_f32.shape == (B, output_dim, R, R), out_f32.shape
    err_f32 = float(jnp.max(jnp.abs(out_f32 - ref)))
    assert err_f32 < 2e-3, f"f32 path mismatch vs reference: max abs err {err_f32}"

    # 2) fast production path (bf16 MXU operands, EUP approx reciprocal in GELU)
    wp_fast = prepare_pallas_weights(weights, batch=B, R=R, m1=m1, m2=m2, fast=True)
    fwd_fast = jax.jit(functools.partial(
        fno_forward, m1=m1, m2=m2, R=R, width=width, fast=True, min_tiles=min_tiles))
    out_fast = jax.block_until_ready(fwd_fast(params_in, wp_fast))
    assert out_fast.shape == (B, output_dim, R, R), out_fast.shape
    err_fast = float(jnp.max(jnp.abs(out_fast - ref)))
    tol_fast = max(5e-2, 5e-2 * ref_scale)
    assert err_fast < tol_fast, (
        f"fast (bf16) path mismatch vs reference: max abs err {err_fast} > {tol_fast}")

    print("KERNEL_OK")
</pallas_src>

<mosaic_0001>
module attributes {stable_mosaic.version = 11 : i64} {
  func.func @_linear_kernel(%arg0: i32, %arg1: memref<64x40xf32, #tpu.memory_space<vmem>>, %arg2: memref<40x128xf32, #tpu.memory_space<vmem>>, %arg3: memref<1x128xf32, #tpu.memory_space<vmem>>, %arg4: memref<64x128xf32, #tpu.memory_space<vmem>>) attributes {dimension_semantics = [#tpu.dimension_semantics<parallel>], iteration_bounds = array<i64: 1>, scalar_prefetch = 0 : i64, scratch_operands = 0 : i64, tpu.core_type = #tpu.core_type<tc>, window_params = [{transform_indices = @transform_0, window_bounds = array<i64: 64, 40>}, {pipeline_mode = #tpu.pipeline_mode<synchronous>, transform_indices = @transform_1, window_bounds = array<i64: 40, 128>}, {pipeline_mode = #tpu.pipeline_mode<synchronous>, transform_indices = @transform_2, window_bounds = array<i64: 1, 128>}, {transform_indices = @transform_3, window_bounds = array<i64: 64, 128>}]} {
    %c0 = arith.constant 0 : index
    %c0_0 = arith.constant 0 : index
    %0 = vector.load %arg1[%c0, %c0_0] : memref<64x40xf32, #tpu.memory_space<vmem>>, vector<64x40xf32>
    %c0_1 = arith.constant 0 : index
    %c0_2 = arith.constant 0 : index
    %1 = vector.load %arg2[%c0_1, %c0_2] : memref<40x128xf32, #tpu.memory_space<vmem>>, vector<40x128xf32>
    %cst = arith.constant dense<0.000000e+00> : vector<64x128xf32>
    %2 = tpu.matmul %0, %1, %cst {dimension_numbers = #tpu.dot_dimension_numbers<[1], [0], [0], [1], [0, 0, 1, 1], [], []>} : vector<64x40xf32>, vector<40x128xf32>, vector<64x128xf32> -> vector<64x128xf32>
    %c0_3 = arith.constant 0 : index
    %c0_4 = arith.constant 0 : index
    %3 = vector.load %arg3[%c0_3, %c0_4] : memref<1x128xf32, #tpu.memory_space<vmem>>, vector<1x128xf32>
    %4 = vector.broadcast %3 : vector<1x128xf32> to vector<64x128xf32>
    %5 = arith.addf %2, %4 : vector<64x128xf32>
    %c0_5 = arith.constant 0 : index
    %c0_6 = arith.constant 0 : index
    %6 = vector.load %arg4[%c0_5, %c0_6] : memref<64x128xf32, #tpu.memory_space<vmem>>, vector<64x128xf32>
    tpu.vector_store %arg4[%c0_5, %c0_6], %5 {strides = array<i32>} : memref<64x128xf32, #tpu.memory_space<vmem>>, vector<64x128xf32>,
    return
  }
  func.func @transform_0(%arg0: i32) -> (i32, i32) {
    %c0_i32 = arith.constant 0 : i32
    %c0_i32_0 = arith.constant 0 : i32
    return %arg0, %c0_i32 : i32, i32
  }
  func.func @transform_1(%arg0: i32) -> (i32, i32) {
    %c0_i32 = arith.constant 0 : i32
    %c0_i32_0 = arith.constant 0 : i32
    %c0_i32_1 = arith.constant 0 : i32
    return %c0_i32, %c0_i32_0 : i32, i32
  }
  func.func @transform_2(%arg0: i32) -> (i32, i32) {
    %c0_i32 = arith.constant 0 : i32
    %c0_i32_0 = arith.constant 0 : i32
    %c0_i32_1 = arith.constant 0 : i32
    return %c0_i32, %c0_i32_0 : i32, i32
  }
  func.func @transform_3(%arg0: i32) -> (i32, i32) {
    %c0_i32 = arith.constant 0 : i32
    %c0_i32_0 = arith.constant 0 : i32
    return %arg0, %c0_i32 : i32, i32
  }
}

module attributes {stable_mosaic.version = 11 : i64} {
  func.func @_spectral_kernel(%arg0: i32, %arg1: memref<8x2x128xf32, #tpu.memory_space<vmem>>, %arg2: memref<8x128x128xf32, #tpu.memory_space<vmem>>, %arg3: memref<8x2x128xf32, #tpu.memory_space<vmem>>) attributes {dimension_semantics = [#tpu.dimension_semantics<parallel>], iteration_bounds = array<i64: 1>, scalar_prefetch = 0 : i64, scratch_operands = 0 : i64, tpu.core_type = #tpu.core_type<tc>, window_params = [{transform_indices = @transform_0, window_bounds = array<i64: 8, 2, 128>}, {transform_indices = @transform_1, window_bounds = array<i64: 8, 128, 128>}, {transform_indices = @transform_2, window_bounds = array<i64: 8, 2, 128>}]} {
    %c0 = arith.constant 0 : index
    %c0_0 = arith.constant 0 : index
    %c0_1 = arith.constant 0 : index
    %0 = vector.load %arg1[%c0, %c0_0, %c0_1] : memref<8x2x128xf32, #tpu.memory_space<vmem>>, vector<8x2x128xf32>
    %c0_2 = arith.constant 0 : index
    %c0_3 = arith.constant 0 : index
    %c0_4 = arith.constant 0 : index
    %1 = vector.load %arg2[%c0_2, %c0_3, %c0_4] : memref<8x128x128xf32, #tpu.memory_space<vmem>>, vector<8x128x128xf32>
    "tpu.trace_start"() <{level = 10 : i32, message = "gbk,gko->gbo"}> : () -> ()
    %cst = arith.constant dense<0.000000e+00> : vector<8x2x128xf32>
    %2 = tpu.matmul %0, %1, %cst {dimension_numbers = #tpu.dot_dimension_numbers<[2], [1], [1], [2], [0, 0, 0, 1, 1, 2], [0], [0]>} : vector<8x2x128xf32>, vector<8x128x128xf32>, vector<8x2x128xf32> -> vector<8x2x128xf32>
    "tpu.trace_stop"() : () -> ()
    %c0_5 = arith.constant 0 : index
    %c0_6 = arith.constant 0 : index
    %c0_7 = arith.constant 0 : index
    %3 = vector.load %arg3[%c0_5, %c0_6, %c0_7] : memref<8x2x128xf32, #tpu.memory_space<vmem>>, vector<8x2x128xf32>
    tpu.vector_store %arg3[%c0_5, %c0_6, %c0_7], %2 {strides = array<i32>} : memref<8x2x128xf32, #tpu.memory_space<vmem>>, vector<8x2x128xf32>,
    return
  }
  func.func @transform_0(%arg0: i32) -> (i32, i32, i32) {
    %c0_i32 = arith.constant 0 : i32
    %c0_i32_0 = arith.constant 0 : i32
    %c0_i32_1 = arith.constant 0 : i32
    return %arg0, %c0_i32, %c0_i32_0 : i32, i32, i32
  }
  func.func @transform_1(%arg0: i32) -> (i32, i32, i32) {
    %c0_i32 = arith.constant 0 : i32
    %c0_i32_0 = arith.constant 0 : i32
    %c0_i32_1 = arith.constant 0 : i32
    return %arg0, %c0_i32, %c0_i32_0 : i32, i32, i32
  }
  func.func @transform_2(%arg0: i32) -> (i32, i32, i32) {
    %c0_i32 = arith.constant 0 : i32
    %c0_i32_0 = arith.constant 0 : i32
    %c0_i32_1 = arith.constant 0 : i32
    return %arg0, %c0_i32, %c0_i32_0 : i32, i32, i32
  }
}

module attributes {stable_mosaic.version = 11 : i64} {
  func.func @_linear_residual_gelu_kernel(%arg0: i32, %arg1: memref<64x128xf32, #tpu.memory_space<vmem>>, %arg2: memref<64x128xf32, #tpu.memory_space<vmem>>, %arg3: memref<128x128xf32, #tpu.memory_space<vmem>>, %arg4: memref<1x128xf32, #tpu.memory_space<vmem>>, %arg5: memref<64x128xf32, #tpu.memory_space<vmem>>) attributes {dimension_semantics = [#tpu.dimension_semantics<parallel>], iteration_bounds = array<i64: 1>, scalar_prefetch = 0 : i64, scratch_operands = 0 : i64, tpu.core_type = #tpu.core_type<tc>, window_params = [{transform_indices = @transform_0, window_bounds = array<i64: 64, 128>}, {transform_indices = @transform_1, window_bounds = array<i64: 64, 128>}, {pipeline_mode = #tpu.pipeline_mode<synchronous>, transform_indices = @transform_2, window_bounds = array<i64: 128, 128>}, {pipeline_mode = #tpu.pipeline_mode<synchronous>, transform_indices = @transform_3, window_bounds = array<i64: 1, 128>}, {transform_indices = @transform_4, window_bounds = array<i64: 64, 128>}]} {
    %c0 = arith.constant 0 : index
    %c0_0 = arith.constant 0 : index
    %0 = vector.load %arg1[%c0, %c0_0] : memref<64x128xf32, #tpu.memory_space<vmem>>, vector<64x128xf32>
    %c0_1 = arith.constant 0 : index
    %c0_2 = arith.constant 0 : index
    %1 = vector.load %arg3[%c0_1, %c0_2] : memref<128x128xf32, #tpu.memory_space<vmem>>, vector<128x128xf32>
    %cst = arith.constant dense<0.000000e+00> : vector<64x128xf32>
    %2 = tpu.matmul %0, %1, %cst {dimension_numbers = #tpu.dot_dimension_numbers<[1], [0], [0], [1], [0, 0, 1, 1], [], []>} : vector<64x128xf32>, vector<128x128xf32>, vector<64x128xf32> -> vector<64x128xf32>
    %c0_3 = arith.constant 0 : index
    %c0_4 = arith.constant 0 : index
    %3 = vector.load %arg4[%c0_3, %c0_4] : memref<1x128xf32, #tpu.memory_space<vmem>>, vector<1x128xf32>
    %4 = vector.broadcast %3 : vector<1x128xf32> to vector<64x128xf32>
    %5 = arith.addf %2, %4 : vector<64x128xf32>
    %c0_5 = arith.constant 0 : index
    %c0_6 = arith.constant 0 : index
    %6 = vector.load %arg2[%c0_5, %c0_6] : memref<64x128xf32, #tpu.memory_space<vmem>>, vector<64x128xf32>
    %7 = arith.addf %5, %6 : vector<64x128xf32>
    %cst_7 = arith.constant 5.000000e-01 : f32
    %8 = vector.broadcast %cst_7 : f32 to vector<64x128xf32>
    %9 = arith.mulf %8, %7 : vector<64x128xf32>
    %cst_8 = arith.constant 0.707106769 : f32
    %10 = vector.broadcast %cst_8 : f32 to vector<64x128xf32>
    %11 = arith.mulf %7, %10 : vector<64x128xf32>
    %cst_9 = arith.constant 0.000000e+00 : f32
    %12 = vector.broadcast %cst_9 : f32 to vector<64x128xf32>
    %13 = arith.cmpf oge, %11, %12 : vector<64x128xf32>
    %cst_10 = arith.constant 1.000000e+00 : f32
    %cst_11 = arith.constant -1.000000e+00 : f32
    %14 = vector.broadcast %cst_10 : f32 to vector<64x128xf32>
    %15 = vector.broadcast %cst_11 : f32 to vector<64x128xf32>
    %16 = arith.select %13, %14, %15 : vector<64x128xi1>, vector<64x128xf32>
    %17 = math.absf %11 : vector<64x128xf32>
    %cst_12 = arith.constant 0.327591091 : f32
    %18 = vector.broadcast %cst_12 : f32 to vector<64x128xf32>
    %19 = arith.mulf %18, %17 : vector<64x128xf32>
    %cst_13 = arith.constant 1.000000e+00 : f32
    %20 = vector.broadcast %cst_13 : f32 to vector<64x128xf32>
    %21 = arith.addf %20, %19 : vector<64x128xf32>
    %cst_14 = arith.constant 1.000000e+00 : f32
    %22 = vector.broadcast %cst_14 : f32 to vector<64x128xf32>
    %23 = arith.divf %22, %21 : vector<64x128xf32>
    %cst_15 = arith.constant 1.06140542 : f32
    %24 = vector.broadcast %cst_15 : f32 to vector<64x128xf32>
    %25 = arith.mulf %24, %23 : vector<64x128xf32>
    %cst_16 = arith.constant -1.45315206 : f32
    %26 = vector.broadcast %cst_16 : f32 to vector<64x128xf32>
    %27 = arith.addf %25, %26 : vector<64x128xf32>
    %28 = arith.mulf %27, %23 : vector<64x128xf32>
    %cst_17 = arith.constant 1.42141378 : f32
    %29 = vector.broadcast %cst_17 : f32 to vector<64x128xf32>
    %30 = arith.addf %28, %29 : vector<64x128xf32>
    %31 = arith.mulf %30, %23 : vector<64x128xf32>
    %cst_18 = arith.constant -0.284496725 : f32
    %32 = vector.broadcast %cst_18 : f32 to vector<64x128xf32>
    %33 = arith.addf %31, %32 : vector<64x128xf32>
    %34 = arith.mulf %33, %23 : vector<64x128xf32>
    %cst_19 = arith.constant 0.254829586 : f32
    %35 = vector.broadcast %cst_19 : f32 to vector<64x128xf32>
    %36 = arith.addf %34, %35 : vector<64x128xf32>
    %37 = arith.mulf %36, %23 : vector<64x128xf32>
    %cst_20 = arith.constant 0.000000e+00 : f32
    %38 = vector.broadcast %cst_20 : f32 to vector<64x128xf32>
    %39 = arith.subf %38, %17 : vector<64x128xf32>
    %40 = arith.mulf %39, %17 : vector<64x128xf32>
    %41 = math.exp %40 : vector<64x128xf32>
    %42 = arith.mulf %37, %41 : vector<64x128xf32>
    %cst_21 = arith.constant 1.000000e+00 : f32
    %43 = vector.broadcast %cst_21 : f32 to vector<64x128xf32>
    %44 = arith.subf %43, %42 : vector<64x128xf32>
    %45 = arith.mulf %16, %44 : vector<64x128xf32>
    %cst_22 = arith.constant 1.000000e+00 : f32
    %46 = vector.broadcast %cst_22 : f32 to vector<64x128xf32>
    %47 = arith.addf %46, %45 : vector<64x128xf32>
    %48 = arith.mulf %9, %47 : vector<64x128xf32>
    %c0_23 = arith.constant 0 : index
    %c0_24 = arith.constant 0 : index
    %49 = vector.load %arg5[%c0_23, %c0_24] : memref<64x128xf32, #tpu.memory_space<vmem>>, vector<64x128xf32>
    tpu.vector_store %arg5[%c0_23, %c0_24], %48 {strides = array<i32>} : memref<64x128xf32, #tpu.memory_space<vmem>>, vector<64x128xf32>,
    return
  }
  func.func @transform_0(%arg0: i32) -> (i32, i32) {
    %c0_i32 = arith.constant 0 : i32
    %c0_i32_0 = arith.constant 0 : i32
    return %arg0, %c0_i32 : i32, i32
  }
  func.func @transform_1(%arg0: i32) -> (i32, i32) {
    %c0_i32 = arith.constant 0 : i32
    %c0_i32_0 = arith.constant 0 : i32
    return %arg0, %c0_i32 : i32, i32
  }
  func.func @transform_2(%arg0: i32) -> (i32, i32) {
    %c0_i32 = arith.constant 0 : i32
    %c0_i32_0 = arith.constant 0 : i32
    %c0_i32_1 = arith.constant 0 : i32
    return %c0_i32, %c0_i32_0 : i32, i32
  }
  func.func @transform_3(%arg0: i32) -> (i32, i32) {
    %c0_i32 = arith.constant 0 : i32
    %c0_i32_0 = arith.constant 0 : i32
    %c0_i32_1 = arith.constant 0 : i32
    return %c0_i32, %c0_i32_0 : i32, i32
  }
  func.func @transform_4(%arg0: i32) -> (i32, i32) {
    %c0_i32 = arith.constant 0 : i32
    %c0_i32_0 = arith.constant 0 : i32
    return %arg0, %c0_i32 : i32, i32
  }
}

module attributes {stable_mosaic.version = 11 : i64} {
  func.func @_mlp_head_kernel(%arg0: i32, %arg1: memref<64x128xf32, #tpu.memory_space<vmem>>, %arg2: memref<128x1024xf32, #tpu.memory_space<vmem>>, %arg3: memref<1x1024xf32, #tpu.memory_space<vmem>>, %arg4: memref<1024x16xf32, #tpu.memory_space<vmem>>, %arg5: memref<1x16xf32, #tpu.memory_space<vmem>>, %arg6: memref<64x16xf32, #tpu.memory_space<vmem>>) attributes {dimension_semantics = [#tpu.dimension_semantics<parallel>], iteration_bounds = array<i64: 1>, scalar_prefetch = 0 : i64, scratch_operands = 0 : i64, tpu.core_type = #tpu.core_type<tc>, window_params = [{transform_indices = @transform_0, window_bounds = array<i64: 64, 128>}, {pipeline_mode = #tpu.pipeline_mode<synchronous>, transform_indices = @transform_1, window_bounds = array<i64: 128, 1024>}, {pipeline_mode = #tpu.pipeline_mode<synchronous>, transform_indices = @transform_2, window_bounds = array<i64: 1, 1024>}, {pipeline_mode = #tpu.pipeline_mode<synchronous>, transform_indices = @transform_3, window_bounds = array<i64: 1024, 16>}, {pipeline_mode = #tpu.pipeline_mode<synchronous>, transform_indices = @transform_4, window_bounds = array<i64: 1, 16>}, {transform_indices = @transform_5, window_bounds = array<i64: 64, 16>}]} {
    %c0 = arith.constant 0 : index
    %c0_0 = arith.constant 0 : index
    %0 = vector.load %arg1[%c0, %c0_0] : memref<64x128xf32, #tpu.memory_space<vmem>>, vector<64x128xf32>
    %c0_1 = arith.constant 0 : index
    %c0_2 = arith.constant 0 : index
    %1 = vector.load %arg2[%c0_1, %c0_2] : memref<128x1024xf32, #tpu.memory_space<vmem>>, vector<128x1024xf32>
    %cst = arith.constant dense<0.000000e+00> : vector<64x1024xf32>
    %2 = tpu.matmul %0, %1, %cst {dimension_numbers = #tpu.dot_dimension_numbers<[1], [0], [0], [1], [0, 0, 1, 1], [], []>} : vector<64x128xf32>, vector<128x1024xf32>, vector<64x1024xf32> -> vector<64x1024xf32>
    %c0_3 = arith.constant 0 : index
    %c0_4 = arith.constant 0 : index
    %3 = vector.load %arg3[%c0_3, %c0_4] : memref<1x1024xf32, #tpu.memory_space<vmem>>, vector<1x1024xf32>
    %4 = vector.broadcast %3 : vector<1x1024xf32> to vector<64x1024xf32>
    %5 = arith.addf %2, %4 : vector<64x1024xf32>
    %cst_5 = arith.constant 5.000000e-01 : f32
    %6 = vector.broadcast %cst_5 : f32 to vector<64x1024xf32>
    %7 = arith.mulf %6, %5 : vector<64x1024xf32>
    %cst_6 = arith.constant 0.707106769 : f32
    %8 = vector.broadcast %cst_6 : f32 to vector<64x1024xf32>
    %9 = arith.mulf %5, %8 : vector<64x1024xf32>
    %cst_7 = arith.constant 0.000000e+00 : f32
    %10 = vector.broadcast %cst_7 : f32 to vector<64x1024xf32>
    %11 = arith.cmpf oge, %9, %10 : vector<64x1024xf32>
    %cst_8 = arith.constant 1.000000e+00 : f32
    %cst_9 = arith.constant -1.000000e+00 : f32
    %12 = vector.broadcast %cst_8 : f32 to vector<64x1024xf32>
    %13 = vector.broadcast %cst_9 : f32 to vector<64x1024xf32>
    %14 = arith.select %11, %12, %13 : vector<64x1024xi1>, vector<64x1024xf32>
    %15 = math.absf %9 : vector<64x1024xf32>
    %cst_10 = arith.constant 0.327591091 : f32
    %16 = vector.broadcast %cst_10 : f32 to vector<64x1024xf32>
    %17 = arith.mulf %16, %15 : vector<64x1024xf32>
    %cst_11 = arith.constant 1.000000e+00 : f32
    %18 = vector.broadcast %cst_11 : f32 to vector<64x1024xf32>
    %19 = arith.addf %18, %17 : vector<64x1024xf32>
    %cst_12 = arith.constant 1.000000e+00 : f32
    %20 = vector.broadcast %cst_12 : f32 to vector<64x1024xf32>
    %21 = arith.divf %20, %19 : vector<64x1024xf32>
    %cst_13 = arith.constant 1.06140542 : f32
    %22 = vector.broadcast %cst_13 : f32 to vector<64x1024xf32>
    %23 = arith.mulf %22, %21 : vector<64x1024xf32>
    %cst_14 = arith.constant -1.45315206 : f32
    %24 = vector.broadcast %cst_14 : f32 to vector<64x1024xf32>
    %25 = arith.addf %23, %24 : vector<64x1024xf32>
    %26 = arith.mulf %25, %21 : vector<64x1024xf32>
    %cst_15 = arith.constant 1.42141378 : f32
    %27 = vector.broadcast %cst_15 : f32 to vector<64x1024xf32>
    %28 = arith.addf %26, %27 : vector<64x1024xf32>
    %29 = arith.mulf %28, %21 : vector<64x1024xf32>
    %cst_16 = arith.constant -0.284496725 : f32
    %30 = vector.broadcast %cst_16 : f32 to vector<64x1024xf32>
    %31 = arith.addf %29, %30 : vector<64x1024xf32>
    %32 = arith.mulf %31, %21 : vector<64x1024xf32>
    %cst_17 = arith.constant 0.254829586 : f32
    %33 = vector.broadcast %cst_17 : f32 to vector<64x1024xf32>
    %34 = arith.addf %32, %33 : vector<64x1024xf32>
    %35 = arith.mulf %34, %21 : vector<64x1024xf32>
    %cst_18 = arith.constant 0.000000e+00 : f32
    %36 = vector.broadcast %cst_18 : f32 to vector<64x1024xf32>
    %37 = arith.subf %36, %15 : vector<64x1024xf32>
    %38 = arith.mulf %37, %15 : vector<64x1024xf32>
    %39 = math.exp %38 : vector<64x1024xf32>
    %40 = arith.mulf %35, %39 : vector<64x1024xf32>
    %cst_19 = arith.constant 1.000000e+00 : f32
    %41 = vector.broadcast %cst_19 : f32 to vector<64x1024xf32>
    %42 = arith.subf %41, %40 : vector<64x1024xf32>
    %43 = arith.mulf %14, %42 : vector<64x1024xf32>
    %cst_20 = arith.constant 1.000000e+00 : f32
    %44 = vector.broadcast %cst_20 : f32 to vector<64x1024xf32>
    %45 = arith.addf %44, %43 : vector<64x1024xf32>
    %46 = arith.mulf %7, %45 : vector<64x1024xf32>
    %c0_21 = arith.constant 0 : index
    %c0_22 = arith.constant 0 : index
    %47 = vector.load %arg4[%c0_21, %c0_22] : memref<1024x16xf32, #tpu.memory_space<vmem>>, vector<1024x16xf32>
    %cst_23 = arith.constant dense<0.000000e+00> : vector<64x16xf32>
    %48 = tpu.matmul %46, %47, %cst_23 {dimension_numbers = #tpu.dot_dimension_numbers<[1], [0], [0], [1], [0, 0, 1, 1], [], []>} : vector<64x1024xf32>, vector<1024x16xf32>, vector<64x16xf32> -> vector<64x16xf32>
    %c0_24 = arith.constant 0 : index
    %c0_25 = arith.constant 0 : index
    %49 = vector.load %arg5[%c0_24, %c0_25] : memref<1x16xf32, #tpu.memory_space<vmem>>, vector<1x16xf32>
    %50 = vector.broadcast %49 : vector<1x16xf32> to vector<64x16xf32>
    %51 = arith.addf %48, %50 : vector<64x16xf32>
    %c0_26 = arith.constant 0 : index
    %c0_27 = arith.constant 0 : index
    %52 = vector.load %arg6[%c0_26, %c0_27] : memref<64x16xf32, #tpu.memory_space<vmem>>, vector<64x16xf32>
    tpu.vector_store %arg6[%c0_26, %c0_27], %51 {strides = array<i32>} : memref<64x16xf32, #tpu.memory_space<vmem>>, vector<64x16xf32>,
    return
  }
  func.func @transform_0(%arg0: i32) -> (i32, i32) {
    %c0_i32 = arith.constant 0 : i32
    %c0_i32_0 = arith.constant 0 : i32
    return %arg0, %c0_i32 : i32, i32
  }
  func.func @transform_1(%arg0: i32) -> (i32, i32) {
    %c0_i32 = arith.constant 0 : i32
    %c0_i32_0 = arith.constant 0 : i32
    %c0_i32_1 = arith.constant 0 : i32
    return %c0_i32, %c0_i32_0 : i32, i32
  }
  func.func @transform_2(%arg0: i32) -> (i32, i32) {
    %c0_i32 = arith.constant 0 : i32
    %c0_i32_0 = arith.constant 0 : i32
    %c0_i32_1 = arith.constant 0 : i32
    return %c0_i32, %c0_i32_0 : i32, i32
  }
  func.func @transform_3(%arg0: i32) -> (i32, i32) {
    %c0_i32 = arith.constant 0 : i32
    %c0_i32_0 = arith.constant 0 : i32
    %c0_i32_1 = arith.constant 0 : i32
    return %c0_i32, %c0_i32_0 : i32, i32
  }
  func.func @transform_4(%arg0: i32) -> (i32, i32) {
    %c0_i32 = arith.constant 0 : i32
    %c0_i32_0 = arith.constant 0 : i32
    %c0_i32_1 = arith.constant 0 : i32
    return %c0_i32, %c0_i32_0 : i32, i32
  }
  func.func @transform_5(%arg0: i32) -> (i32, i32) {
    %c0_i32 = arith.constant 0 : i32
    %c0_i32_0 = arith.constant 0 : i32
    return %arg0, %c0_i32 : i32, i32
  }
}

</mosaic_0001>

<llo_original>
// kernel: fno_forward.6
$region0: #{fno_forward.6}
  #allocation0 [shape = 'u32[]', space=smem, size = 0x4, offset = 0x4, fixed_abs, tag = 'smem constant byte address 0x4 - core index']
  #allocation1 [shape = 'u32[144,128]{1,0:T(1,128)}', space=vmem, size = 0x12000, scoped, tag = 'internal scratch']
  %s0 = inlined_call_operand.vmem [shape: f32[64,40], index: 0, kind: input, shape index: {}]
  %s1 = inlined_call_operand.vmem [shape: f32[40,128], index: 1, kind: input, shape index: {}]
  %s2 = inlined_call_operand.vmem [shape: f32[1,128], index: 2, kind: input, shape index: {}]
  %s3 = inlined_call_operand.vmem [shape: f32[64,128], index: 3, kind: output, shape index: {}]
  %s4 = sld [smem:[#allocation0]]
  $region22: #{fno_forward.6} parent=0
    _
  %s6 = ssub.s32 1, %s4
  %s7 = scalar_select 0, %s6, %s4
  // Predicated region
  $region2: #{fno_forward.6} parent=0 // pred_check
    _
  $region3: #{fno_forward.6} parent=0 // pred_check_branch
    %9 = sbr.rel (0) target = $region5
  $region4: #{fno_forward.6} parent=0 // pred_region
    _
  $region5: #{fno_forward.6} parent=0 // pred_fallthru
    _
  // Predicated region
  $region6: #{fno_forward.6} parent=0 // pred_check
    _
  $region7: #{fno_forward.6} parent=0 // pred_check_branch
    %11 = sbr.rel (0) target = $region9
  $region8: #{fno_forward.6} parent=0 // pred_region
    _
  $region9: #{fno_forward.6} parent=0 // pred_fallthru
    _
  // Predicated region
  $region10: #{fno_forward.6} parent=0 // pred_check
    _
  $region11: #{fno_forward.6} parent=0 // pred_check_branch
    %13 = sbr.rel (0) target = $region13
  $region12: #{fno_forward.6} parent=0 // pred_region
    _
  $region13: #{fno_forward.6} parent=0 // pred_fallthru
    _
  %v14 = vld [vmem:[%s0] sm:$0xff]
  %v15 = vld [vmem:[%s0 + $0x8] sm:$0xff]
  %v16 = vld [vmem:[%s0 + $0x10] sm:$0xff]
  %v17 = vld [vmem:[%s0 + $0x18] sm:$0xff]
  %v18 = vld [vmem:[%s0 + $0x20] sm:$0xff]
  %v19 = vld [vmem:[%s0 + $0x28] sm:$0xff]
  %v20 = vld [vmem:[%s0 + $0x30] sm:$0xff]
  %v21 = vld [vmem:[%s0 + $0x38] sm:$0xff]
  %v22 = vld [vmem:[%s1] sm:$0xff]
  %v23 = vld [vmem:[%s1 + $0x8] sm:$0xff]
  %v24 = vld [vmem:[%s1 + $0x10] sm:$0xff]
  %v25 = vld [vmem:[%s1 + $0x18] sm:$0xff]
  %v26 = vld [vmem:[%s1 + $0x20] sm:$0xff]
  %v27 = vld [vmem:[%s2] sm:$0x1]
  %v29 = vlaneseq
  %v30 = vshrl.u32 %v29, 7
  %v31 = vsub.s32 0, %v30
  %v32 = vrot.slane %v27, %v31
  %vm34 = vcmask 326656
  %v36 = vsel %vm34, %v14, 0
  %v39 = vsel %vm34, %v15, 0
  %v42 = vsel %vm34, %v16, 0
  %v45 = vsel %vm34, %v17, 0
  %v48 = vsel %vm34, %v18, 0
  %v51 = vsel %vm34, %v19, 0
  %v54 = vsel %vm34, %v20, 0
  %v57 = vsel %vm34, %v21, 0
  %59 = vmatprep.subr.mxu0 0.0
  %60 = vmatpush1.msra.mxu0 0.0
  %61 = vmatprep.subr.mxu0 0.0
  %62 = vmatpush1.msra.mxu0 0.0
  %63 = vmatprep.subr.mxu0 0.0
  %64 = vmatpush1.msra.mxu0 0.0
  %65 = vmatprep.subr.mxu0 0.0
  %66 = vmatpush1.msra.mxu0 0.0
  %67 = vmatprep.subr.mxu0 0.0
  %68 = vmatpush1.msra.mxu0 0.0
  %69 = vmatprep.subr.mxu0 0.0
  %70 = vmatpush1.msra.mxu0 0.0
  %71 = vmatprep.subr.mxu0 0.0
  %72 = vmatpush1.msra.mxu0 0.0
  %73 = vmatprep.subr.mxu0 0.0
  %74 = vmatpush1.msra.mxu0 0.0
  %75 = vmatprep.subr.mxu0 0.0
  %76 = vmatpush1.msra.mxu0 0.0
  %77 = vmatprep.subr.mxu0 0.0
  %78 = vmatpush1.msra.mxu0 0.0
  %79 = vmatprep.subr.mxu0 0.0
  %80 = vmatpush1.msra.mxu0 0.0
  %81 = vmatprep.subr.mxu0 0.0
  %82 = vmatpush1.msra.mxu0 %v26
  %83 = vmatprep.subr.mxu0 0.0
  %84 = vmatpush1.msra.mxu0 %v25
  %85 = vmatprep.subr.mxu0 0.0
  %86 = vmatpush1.msra.mxu0 %v24
  %87 = vmatprep.subr.mxu0 0.0
  %88 = vmatpush1.msra.mxu0 %v23
  %89 = vmatprep.subr.mxu0 0.0
  %90 = vmatpush1.msra.mxu0 %v22
  %91 = vmatprep.subr.mxu0 0.0
  %92 = vmatpush2.msra.mxu0 0.0
  %93 = vmatprep.subr.mxu0 0.0
  %94 = vmatpush2.msra.mxu0 0.0
  %95 = vmatprep.subr.mxu0 0.0
  %96 = vmatpush2.msra.mxu0 0.0
  %97 = vmatprep.subr.mxu0 0.0
  %98 = vmatpush2.msra.mxu0 0.0
  %99 = vmatprep.subr.mxu0 0.0
  %100 = vmatpush2.msra.mxu0 0.0
  %101 = vmatprep.subr.mxu0 0.0
  %102 = vmatpush2.msra.mxu0 0.0
  %103 = vmatprep.subr.mxu0 0.0
  %104 = vmatpush2.msra.mxu0 0.0
  %105 = vmatprep.subr.mxu0 0.0
  %106 = vmatpush2.msra.mxu0 0.0
  %107 = vmatprep.subr.mxu0 0.0
  %108 = vmatpush2.msra.mxu0 0.0
  %109 = vmatprep.subr.mxu0 0.0
  %110 = vmatpush2.msra.mxu0 0.0
  %111 = vmatprep.subr.mxu0 0.0
  %112 = vmatpush2.msra.mxu0 0.0
  %113 = vmatprep.subr.mxu0 0.0
  %114 = vmatpush2.msra.mxu0 0.0
  %115 = vmatprep.subr.mxu0 0.0
  %116 = vmatpush2.msra.mxu0 0.0
  %117 = vmatprep.subr.mxu0 0.0
  %118 = vmatpush2.msra.mxu0 0.0
  %119 = vmatprep.subr.mxu0 0.0
  %120 = vmatpush2.msra.mxu0 0.0
  %121 = vmatprep.subr.mxu0 0.0
  %122 = vmatpush2.msra.mxu0 0.0
  %123 = vmatprep.mubr.f32.mxu0 0.0
  %124 = vmatmul.mubr.f32.gmra.mxu0 %v36
  %v125 = vpop.f32.mrf.mxu0
  %v126 = vadd.f32 %v32, %v125
  %v127 = vpop.f32.mrf.mxu0
  %128 = vmatprep.mubr.f32.mxu0 0.0
  %129 = vmatmul.mubr.f32.gmra.mxu0 %v39
  %v130 = vpop.f32.mrf.mxu0
  %v131 = vadd.f32 %v32, %v130
  %v132 = vpop.f32.mrf.mxu0
  %133 = vmatprep.mubr.f32.mxu0 0.0
  %134 = vmatmul.mubr.f32.gmra.mxu0 %v42
  %v135 = vpop.f32.mrf.mxu0
  %v136 = vadd.f32 %v32, %v135
  %v137 = vpop.f32.mrf.mxu0
  %138 = vmatprep.mubr.f32.mxu0 0.0
  %139 = vmatmul.mubr.f32.gmra.mxu0 %v45
  %v140 = vpop.f32.mrf.mxu0
  %v141 = vadd.f32 %v32, %v140
  %v142 = vpop.f32.mrf.mxu0
  %143 = vmatprep.mubr.f32.mxu0 0.0
  %144 = vmatmul.mubr.f32.gmra.mxu0 %v48
  %v145 = vpop.f32.mrf.mxu0
  %v146 = vadd.f32 %v32, %v145
  %v147 = vpop.f32.mrf.mxu0
  %148 = vmatprep.mubr.f32.mxu0 0.0
  %149 = vmatmul.mubr.f32.gmra.mxu0 %v51
  %v150 = vpop.f32.mrf.mxu0
  %v151 = vadd.f32 %v32, %v150
  %v152 = vpop.f32.mrf.mxu0
  %153 = vmatprep.mubr.f32.mxu0 0.0
  %154 = vmatmul.mubr.f32.gmra.mxu0 %v54
  %v155 = vpop.f32.mrf.mxu0
  %v156 = vadd.f32 %v32, %v155
  %v157 = vpop.f32.mrf.mxu0
  %158 = vmatprep.mubr.f32.mxu0 0.0
  %159 = vmatmul.mubr.f32.gmra.mxu0 %v57
  %v160 = vpop.f32.mrf.mxu0
  %v161 = vadd.f32 %v32, %v160
  %v162 = vpop.f32.mrf.mxu0
  %163 = vdwg.mxu0
  %164 = vst [vmem:[%s3] sm:$0xff] %v126
  %165 = vst [vmem:[%s3 + $0x8] sm:$0xff] %v131
  %166 = vst [vmem:[%s3 + $0x10] sm:$0xff] %v136
  %167 = vst [vmem:[%s3 + $0x18] sm:$0xff] %v141
  %168 = vst [vmem:[%s3 + $0x20] sm:$0xff] %v146
  %169 = vst [vmem:[%s3 + $0x28] sm:$0xff] %v151
  %170 = vst [vmem:[%s3 + $0x30] sm:$0xff] %v156
  %171 = vst [vmem:[%s3 + $0x38] sm:$0xff] %v161
  // Predicated region
  $region14: #{fno_forward.6} parent=0 // pred_check
    _
  $region15: #{fno_forward.6} parent=0 // pred_check_branch
    %173 = sbr.rel (0) target = $region17
  $region16: #{fno_forward.6} parent=0 // pred_region
    _
  $region17: #{fno_forward.6} parent=0 // pred_fallthru
    _
  // Predicated region
  $region18: #{fno_forward.6} parent=0 // pred_check
    _
  $region19: #{fno_forward.6} parent=0 // pred_check_branch
    %175 = sbr.rel (0) target = $region21
  $region20: #{fno_forward.6} parent=0 // pred_region
    _
  $region21: #{fno_forward.6} parent=0 // pred_fallthru
    _

// kernel: fno_forward.7
$region0: #{fno_forward.7}
  #allocation0 [shape = 'u32[]', space=smem, size = 0x4, offset = 0x4, fixed_abs, tag = 'smem constant byte address 0x4 - core index']
  #allocation1 [shape = 'u32[144,128]{1,0:T(1,128)}', space=vmem, size = 0x12000, scoped, tag = 'internal scratch']
  %s0 = inlined_call_operand.vmem [shape: f32[8,2,128], index: 0, kind: input, shape index: {}]
  %s1 = inlined_call_operand.vmem [shape: f32[8,128,128], index: 1, kind: input, shape index: {}]
  %s2 = inlined_call_operand.vmem [shape: f32[8,2,128], index: 2, kind: output, shape index: {}]
  %s3 = sld [smem:[#allocation0]]
  $region18: #{fno_forward.7} parent=0
    _
  %s5 = ssub.s32 1, %s3
  %s6 = scalar_select 0, %s5, %s3
  // Predicated region
  $region2: #{fno_forward.7} parent=0 // pred_check
    _
  $region3: #{fno_forward.7} parent=0 // pred_check_branch
    %8 = sbr.rel (0) target = $region5
  $region4: #{fno_forward.7} parent=0 // pred_region
    _
  $region5: #{fno_forward.7} parent=0 // pred_fallthru
    _
  // Predicated region
  $region6: #{fno_forward.7} parent=0 // pred_check
    _
  $region7: #{fno_forward.7} parent=0 // pred_check_branch
    %10 = sbr.rel (0) target = $region9
  $region8: #{fno_forward.7} parent=0 // pred_region
    _
  $region9: #{fno_forward.7} parent=0 // pred_fallthru
    _
  %v11 = vld [vmem:[%s0] sm:$0x3]
  %v12 = vld [vmem:[%s0 + $0x2] sm:$0x3]
  %v13 = vld [vmem:[%s0 + $0x4] sm:$0x3]
  %v14 = vld [vmem:[%s0 + $0x6] sm:$0x3]
  %v15 = vld [vmem:[%s0 + $0x8] sm:$0x3]
  %v16 = vld [vmem:[%s0 + $0xa] sm:$0x3]
  %v17 = vld [vmem:[%s0 + $0xc] sm:$0x3]
  %v18 = vld [vmem:[%s0 + $0xe] sm:$0x3]
  %v19 = vld [vmem:[%s1] sm:$0xff]
  %v20 = vld [vmem:[%s1 + $0x8] sm:$0xff]
  %v21 = vld [vmem:[%s1 + $0x10] sm:$0xff]
  %v22 = vld [vmem:[%s1 + $0x18] sm:$0xff]
  %v23 = vld [vmem:[%s1 + $0x20] sm:$0xff]
  %v24 = vld [vmem:[%s1 + $0x28] sm:$0xff]
  %v25 = vld [vmem:[%s1 + $0x30] sm:$0xff]
  %v26 = vld [vmem:[%s1 + $0x38] sm:$0xff]
  %v27 = vld [vmem:[%s1 + $0x40] sm:$0xff]
  %v28 = vld [vmem:[%s1 + $0x48] sm:$0xff]
  %v29 = vld [vmem:[%s1 + $0x50] sm:$0xff]
  %v30 = vld [vmem:[%s1 + $0x58] sm:$0xff]
  %v31 = vld [vmem:[%s1 + $0x60] sm:$0xff]
  %v32 = vld [vmem:[%s1 + $0x68] sm:$0xff]
  %v33 = vld [vmem:[%s1 + $0x70] sm:$0xff]
  %v34 = vld [vmem:[%s1 + $0x78] sm:$0xff]
  %v35 = vld [vmem:[%s1 + $0x80] sm:$0xff]
  %v36 = vld [vmem:[%s1 + $0x88] sm:$0xff]
  %v37 = vld [vmem:[%s1 + $0x90] sm:$0xff]
  %v38 = vld [vmem:[%s1 + $0x98] sm:$0xff]
  %v39 = vld [vmem:[%s1 + $0xa0] sm:$0xff]
  %v40 = vld [vmem:[%s1 + $0xa8] sm:$0xff]
  %v41 = vld [vmem:[%s1 + $0xb0] sm:$0xff]
  %v42 = vld [vmem:[%s1 + $0xb8] sm:$0xff]
  %v43 = vld [vmem:[%s1 + $0xc0] sm:$0xff]
  %v44 = vld [vmem:[%s1 + $0xc8] sm:$0xff]
  %v45 = vld [vmem:[%s1 + $0xd0] sm:$0xff]
  %v46 = vld [vmem:[%s1 + $0xd8] sm:$0xff]
  %v47 = vld [vmem:[%s1 + $0xe0] sm:$0xff]
  %v48 = vld [vmem:[%s1 + $0xe8] sm:$0xff]
  %v49 = vld [vmem:[%s1 + $0xf0] sm:$0xff]
  %v50 = vld [vmem:[%s1 + $0xf8] sm:$0xff]
  %v51 = vld [vmem:[%s1 + $0x100] sm:$0xff]
  %v52 = vld [vmem:[%s1 + $0x108] sm:$0xff]
  %v53 = vld [vmem:[%s1 + $0x110] sm:$0xff]
  %v54 = vld [vmem:[%s1 + $0x118] sm:$0xff]
  %v55 = vld [vmem:[%s1 + $0x120] sm:$0xff]
  %v56 = vld [vmem:[%s1 + $0x128] sm:$0xff]
  %v57 = vld [vmem:[%s1 + $0x130] sm:$0xff]
  %v58 = vld [vmem:[%s1 + $0x138] sm:$0xff]
  %v59 = vld [vmem:[%s1 + $0x140] sm:$0xff]
  %v60 = vld [vmem:[%s1 + $0x148] sm:$0xff]
  %v61 = vld [vmem:[%s1 + $0x150] sm:$0xff]
  %v62 = vld [vmem:[%s1 + $0x158] sm:$0xff]
  %v63 = vld [vmem:[%s1 + $0x160] sm:$0xff]
  %v64 = vld [vmem:[%s1 + $0x168] sm:$0xff]
  %v65 = vld [vmem:[%s1 + $0x170] sm:$0xff]
  %v66 = vld [vmem:[%s1 + $0x178] sm:$0xff]
  %v67 = vld [vmem:[%s1 + $0x180] sm:$0xff]
  %v68 = vld [vmem:[%s1 + $0x188] sm:$0xff]
  %v69 = vld [vmem:[%s1 + $0x190] sm:$0xff]
  %v70 = vld [vmem:[%s1 + $0x198] sm:$0xff]
  %v71 = vld [vmem:[%s1 + $0x1a0] sm:$0xff]
  %v72 = vld [vmem:[%s1 + $0x1a8] sm:$0xff]
  %v73 = vld [vmem:[%s1 + $0x1b0] sm:$0xff]
  %v74 = vld [vmem:[%s1 + $0x1b8] sm:$0xff]
  %v75 = vld [vmem:[%s1 + $0x1c0] sm:$0xff]
  %v76 = vld [vmem:[%s1 + $0x1c8] sm:$0xff]
  %v77 = vld [vmem:[%s1 + $0x1d0] sm:$0xff]
  %v78 = vld [vmem:[%s1 + $0x1d8] sm:$0xff]
  %v79 = vld [vmem:[%s1 + $0x1e0] sm:$0xff]
  %v80 = vld [vmem:[%s1 + $0x1e8] sm:$0xff]
  %v81 = vld [vmem:[%s1 + $0x1f0] sm:$0xff]
  %v82 = vld [vmem:[%s1 + $0x1f8] sm:$0xff]
  %v83 = vld [vmem:[%s1 + $0x200] sm:$0xff]
  %v84 = vld [vmem:[%s1 + $0x208] sm:$0xff]
  %v85 = vld [vmem:[%s1 + $0x210] sm:$0xff]
  %v86 = vld [vmem:[%s1 + $0x218] sm:$0xff]
  %v87 = vld [vmem:[%s1 + $0x220] sm:$0xff]
  %v88 = vld [vmem:[%s1 + $0x228] sm:$0xff]
  %v89 = vld [vmem:[%s1 + $0x230] sm:$0xff]
  %v90 = vld [vmem:[%s1 + $0x238] sm:$0xff]
  %v91 = vld [vmem:[%s1 + $0x240] sm:$0xff]
  %v92 = vld [vmem:[%s1 + $0x248] sm:$0xff]
  %v93 = vld [vmem:[%s1 + $0x250] sm:$0xff]
  %v94 = vld [vmem:[%s1 + $0x258] sm:$0xff]
  %v95 = vld [vmem:[%s1 + $0x260] sm:$0xff]
  %v96 = vld [vmem:[%s1 + $0x268] sm:$0xff]
  %v97 = vld [vmem:[%s1 + $0x270] sm:$0xff]
  %v98 = vld [vmem:[%s1 + $0x278] sm:$0xff]
  %v99 = vld [vmem:[%s1 + $0x280] sm:$0xff]
  %v100 = vld [vmem:[%s1 + $0x288] sm:$0xff]
  %v101 = vld [vmem:[%s1 + $0x290] sm:$0xff]
  %v102 = vld [vmem:[%s1 + $0x298] sm:$0xff]
  %v103 = vld [vmem:[%s1 + $0x2a0] sm:$0xff]
  %v104 = vld [vmem:[%s1 + $0x2a8] sm:$0xff]
  %v105 = vld [vmem:[%s1 + $0x2b0] sm:$0xff]
  %v106 = vld [vmem:[%s1 + $0x2b8] sm:$0xff]
  %v107 = vld [vmem:[%s1 + $0x2c0] sm:$0xff]
  %v108 = vld [vmem:[%s1 + $0x2c8] sm:$0xff]
  %v109 = vld [vmem:[%s1 + $0x2d0] sm:$0xff]
  %v110 = vld [vmem:[%s1 + $0x2d8] sm:$0xff]
  %v111 = vld [vmem:[%s1 + $0x2e0] sm:$0xff]
  %v112 = vld [vmem:[%s1 + $0x2e8] sm:$0xff]
  %v113 = vld [vmem:[%s1 + $0x2f0] sm:$0xff]
  %v114 = vld [vmem:[%s1 + $0x2f8] sm:$0xff]
  %v115 = vld [vmem:[%s1 + $0x300] sm:$0xff]
  %v116 = vld [vmem:[%s1 + $0x308] sm:$0xff]
  %v117 = vld [vmem:[%s1 + $0x310] sm:$0xff]
  %v118 = vld [vmem:[%s1 + $0x318] sm:$0xff]
  %v119 = vld [vmem:[%s1 + $0x320] sm:$0xff]
  %v120 = vld [vmem:[%s1 + $0x328] sm:$0xff]
  %v121 = vld [vmem:[%s1 + $0x330] sm:$0xff]
  %v122 = vld [vmem:[%s1 + $0x338] sm:$0xff]
  %v123 = vld [vmem:[%s1 + $0x340] sm:$0xff]
  %v124 = vld [vmem:[%s1 + $0x348] sm:$0xff]
  %v125 = vld [vmem:[%s1 + $0x350] sm:$0xff]
  %v126 = vld [vmem:[%s1 + $0x358] sm:$0xff]
  %v127 = vld [vmem:[%s1 + $0x360] sm:$0xff]
  %v128 = vld [vmem:[%s1 + $0x368] sm:$0xff]
  %v129 = vld [vmem:[%s1 + $0x370] sm:$0xff]
  %v130 = vld [vmem:[%s1 + $0x378] sm:$0xff]
  %v131 = vld [vmem:[%s1 + $0x380] sm:$0xff]
  %v132 = vld [vmem:[%s1 + $0x388] sm:$0xff]
  %v133 = vld [vmem:[%s1 + $0x390] sm:$0xff]
  %v134 = vld [vmem:[%s1 + $0x398] sm:$0xff]
  %v135 = vld [vmem:[%s1 + $0x3a0] sm:$0xff]
  %v136 = vld [vmem:[%s1 + $0x3a8] sm:$0xff]
  %v137 = vld [vmem:[%s1 + $0x3b0] sm:$0xff]
  %v138 = vld [vmem:[%s1 + $0x3b8] sm:$0xff]
  %v139 = vld [vmem:[%s1 + $0x3c0] sm:$0xff]
  %v140 = vld [vmem:[%s1 + $0x3c8] sm:$0xff]
  %v141 = vld [vmem:[%s1 + $0x3d0] sm:$0xff]
  %v142 = vld [vmem:[%s1 + $0x3d8] sm:$0xff]
  %v143 = vld [vmem:[%s1 + $0x3e0] sm:$0xff]
  %v144 = vld [vmem:[%s1 + $0x3e8] sm:$0xff]
  %v145 = vld [vmem:[%s1 + $0x3f0] sm:$0xff]
  %v146 = vld [vmem:[%s1 + $0x3f8] sm:$0xff]
  %147 = vmatprep.subr.mxu0 0.0
  %148 = vmatpush1.msra.mxu0 %v34
  %149 = vmatprep.subr.mxu0 0.0
  %150 = vmatpush1.msra.mxu0 %v33
  %151 = vmatprep.subr.mxu0 0.0
  %152 = vmatpush1.msra.mxu0 %v32
  %153 = vmatprep.subr.mxu0 0.0
  %154 = vmatpush1.msra.mxu0 %v31
  %155 = vmatprep.subr.mxu0 0.0
  %156 = vmatpush1.msra.mxu0 %v30
  %157 = vmatprep.subr.mxu0 0.0
  %158 = vmatpush1.msra.mxu0 %v29
  %159 = vmatprep.subr.mxu0 0.0
  %160 = vmatpush1.msra.mxu0 %v28
  %161 = vmatprep.subr.mxu0 0.0
  %162 = vmatpush1.msra.mxu0 %v27
  %163 = vmatprep.subr.mxu0 0.0
  %164 = vmatpush1.msra.mxu0 %v26
  %165 = vmatprep.subr.mxu0 0.0
  %166 = vmatpush1.msra.mxu0 %v25
  %167 = vmatprep.subr.mxu0 0.0
  %168 = vmatpush1.msra.mxu0 %v24
  %169 = vmatprep.subr.mxu0 0.0
  %170 = vmatpush1.msra.mxu0 %v23
  %171 = vmatprep.subr.mxu0 0.0
  %172 = vmatpush1.msra.mxu0 %v22
  %173 = vmatprep.subr.mxu0 0.0
  %174 = vmatpush1.msra.mxu0 %v21
  %175 = vmatprep.subr.mxu0 0.0
  %176 = vmatpush1.msra.mxu0 %v20
  %177 = vmatprep.subr.mxu0 0.0
  %178 = vmatpush1.msra.mxu0 %v19
  %179 = vmatprep.subr.mxu0 0.0
  %180 = vmatpush2.msra.mxu0 0.0
  %181 = vmatprep.subr.mxu0 0.0
  %182 = vmatpush2.msra.mxu0 0.0
  %183 = vmatprep.subr.mxu0 0.0
  %184 = vmatpush2.msra.mxu0 0.0
  %185 = vmatprep.subr.mxu0 0.0
  %186 = vmatpush2.msra.mxu0 0.0
  %187 = vmatprep.subr.mxu0 0.0
  %188 = vmatpush2.msra.mxu0 0.0
  %189 = vmatprep.subr.mxu0 0.0
  %190 = vmatpush2.msra.mxu0 0.0
  %191 = vmatprep.subr.mxu0 0.0
  %192 = vmatpush2.msra.mxu0 0.0
  %193 = vmatprep.subr.mxu0 0.0
  %194 = vmatpush2.msra.mxu0 0.0
  %195 = vmatprep.subr.mxu0 0.0
  %196 = vmatpush2.msra.mxu0 0.0
  %197 = vmatprep.subr.mxu0 0.0
  %198 = vmatpush2.msra.mxu0 0.0
  %199 = vmatprep.subr.mxu0 0.0
  %200 = vmatpush2.msra.mxu0 0.0
  %201 = vmatprep.subr.mxu0 0.0
  %202 = vmatpush2.msra.mxu0 0.0
  %203 = vmatprep.subr.mxu0 0.0
  %204 = vmatpush2.msra.mxu0 0.0
  %205 = vmatprep.subr.mxu0 0.0
  %206 = vmatpush2.msra.mxu0 0.0
  %207 = vmatprep.subr.mxu0 0.0
  %208 = vmatpush2.msra.mxu0 0.0
  %209 = vmatprep.subr.mxu0 0.0
  %210 = vmatpush2.msra.mxu0 0.0
  %211 = vmatprep.mubr.f32.mxu0 0.0
  %212 = vmatmul.mubr.f32.gmra.mxu0 %v11
  %v213 = vpop.f32.mrf.mxu0
  %v214 = vadd.f32 0.0, %v213
  %v215 = vpop.f32.mrf.mxu0
  %216 = vdwg.mxu0
  %217 = vmatprep.subr.mxu0 0.0
  %218 = vmatpush1.msra.mxu0 %v50
  %219 = vmatprep.subr.mxu0 0.0
  %220 = vmatpush1.msra.mxu0 %v49
  %221 = vmatprep.subr.mxu0 0.0
  %222 = vmatpush1.msra.mxu0 %v48
  %223 = vmatprep.subr.mxu0 0.0
  %224 = vmatpush1.msra.mxu0 %v47
  %225 = vmatprep.subr.mxu0 0.0
  %226 = vmatpush1.msra.mxu0 %v46
  %227 = vmatprep.subr.mxu0 0.0
  %228 = vmatpush1.msra.mxu0 %v45
  %229 = vmatprep.subr.mxu0 0.0
  %230 = vmatpush1.msra.mxu0 %v44
  %231 = vmatprep.subr.mxu0 0.0
  %232 = vmatpush1.msra.mxu0 %v43
  %233 = vmatprep.subr.mxu0 0.0
  %234 = vmatpush1.msra.mxu0 %v42
  %235 = vmatprep.subr.mxu0 0.0
  %236 = vmatpush1.msra.mxu0 %v41
  %237 = vmatprep.subr.mxu0 0.0
  %238 = vmatpush1.msra.mxu0 %v40
  %239 = vmatprep.subr.mxu0 0.0
  %240 = vmatpush1.msra.mxu0 %v39
  %241 = vmatprep.subr.mxu0 0.0
  %242 = vmatpush1.msra.mxu0 %v38
  %243 = vmatprep.subr.mxu0 0.0
  %244 = vmatpush1.msra.mxu0 %v37
  %245 = vmatprep.subr.mxu0 0.0
  %246 = vmatpush1.msra.mxu0 %v36
  %247 = vmatprep.subr.mxu0 0.0
  %248 = vmatpush1.msra.mxu0 %v35
  %249 = vmatprep.subr.mxu0 0.0
  %250 = vmatpush2.msra.mxu0 0.0
  %251 = vmatprep.subr.mxu0 0.0
  %252 = vmatpush2.msra.mxu0 0.0
  %253 = vmatprep.subr.mxu0 0.0
  %254 = vmatpush2.msra.mxu0 0.0
  %255 = vmatprep.subr.mxu0 0.0
  %256 = vmatpush2.msra.mxu0 0.0
  %257 = vmatprep.subr.mxu0 0.0
  %258 = vmatpush2.msra.mxu0 0.0
  %259 = vmatprep.subr.mxu0 0.0
  %260 = vmatpush2.msra.mxu0 0.0
  %261 = vmatprep.subr.mxu0 0.0
  %262 = vmatpush2.msra.mxu0 0.0
  %263 = vmatprep.subr.mxu0 0.0
  %264 = vmatpush2.msra.mxu0 0.0
  %265 = vmatprep.subr.mxu0 0.0
  %266 = vmatpush2.msra.mxu0 0.0
  %267 = vmatprep.subr.mxu0 0.0
  %268 = vmatpush2.msra.mxu0 0.0
  %269 = vmatprep.subr.mxu0 0.0
  %270 = vmatpush2.msra.mxu0 0.0
  %271 = vmatprep.subr.mxu0 0.0
  %272 = vmatpush2.msra.mxu0 0.0
  %273 = vmatprep.subr.mxu0 0.0
  %274 = vmatpush2.msra.mxu0 0.0
  %275 = vmatprep.subr.mxu0 0.0
  %276 = vmatpush2.msra.mxu0 0.0
  %277 = vmatprep.subr.mxu0 0.0
  %278 = vmatpush2.msra.mxu0 0.0
  %279 = vmatprep.subr.mxu0 0.0
  %280 = vmatpush2.msra.mxu0 0.0
  %281 = vmatprep.mubr.f32.mxu0 0.0
  %282 = vmatmul.mubr.f32.gmra.mxu0 %v12
  %v283 = vpop.f32.mrf.mxu0
  %v284 = vadd.f32 0.0, %v283
  %v285 = vpop.f32.mrf.mxu0
  %286 = vdwg.mxu0
  %287 = vmatprep.subr.mxu0 0.0
  %288 = vmatpush1.msra.mxu0 %v66
  %289 = vmatprep.subr.mxu0 0.0
  %290 = vmatpush1.msra.mxu0 %v65
  %291 = vmatprep.subr.mxu0 0.0
  %292 = vmatpush1.msra.mxu0 %v64
  %293 = vmatprep.subr.mxu0 0.0
  %294 = vmatpush1.msra.mxu0 %v63
  %295 = vmatprep.subr.mxu0 0.0
  %296 = vmatpush1.msra.mxu0 %v62
  %297 = vmatprep.subr.mxu0 0.0
  %298 = vmatpush1.msra.mxu0 %v61
  %299 = vmatprep.subr.mxu0 0.0
  %300 = vmatpush1.msra.mxu0 %v60
  %301 = vmatprep.subr.mxu0 0.0
  %302 = vmatpush1.msra.mxu0 %v59
  %303 = vmatprep.subr.mxu0 0.0
  %304 = vmatpush1.msra.mxu0 %v58
  %305 = vmatprep.subr.mxu0 0.0
  %306 = vmatpush1.msra.mxu0 %v57
  %307 = vmatprep.subr.mxu0 0.0
  %308 = vmatpush1.msra.mxu0 %v56
  %309 = vmatprep.subr.mxu0 0.0
  %310 = vmatpush1.msra.mxu0 %v55
  %311 = vmatprep.subr.mxu0 0.0
  %312 = vmatpush1.msra.mxu0 %v54
  %313 = vmatprep.subr.mxu0 0.0
  %314 = vmatpush1.msra.mxu0 %v53
  %315 = vmatprep.subr.mxu0 0.0
  %316 = vmatpush1.msra.mxu0 %v52
  %317 = vmatprep.subr.mxu0 0.0
  %318 = vmatpush1.msra.mxu0 %v51
  %319 = vmatprep.subr.mxu0 0.0
  %320 = vmatpush2.msra.mxu0 0.0
  %321 = vmatprep.subr.mxu0 0.0
  %322 = vmatpush2.msra.mxu0 0.0
  %323 = vmatprep.subr.mxu0 0.0
  %324 = vmatpush2.msra.mxu0 0.0
  %325 = vmatprep.subr.mxu0 0.0
  %326 = vmatpush2.msra.mxu0 0.0
  %327 = vmatprep.subr.mxu0 0.0
  %328 = vmatpush2.msra.mxu0 0.0
  %329 = vmatprep.subr.mxu0 0.0
  %330 = vmatpush2.msra.mxu0 0.0
  %331 = vmatprep.subr.mxu0 0.0
  %332 = vmatpush2.msra.mxu0 0.0
  %333 = vmatprep.subr.mxu0 0.0
  %334 = vmatpush2.msra.mxu0 0.0
  %335 = vmatprep.subr.mxu0 0.0
  %336 = vmatpush2.msra.mxu0 0.0
  %337 = vmatprep.subr.mxu0 0.0
  %338 = vmatpush2.msra.mxu0 0.0
  %339 = vmatprep.subr.mxu0 0.0
  %340 = vmatpush2.msra.mxu0 0.0
  %341 = vmatprep.subr.mxu0 0.0
  %342 = vmatpush2.msra.mxu0 0.0
  %343 = vmatprep.subr.mxu0 0.0
  %344 = vmatpush2.msra.mxu0 0.0
  %345 = vmatprep.subr.mxu0 0.0
  %346 = vmatpush2.msra.mxu0 0.0
  %347 = vmatprep.subr.mxu0 0.0
  %348 = vmatpush2.msra.mxu0 0.0
  %349 = vmatprep.subr.mxu0 0.0
  %350 = vmatpush2.msra.mxu0 0.0
  %351 = vmatprep.mubr.f32.mxu0 0.0
  %352 = vmatmul.mubr.f32.gmra.mxu0 %v13
  %v353 = vpop.f32.mrf.mxu0
  %v354 = vadd.f32 0.0, %v353
  %v355 = vpop.f32.mrf.mxu0
  %356 = vdwg.mxu0
  %357 = vmatprep.subr.mxu0 0.0
  %358 = vmatpush1.msra.mxu0 %v82
  %359 = vmatprep.subr.mxu0 0.0
  %360 = vmatpush1.msra.mxu0 %v81
  %361 = vmatprep.subr.mxu0 0.0
  %362 = vmatpush1.msra.mxu0 %v80
  %363 = vmatprep.subr.mxu0 0.0
  %364 = vmatpush1.msra.mxu0 %v79
  %365 = vmatprep.subr.mxu0 0.0
  %366 = vmatpush1.msra.mxu0 %v78
  %367 = vmatprep.subr.mxu0 0.0
  %368 = vmatpush1.msra.mxu0 %v77
  %369 = vmatprep.subr.mxu0 0.0
  %370 = vmatpush1.msra.mxu0 %v76
  %371 = vmatprep.subr.mxu0 0.0
  %372 = vmatpush1.msra.mxu0 %v75
  %373 = vmatprep.subr.mxu0 0.0
  %374 = vmatpush1.msra.mxu0 %v74
  %375 = vmatprep.subr.mxu0 0.0
  %376 = vmatpush1.msra.mxu0 %v73
  %377 = vmatprep.subr.mxu0 0.0
  %378 = vmatpush1.msra.mxu0 %v72
  %379 = vmatprep.subr.mxu0 0.0
  %380 = vmatpush1.msra.mxu0 %v71
  %381 = vmatprep.subr.mxu0 0.0
  %382 = vmatpush1.msra.mxu0 %v70
  %383 = vmatprep.subr.mxu0 0.0
  %384 = vmatpush1.msra.mxu0 %v69
  %385 = vmatprep.subr.mxu0 0.0
  %386 = vmatpush1.msra.mxu0 %v68
  %387 = vmatprep.subr.mxu0 0.0
  %388 = vmatpush1.msra.mxu0 %v67
  %389 = vmatprep.subr.mxu0 0.0
  %390 = vmatpush2.msra.mxu0 0.0
  %391 = vmatprep.subr.mxu0 0.0
  %392 = vmatpush2.msra.mxu0 0.0
  %393 = vmatprep.subr.mxu0 0.0
  %394 = vmatpush2.msra.mxu0 0.0
  %395 = vmatprep.subr.mxu0 0.0
  %396 = vmatpush2.msra.mxu0 0.0
  %397 = vmatprep.subr.mxu0 0.0
  %398 = vmatpush2.msra.mxu0 0.0
  %399 = vmatprep.subr.mxu0 0.0
  %400 = vmatpush2.msra.mxu0 0.0
  %401 = vmatprep.subr.mxu0 0.0
  %402 = vmatpush2.msra.mxu0 0.0
  %403 = vmatprep.subr.mxu0 0.0
  %404 = vmatpush2.msra.mxu0 0.0
  %405 = vmatprep.subr.mxu0 0.0
  %406 = vmatpush2.msra.mxu0 0.0
  %407 = vmatprep.subr.mxu0 0.0
  %408 = vmatpush2.msra.mxu0 0.0
  %409 = vmatprep.subr.mxu0 0.0
  %410 = vmatpush2.msra.mxu0 0.0
  %411 = vmatprep.subr.mxu0 0.0
  %412 = vmatpush2.msra.mxu0 0.0
  %413 = vmatprep.subr.mxu0 0.0
  %414 = vmatpush2.msra.mxu0 0.0
  %415 = vmatprep.subr.mxu0 0.0
  %416 = vmatpush2.msra.mxu0 0.0
  %417 = vmatprep.subr.mxu0 0.0
  %418 = vmatpush2.msra.mxu0 0.0
  %419 = vmatprep.subr.mxu0 0.0
  %420 = vmatpush2.msra.mxu0 0.0
  %421 = vmatprep.mubr.f32.mxu0 0.0
  %422 = vmatmul.mubr.f32.gmra.mxu0 %v14
  %v423 = vpop.f32.mrf.mxu0
  %v424 = vadd.f32 0.0, %v423
  %v425 = vpop.f32.mrf.mxu0
  %426 = vdwg.mxu0
  %427 = vmatprep.subr.mxu0 0.0
  %428 = vmatpush1.msra.mxu0 %v98
  %429 = vmatprep.subr.mxu0 0.0
  %430 = vmatpush1.msra.mxu0 %v97
  %431 = vmatprep.subr.mxu0 0.0
  %432 = vmatpush1.msra.mxu0 %v96
  %433 = vmatprep.subr.mxu0 0.0
  %434 = vmatpush1.msra.mxu0 %v95
  %435 = vmatprep.subr.mxu0 0.0
  %436 = vmatpush1.msra.mxu0 %v94
  %437 = vmatprep.subr.mxu0 0.0
  %438 = vmatpush1.msra.mxu0 %v93
  %439 = vmatprep.subr.mxu0 0.0
  %440 = vmatpush1.msra.mxu0 %v92
  %441 = vmatprep.subr.mxu0 0.0
  %442 = vmatpush1.msra.mxu0 %v91
  %443 = vmatprep.subr.mxu0 0.0
  %444 = vmatpush1.msra.mxu0 %v90
  %445 = vmatprep.subr.mxu0 0.0
  %446 = vmatpush1.msra.mxu0 %v89
  %447 = vmatprep.subr.mxu0 0.0
  %448 = vmatpush1.msra.mxu0 %v88
  %449 = vmatprep.subr.mxu0 0.0
  %450 = vmatpush1.msra.mxu0 %v87
  %451 = vmatprep.subr.mxu0 0.0
  %452 = vmatpush1.msra.mxu0 %v86
  %453 = vmatprep.subr.mxu0 0.0
  %454 = vmatpush1.msra.mxu0 %v85
  %455 = vmatprep.subr.mxu0 0.0
  %456 = vmatpush1.msra.mxu0 %v84
  %457 = vmatprep.subr.mxu0 0.0
  %458 = vmatpush1.msra.mxu0 %v83
  %459 = vmatprep.subr.mxu0 0.0
  %460 = vmatpush2.msra.mxu0 0.0
  %461 = vmatprep.subr.mxu0 0.0
  %462 = vmatpush2.msra.mxu0 0.0
  %463 = vmatprep.subr.mxu0 0.0
  %464 = vmatpush2.msra.mxu0 0.0
  %465 = vmatprep.subr.mxu0 0.0
  %466 = vmatpush2.msra.mxu0 0.0
  %467 = vmatprep.subr.mxu0 0.0
  %468 = vmatpush2.msra.mxu0 0.0
  %469 = vmatprep.subr.mxu0 0.0
  %470 = vmatpush2.msra.mxu0 0.0
  %471 = vmatprep.subr.mxu0 0.0
  %472 = vmatpush2.msra.mxu0 0.0
  %473 = vmatprep.subr.mxu0 0.0
  %474 = vmatpush2.msra.mxu0 0.0
  %475 = vmatprep.subr.mxu0 0.0
  %476 = vmatpush2.msra.mxu0 0.0
  %477 = vmatprep.subr.mxu0 0.0
  %478 = vmatpush2.msra.mxu0 0.0
  %479 = vmatprep.subr.mxu0 0.0
  %480 = vmatpush2.msra.mxu0 0.0
  %481 = vmatprep.subr.mxu0 0.0
  %482 = vmatpush2.msra.mxu0 0.0
  %483 = vmatprep.subr.mxu0 0.0
  %484 = vmatpush2.msra.mxu0 0.0
  %485 = vmatprep.subr.mxu0 0.0
  %486 = vmatpush2.msra.mxu0 0.0
  %487 = vmatprep.subr.mxu0 0.0
  %488 = vmatpush2.msra.mxu0 0.0
  %489 = vmatprep.subr.mxu0 0.0
  %490 = vmatpush2.msra.mxu0 0.0
  %491 = vmatprep.mubr.f32.mxu0 0.0
  %492 = vmatmul.mubr.f32.gmra.mxu0 %v15
  %v493 = vpop.f32.mrf.mxu0
  %v494 = vadd.f32 0.0, %v493
  %v495 = vpop.f32.mrf.mxu0
  %496 = vdwg.mxu0
  %497 = vmatprep.subr.mxu0 0.0
  %498 = vmatpush1.msra.mxu0 %v114
  %499 = vmatprep.subr.mxu0 0.0
  %500 = vmatpush1.msra.mxu0 %v113
  %501 = vmatprep.subr.mxu0 0.0
  %502 = vmatpush1.msra.mxu0 %v112
  %503 = vmatprep.subr.mxu0 0.0
  %504 = vmatpush1.msra.mxu0 %v111
  %505 = vmatprep.subr.mxu0 0.0
  %506 = vmatpush1.msra.mxu0 %v110
  %507 = vmatprep.subr.mxu0 0.0
  %508 = vmatpush1.msra.mxu0 %v109
  %509 = vmatprep.subr.mxu0 0.0
  %510 = vmatpush1.msra.mxu0 %v108
  %511 = vmatprep.subr.mxu0 0.0
  %512 = vmatpush1.msra.mxu0 %v107
  %513 = vmatprep.subr.mxu0 0.0
  %514 = vmatpush1.msra.mxu0 %v106
  %515 = vmatprep.subr.mxu0 0.0
  %516 = vmatpush1.msra.mxu0 %v105
  %517 = vmatprep.subr.mxu0 0.0
  %518 = vmatpush1.msra.mxu0 %v104
  %519 = vmatprep.subr.mxu0 0.0
  %520 = vmatpush1.msra.mxu0 %v103
  %521 = vmatprep.subr.mxu0 0.0
  %522 = vmatpush1.msra.mxu0 %v102
  %523 = vmatprep.subr.mxu0 0.0
  %524 = vmatpush1.msra.mxu0 %v101
  %525 = vmatprep.subr.mxu0 0.0
  %526 = vmatpush1.msra.mxu0 %v100
  %527 = vmatprep.subr.mxu0 0.0
  %528 = vmatpush1.msra.mxu0 %v99
  %529 = vmatprep.subr.mxu0 0.0
  %530 = vmatpush2.msra.mxu0 0.0
  %531 = vmatprep.subr.mxu0 0.0
  %532 = vmatpush2.msra.mxu0 0.0
  %533 = vmatprep.subr.mxu0 0.0
  %534 = vmatpush2.msra.mxu0 0.0
  %535 = vmatprep.subr.mxu0 0.0
  %536 = vmatpush2.msra.mxu0 0.0
  %537 = vmatprep.subr.mxu0 0.0
  %538 = vmatpush2.msra.mxu0 0.0
  %539 = vmatprep.subr.mxu0 0.0
  %540 = vmatpush2.msra.mxu0 0.0
  %541 = vmatprep.subr.mxu0 0.0
  %542 = vmatpush2.msra.mxu0 0.0
  %543 = vmatprep.subr.mxu0 0.0
  %544 = vmatpush2.msra.mxu0 0.0
  %545 = vmatprep.subr.mxu0 0.0
  %546 = vmatpush2.msra.mxu0 0.0
  %547 = vmatprep.subr.mxu0 0.0
  %548 = vmatpush2.msra.mxu0 0.0
  %549 = vmatprep.subr.mxu0 0.0
  %550 = vmatpush2.msra.mxu0 0.0
  %551 = vmatprep.subr.mxu0 0.0
  %552 = vmatpush2.msra.mxu0 0.0
  %553 = vmatprep.subr.mxu0 0.0
  %554 = vmatpush2.msra.mxu0 0.0
  %555 = vmatprep.subr.mxu0 0.0
  %556 = vmatpush2.msra.mxu0 0.0
  %557 = vmatprep.subr.mxu0 0.0
  %558 = vmatpush2.msra.mxu0 0.0
  %559 = vmatprep.subr.mxu0 0.0
  %560 = vmatpush2.msra.mxu0 0.0
  %561 = vmatprep.mubr.f32.mxu0 0.0
  %562 = vmatmul.mubr.f32.gmra.mxu0 %v16
  %v563 = vpop.f32.mrf.mxu0
  %v564 = vadd.f32 0.0, %v563
  %v565 = vpop.f32.mrf.mxu0
  %566 = vdwg.mxu0
  %567 = vmatprep.subr.mxu0 0.0
  %568 = vmatpush1.msra.mxu0 %v130
  %569 = vmatprep.subr.mxu0 0.0
  %570 = vmatpush1.msra.mxu0 %v129
  %571 = vmatprep.subr.mxu0 0.0
  %572 = vmatpush1.msra.mxu0 %v128
  %573 = vmatprep.subr.mxu0 0.0
  %574 = vmatpush1.msra.mxu0 %v127
  %575 = vmatprep.subr.mxu0 0.0
  %576 = vmatpush1.msra.mxu0 %v126
  %577 = vmatprep.subr.mxu0 0.0
  %578 = vmatpush1.msra.mxu0 %v125
  %579 = vmatprep.subr.mxu0 0.0
  %580 = vmatpush1.msra.mxu0 %v124
  %581 = vmatprep.subr.mxu0 0.0
  %582 = vmatpush1.msra.mxu0 %v123
  %583 = vmatprep.subr.mxu0 0.0
  %584 = vmatpush1.msra.mxu0 %v122
  %585 = vmatprep.subr.mxu0 0.0
  %586 = vmatpush1.msra.mxu0 %v121
  %587 = vmatprep.subr.mxu0 0.0
  %588 = vmatpush1.msra.mxu0 %v120
  %589 = vmatprep.subr.mxu0 0.0
  %590 = vmatpush1.msra.mxu0 %v119
  %591 = vmatprep.subr.mxu0 0.0
  %592 = vmatpush1.msra.mxu0 %v118
  %593 = vmatprep.subr.mxu0 0.0
  %594 = vmatpush1.msra.mxu0 %v117
  %595 = vmatprep.subr.mxu0 0.0
  %596 = vmatpush1.msra.mxu0 %v116
  %597 = vmatprep.subr.mxu0 0.0
  %598 = vmatpush1.msra.mxu0 %v115
  %599 = vmatprep.subr.mxu0 0.0
  %600 = vmatpush2.msra.mxu0 0.0
  %601 = vmatprep.subr.mxu0 0.0
  %602 = vmatpush2.msra.mxu0 0.0
  %603 = vmatprep.subr.mxu0 0.0
  %604 = vmatpush2.msra.mxu0 0.0
  %605 = vmatprep.subr.mxu0 0.0
  %606 = vmatpush2.msra.mxu0 0.0
  %607 = vmatprep.subr.mxu0 0.0
  %608 = vmatpush2.msra.mxu0 0.0
  %609 = vmatprep.subr.mxu0 0.0
  %610 = vmatpush2.msra.mxu0 0.0
  %611 = vmatprep.subr.mxu0 0.0
  %612 = vmatpush2.msra.mxu0 0.0
  %613 = vmatprep.subr.mxu0 0.0
  %614 = vmatpush2.msra.mxu0 0.0
  %615 = vmatprep.subr.mxu0 0.0
  %616 = vmatpush2.msra.mxu0 0.0
  %617 = vmatprep.subr.mxu0 0.0
  %618 = vmatpush2.msra.mxu0 0.0
  %619 = vmatprep.subr.mxu0 0.0
  %620 = vmatpush2.msra.mxu0 0.0
  %621 = vmatprep.subr.mxu0 0.0
  %622 = vmatpush2.msra.mxu0 0.0
  %623 = vmatprep.subr.mxu0 0.0
  %624 = vmatpush2.msra.mxu0 0.0
  %625 = vmatprep.subr.mxu0 0.0
  %626 = vmatpush2.msra.mxu0 0.0
  %627 = vmatprep.subr.mxu0 0.0
  %628 = vmatpush2.msra.mxu0 0.0
  %629 = vmatprep.subr.mxu0 0.0
  %630 = vmatpush2.msra.mxu0 0.0
  %631 = vmatprep.mubr.f32.mxu0 0.0
  %632 = vmatmul.mubr.f32.gmra.mxu0 %v17
  %v633 = vpop.f32.mrf.mxu0
  %v634 = vadd.f32 0.0, %v633
  %v635 = vpop.f32.mrf.mxu0
  %636 = vdwg.mxu0
  %637 = vmatprep.subr.mxu0 0.0
  %638 = vmatpush1.msra.mxu0 %v146
  %639 = vmatprep.subr.mxu0 0.0
  %640 = vmatpush1.msra.mxu0 %v145
  %641 = vmatprep.subr.mxu0 0.0
  %642 = vmatpush1.msra.mxu0 %v144
  %643 = vmatprep.subr.mxu0 0.0
  %644 = vmatpush1.msra.mxu0 %v143
  %645 = vmatprep.subr.mxu0 0.0
  %646 = vmatpush1.msra.mxu0 %v142
  %647 = vmatprep.subr.mxu0 0.0
  %648 = vmatpush1.msra.mxu0 %v141
  %649 = vmatprep.subr.mxu0 0.0
  %650 = vmatpush1.msra.mxu0 %v140
  %651 = vmatprep.subr.mxu0 0.0
  %652 = vmatpush1.msra.mxu0 %v139
  %653 = vmatprep.subr.mxu0 0.0
  %654 = vmatpush1.msra.mxu0 %v138
  %655 = vmatprep.subr.mxu0 0.0
  %656 = vmatpush1.msra.mxu0 %v137
  %657 = vmatprep.subr.mxu0 0.0
  %658 = vmatpush1.msra.mxu0 %v136
  %659 = vmatprep.subr.mxu0 0.0
  %660 = vmatpush1.msra.mxu0 %v135
  %661 = vmatprep.subr.mxu0 0.0
  %662 = vmatpush1.msra.mxu0 %v134
  %663 = vmatprep.subr.mxu0 0.0
  %664 = vmatpush1.msra.mxu0 %v133
  %665 = vmatprep.subr.mxu0 0.0
  %666 = vmatpush1.msra.mxu0 %v132
  %667 = vmatprep.subr.mxu0 0.0
  %668 = vmatpush1.msra.mxu0 %v131
  %669 = vmatprep.subr.mxu0 0.0
  %670 = vmatpush2.msra.mxu0 0.0
  %671 = vmatprep.subr.mxu0 0.0
  %672 = vmatpush2.msra.mxu0 0.0
  %673 = vmatprep.subr.mxu0 0.0
  %674 = vmatpush2.msra.mxu0 0.0
  %675 = vmatprep.subr.mxu0 0.0
  %676 = vmatpush2.msra.mxu0 0.0
  %677 = vmatprep.subr.mxu0 0.0
  %678 = vmatpush2.msra.mxu0 0.0
  %679 = vmatprep.subr.mxu0 0.0
  %680 = vmatpush2.msra.mxu0 0.0
  %681 = vmatprep.subr.mxu0 0.0
  %682 = vmatpush2.msra.mxu0 0.0
  %683 = vmatprep.subr.mxu0 0.0
  %684 = vmatpush2.msra.mxu0 0.0
  %685 = vmatprep.subr.mxu0 0.0
  %686 = vmatpush2.msra.mxu0 0.0
  %687 = vmatprep.subr.mxu0 0.0
  %688 = vmatpush2.msra.mxu0 0.0
  %689 = vmatprep.subr.mxu0 0.0
  %690 = vmatpush2.msra.mxu0 0.0
  %691 = vmatprep.subr.mxu0 0.0
  %692 = vmatpush2.msra.mxu0 0.0
  %693 = vmatprep.subr.mxu0 0.0
  %694 = vmatpush2.msra.mxu0 0.0
  %695 = vmatprep.subr.mxu0 0.0
  %696 = vmatpush2.msra.mxu0 0.0
  %697 = vmatprep.subr.mxu0 0.0
  %698 = vmatpush2.msra.mxu0 0.0
  %699 = vmatprep.subr.mxu0 0.0
  %700 = vmatpush2.msra.mxu0 0.0
  %701 = vmatprep.mubr.f32.mxu0 0.0
  %702 = vmatmul.mubr.f32.gmra.mxu0 %v18
  %v703 = vpop.f32.mrf.mxu0
  %v704 = vadd.f32 0.0, %v703
  %v705 = vpop.f32.mrf.mxu0
  %706 = vdwg.mxu0
  %707 = vst [vmem:[%s2] sm:$0x3] %v214
  %708 = vst [vmem:[%s2 + $0x2] sm:$0x3] %v284
  %709 = vst [vmem:[%s2 + $0x4] sm:$0x3] %v354
  %710 = vst [vmem:[%s2 + $0x6] sm:$0x3] %v424
  %711 = vst [vmem:[%s2 + $0x8] sm:$0x3] %v494
  %712 = vst [vmem:[%s2 + $0xa] sm:$0x3] %v564
  %713 = vst [vmem:[%s2 + $0xc] sm:$0x3] %v634
  %714 = vst [vmem:[%s2 + $0xe] sm:$0x3] %v704
  // Predicated region
  $region10: #{fno_forward.7} parent=0 // pred_check
    _
  $region11: #{fno_forward.7} parent=0 // pred_check_branch
    %716 = sbr.rel (0) target = $region13
  $region12: #{fno_forward.7} parent=0 // pred_region
    _
  $region13: #{fno_forward.7} parent=0 // pred_fallthru
    _
  // Predicated region
  $region14: #{fno_forward.7} parent=0 // pred_check
    _
  $region15: #{fno_forward.7} parent=0 // pred_check_branch
    %718 = sbr.rel (0) target = $region17
  $region16: #{fno_forward.7} parent=0 // pred_region
    _
  $region17: #{fno_forward.7} parent=0 // pred_fallthru
    _

// kernel: reverse.4
$region0: #{reverse.4}
  #allocation0 [shape = 's32[1]{0}', space=sflag, size = 0x4, scoped, tag = 'scoped memory for reverse.4']
  %s0 = inlined_call_operand.vmem [shape: f32[2,16,16,7], index: 0, kind: input, shape index: {}]
  %s1 = inlined_call_operand.vmem [shape: f32[2,16,16,7], index: 1, kind: output, shape index: {}]
  %s2 = scalar_lea.vmem %s0, 96
  %v3 = vld [vmem:[%s2] sm:$0xff]
  %4 = vst [vmem:[%s1] sm:$0xff] %v3
  %s5 = scalar_lea.vmem %s0, 208
  %v6 = vld [vmem:[%s5] sm:$0xff]
  %s7 = scalar_lea.vmem %s1, 112
  %8 = vst [vmem:[%s7] sm:$0xff] %v6
  %s9 = scalar_lea.vmem %s0, 80
  %v10 = vld [vmem:[%s9] sm:$0xff]
  %s11 = scalar_lea.vmem %s1, 16
  %12 = vst [vmem:[%s11] sm:$0xff] %v10
  %s13 = scalar_lea.vmem %s0, 192
  %v14 = vld [vmem:[%s13] sm:$0xff]
  %s15 = scalar_lea.vmem %s1, 128
  %16 = vst [vmem:[%s15] sm:$0xff] %v14
  %s17 = scalar_lea.vmem %s0, 64
  %v18 = vld [vmem:[%s17] sm:$0xff]
  %s19 = scalar_lea.vmem %s1, 32
  %20 = vst [vmem:[%s19] sm:$0xff] %v18
  %s21 = scalar_lea.vmem %s0, 176
  %v22 = vld [vmem:[%s21] sm:$0xff]
  %s23 = scalar_lea.vmem %s1, 144
  %24 = vst [vmem:[%s23] sm:$0xff] %v22
  %s25 = scalar_lea.vmem %s0, 48
  %v26 = vld [vmem:[%s25] sm:$0xff]
  %s27 = scalar_lea.vmem %s1, 48
  %28 = vst [vmem:[%s27] sm:$0xff] %v26
  %s29 = scalar_lea.vmem %s0, 160
  %v30 = vld [vmem:[%s29] sm:$0xff]
  %s31 = scalar_lea.vmem %s1, 160
  %32 = vst [vmem:[%s31] sm:$0xff] %v30
  %s33 = scalar_lea.vmem %s0, 32
  %v34 = vld [vmem:[%s33] sm:$0xff]
  %s35 = scalar_lea.vmem %s1, 64
  %36 = vst [vmem:[%s35] sm:$0xff] %v34
  %s37 = scalar_lea.vmem %s0, 144
  %v38 = vld [vmem:[%s37] sm:$0xff]
  %s39 = scalar_lea.vmem %s1, 176
  %40 = vst [vmem:[%s39] sm:$0xff] %v38
  %s41 = scalar_lea.vmem %s0, 16
  %v42 = vld [vmem:[%s41] sm:$0xff]
  %s43 = scalar_lea.vmem %s1, 80
  %44 = vst [vmem:[%s43] sm:$0xff] %v42
  %s45 = scalar_lea.vmem %s0, 128
  %v46 = vld [vmem:[%s45] sm:$0xff]
  %s47 = scalar_lea.vmem %s1, 192
  %48 = vst [vmem:[%s47] sm:$0xff] %v46
  %v49 = vld [vmem:[%s0] sm:$0xff]
  %s50 = scalar_lea.vmem %s1, 96
  %51 = vst [vmem:[%s50] sm:$0xff] %v49
  %s52 = scalar_lea.vmem %s0, 112
  %v53 = vld [vmem:[%s52] sm:$0xff]
  %s54 = scalar_lea.vmem %s1, 208
  %55 = vst [vmem:[%s54] sm:$0xff] %v53
  %s56 = scalar_lea.vmem %s0, 104
  %v57 = vld [vmem:[%s56] sm:$0xff]
  %s58 = scalar_lea.vmem %s1, 8
  %59 = vst [vmem:[%s58] sm:$0xff] %v57
  %s60 = scalar_lea.vmem %s0, 216
  %v61 = vld [vmem:[%s60] sm:$0xff]
  %s62 = scalar_lea.vmem %s1, 120
  %63 = vst [vmem:[%s62] sm:$0xff] %v61
  %s64 = scalar_lea.vmem %s0, 88
  %v65 = vld [vmem:[%s64] sm:$0xff]
  %s66 = scalar_lea.vmem %s1, 24
  %67 = vst [vmem:[%s66] sm:$0xff] %v65
  %s68 = scalar_lea.vmem %s0, 200
  %v69 = vld [vmem:[%s68] sm:$0xff]
  %s70 = scalar_lea.vmem %s1, 136
  %71 = vst [vmem:[%s70] sm:$0xff] %v69
  %s72 = scalar_lea.vmem %s0, 72
  %v73 = vld [vmem:[%s72] sm:$0xff]
  %s74 = scalar_lea.vmem %s1, 40
  %75 = vst [vmem:[%s74] sm:$0xff] %v73
  %s76 = scalar_lea.vmem %s0, 184
  %v77 = vld [vmem:[%s76] sm:$0xff]
  %s78 = scalar_lea.vmem %s1, 152
  %79 = vst [vmem:[%s78] sm:$0xff] %v77
  %s80 = scalar_lea.vmem %s0, 56
  %v81 = vld [vmem:[%s80] sm:$0xff]
  %s82 = scalar_lea.vmem %s1, 56
  %83 = vst [vmem:[%s82] sm:$0xff] %v81
  %s84 = scalar_lea.vmem %s0, 168
  %v85 = vld [vmem:[%s84] sm:$0xff]
  %s86 = scalar_lea.vmem %s1, 168
  %87 = vst [vmem:[%s86] sm:$0xff] %v85
  %s88 = scalar_lea.vmem %s0, 40
  %v89 = vld [vmem:[%s88] sm:$0xff]
  %s90 = scalar_lea.vmem %s1, 72
  %91 = vst [vmem:[%s90] sm:$0xff] %v89
  %s92 = scalar_lea.vmem %s0, 152
  %v93 = vld [vmem:[%s92] sm:$0xff]
  %s94 = scalar_lea.vmem %s1, 184
  %95 = vst [vmem:[%s94] sm:$0xff] %v93
  %s96 = scalar_lea.vmem %s0, 24
  %v97 = vld [vmem:[%s96] sm:$0xff]
  %s98 = scalar_lea.vmem %s1, 88
  %99 = vst [vmem:[%s98] sm:$0xff] %v97
  %s100 = scalar_lea.vmem %s0, 136
  %v101 = vld [vmem:[%s100] sm:$0xff]
  %s102 = scalar_lea.vmem %s1, 200
  %103 = vst [vmem:[%s102] sm:$0xff] %v101
  %s104 = scalar_lea.vmem %s0, 8
  %v105 = vld [vmem:[%s104] sm:$0xff]
  %s106 = scalar_lea.vmem %s1, 104
  %107 = vst [vmem:[%s106] sm:$0xff] %v105
  %s108 = scalar_lea.vmem %s0, 120
  %v109 = vld [vmem:[%s108] sm:$0xff]
  %s110 = scalar_lea.vmem %s1, 216
  %111 = vst [vmem:[%s110] sm:$0xff] %v109

// kernel: fno_forward.8
$region0: #{fno_forward.8}
  #allocation0 [shape = 'u32[]', space=smem, size = 0x4, offset = 0x4, fixed_abs, tag = 'smem constant byte address 0x4 - core index']
  #allocation1 [shape = 'u32[144,128]{1,0:T(1,128)}', space=vmem, size = 0x12000, scoped, tag = 'internal scratch']
  %s0 = inlined_call_operand.vmem [shape: f32[64,128], index: 0, kind: input, shape index: {}]
  %s1 = inlined_call_operand.vmem [shape: f32[64,128], index: 1, kind: input, shape index: {}]
  %s2 = inlined_call_operand.vmem [shape: f32[128,128], index: 2, kind: input, shape index: {}]
  %s3 = inlined_call_operand.vmem [shape: f32[1,128], index: 3, kind: input, shape index: {}]
  %s4 = inlined_call_operand.vmem [shape: f32[64,128], index: 4, kind: output, shape index: {}]
  %s5 = sld [smem:[#allocation0]]
  $region26: #{fno_forward.8} parent=0
    _
  %s7 = ssub.s32 1, %s5
  %s8 = scalar_select 0, %s7, %s5
  // Predicated region
  $region2: #{fno_forward.8} parent=0 // pred_check
    _
  $region3: #{fno_forward.8} parent=0 // pred_check_branch
    %10 = sbr.rel (0) target = $region5
  $region4: #{fno_forward.8} parent=0 // pred_region
    _
  $region5: #{fno_forward.8} parent=0 // pred_fallthru
    _
  // Predicated region
  $region6: #{fno_forward.8} parent=0 // pred_check
    _
  $region7: #{fno_forward.8} parent=0 // pred_check_branch
    %12 = sbr.rel (0) target = $region9
  $region8: #{fno_forward.8} parent=0 // pred_region
    _
  $region9: #{fno_forward.8} parent=0 // pred_fallthru
    _
  // Predicated region
  $region10: #{fno_forward.8} parent=0 // pred_check
    _
  $region11: #{fno_forward.8} parent=0 // pred_check_branch
    %14 = sbr.rel (0) target = $region13
  $region12: #{fno_forward.8} parent=0 // pred_region
    _
  $region13: #{fno_forward.8} parent=0 // pred_fallthru
    _
  // Predicated region
  $region14: #{fno_forward.8} parent=0 // pred_check
    _
  $region15: #{fno_forward.8} parent=0 // pred_check_branch
    %16 = sbr.rel (0) target = $region17
  $region16: #{fno_forward.8} parent=0 // pred_region
    _
  $region17: #{fno_forward.8} parent=0 // pred_fallthru
    _
  %v17 = vld [vmem:[%s0] sm:$0xff]
  %v18 = vld [vmem:[%s0 + $0x8] sm:$0xff]
  %v19 = vld [vmem:[%s0 + $0x10] sm:$0xff]
  %v20 = vld [vmem:[%s0 + $0x18] sm:$0xff]
  %v21 = vld [vmem:[%s0 + $0x20] sm:$0xff]
  %v22 = vld [vmem:[%s0 + $0x28] sm:$0xff]
  %v23 = vld [vmem:[%s0 + $0x30] sm:$0xff]
  %v24 = vld [vmem:[%s0 + $0x38] sm:$0xff]
  %v25 = vld [vmem:[%s2] sm:$0xff]
  %v26 = vld [vmem:[%s2 + $0x8] sm:$0xff]
  %v27 = vld [vmem:[%s2 + $0x10] sm:$0xff]
  %v28 = vld [vmem:[%s2 + $0x18] sm:$0xff]
  %v29 = vld [vmem:[%s2 + $0x20] sm:$0xff]
  %v30 = vld [vmem:[%s2 + $0x28] sm:$0xff]
  %v31 = vld [vmem:[%s2 + $0x30] sm:$0xff]
  %v32 = vld [vmem:[%s2 + $0x38] sm:$0xff]
  %v33 = vld [vmem:[%s2 + $0x40] sm:$0xff]
  %v34 = vld [vmem:[%s2 + $0x48] sm:$0xff]
  %v35 = vld [vmem:[%s2 + $0x50] sm:$0xff]
  %v36 = vld [vmem:[%s2 + $0x58] sm:$0xff]
  %v37 = vld [vmem:[%s2 + $0x60] sm:$0xff]
  %v38 = vld [vmem:[%s2 + $0x68] sm:$0xff]
  %v39 = vld [vmem:[%s2 + $0x70] sm:$0xff]
  %v40 = vld [vmem:[%s2 + $0x78] sm:$0xff]
  %v41 = vld [vmem:[%s3] sm:$0x1]
  %v43 = vlaneseq
  %v44 = vshrl.u32 %v43, 7
  %v45 = vsub.s32 0, %v44
  %v46 = vrot.slane %v41, %v45
  %48 = vmatprep.subr.mxu0 0.0
  %49 = vmatpush1.msra.mxu0 %v40
  %50 = vmatprep.subr.mxu0 0.0
  %51 = vmatpush1.msra.mxu0 %v39
  %52 = vmatprep.subr.mxu0 0.0
  %53 = vmatpush1.msra.mxu0 %v38
  %54 = vmatprep.subr.mxu0 0.0
  %55 = vmatpush1.msra.mxu0 %v37
  %56 = vmatprep.subr.mxu0 0.0
  %57 = vmatpush1.msra.mxu0 %v36
  %58 = vmatprep.subr.mxu0 0.0
  %59 = vmatpush1.msra.mxu0 %v35
  %60 = vmatprep.subr.mxu0 0.0
  %61 = vmatpush1.msra.mxu0 %v34
  %62 = vmatprep.subr.mxu0 0.0
  %63 = vmatpush1.msra.mxu0 %v33
  %64 = vmatprep.subr.mxu0 0.0
  %65 = vmatpush1.msra.mxu0 %v32
  %66 = vmatprep.subr.mxu0 0.0
  %67 = vmatpush1.msra.mxu0 %v31
  %68 = vmatprep.subr.mxu0 0.0
  %69 = vmatpush1.msra.mxu0 %v30
  %70 = vmatprep.subr.mxu0 0.0
  %71 = vmatpush1.msra.mxu0 %v29
  %72 = vmatprep.subr.mxu0 0.0
  %73 = vmatpush1.msra.mxu0 %v28
  %74 = vmatprep.subr.mxu0 0.0
  %75 = vmatpush1.msra.mxu0 %v27
  %76 = vmatprep.subr.mxu0 0.0
  %77 = vmatpush1.msra.mxu0 %v26
  %78 = vmatprep.subr.mxu0 0.0
  %79 = vmatpush1.msra.mxu0 %v25
  %80 = vmatprep.subr.mxu0 0.0
  %81 = vmatpush2.msra.mxu0 0.0
  %82 = vmatprep.subr.mxu0 0.0
  %83 = vmatpush2.msra.mxu0 0.0
  %84 = vmatprep.subr.mxu0 0.0
  %85 = vmatpush2.msra.mxu0 0.0
  %86 = vmatprep.subr.mxu0 0.0
  %87 = vmatpush2.msra.mxu0 0.0
  %88 = vmatprep.subr.mxu0 0.0
  %89 = vmatpush2.msra.mxu0 0.0
  %90 = vmatprep.subr.mxu0 0.0
  %91 = vmatpush2.msra.mxu0 0.0
  %92 = vmatprep.subr.mxu0 0.0
  %93 = vmatpush2.msra.mxu0 0.0
  %94 = vmatprep.subr.mxu0 0.0
  %95 = vmatpush2.msra.mxu0 0.0
  %96 = vmatprep.subr.mxu0 0.0
  %97 = vmatpush2.msra.mxu0 0.0
  %98 = vmatprep.subr.mxu0 0.0
  %99 = vmatpush2.msra.mxu0 0.0
  %100 = vmatprep.subr.mxu0 0.0
  %101 = vmatpush2.msra.mxu0 0.0
  %102 = vmatprep.subr.mxu0 0.0
  %103 = vmatpush2.msra.mxu0 0.0
  %104 = vmatprep.subr.mxu0 0.0
  %105 = vmatpush2.msra.mxu0 0.0
  %106 = vmatprep.subr.mxu0 0.0
  %107 = vmatpush2.msra.mxu0 0.0
  %108 = vmatprep.subr.mxu0 0.0
  %109 = vmatpush2.msra.mxu0 0.0
  %110 = vmatprep.subr.mxu0 0.0
  %111 = vmatpush2.msra.mxu0 0.0
  %112 = vmatprep.mubr.f32.mxu0 0.0
  %113 = vmatmul.mubr.f32.gmra.mxu0 %v17
  %v114 = vpop.f32.mrf.mxu0
  %v115 = vadd.f32 %v46, %v114
  %v116 = vpop.f32.mrf.mxu0
  %117 = vmatprep.mubr.f32.mxu0 0.0
  %118 = vmatmul.mubr.f32.gmra.mxu0 %v18
  %v119 = vpop.f32.mrf.mxu0
  %v120 = vadd.f32 %v46, %v119
  %v121 = vpop.f32.mrf.mxu0
  %122 = vmatprep.mubr.f32.mxu0 0.0
  %123 = vmatmul.mubr.f32.gmra.mxu0 %v19
  %v124 = vpop.f32.mrf.mxu0
  %v125 = vadd.f32 %v46, %v124
  %v126 = vpop.f32.mrf.mxu0
  %127 = vmatprep.mubr.f32.mxu0 0.0
  %128 = vmatmul.mubr.f32.gmra.mxu0 %v20
  %v129 = vpop.f32.mrf.mxu0
  %v130 = vadd.f32 %v46, %v129
  %v131 = vpop.f32.mrf.mxu0
  %132 = vmatprep.mubr.f32.mxu0 0.0
  %133 = vmatmul.mubr.f32.gmra.mxu0 %v21
  %v134 = vpop.f32.mrf.mxu0
  %v135 = vadd.f32 %v46, %v134
  %v136 = vpop.f32.mrf.mxu0
  %137 = vmatprep.mubr.f32.mxu0 0.0
  %138 = vmatmul.mubr.f32.gmra.mxu0 %v22
  %v139 = vpop.f32.mrf.mxu0
  %v140 = vadd.f32 %v46, %v139
  %v141 = vpop.f32.mrf.mxu0
  %142 = vmatprep.mubr.f32.mxu0 0.0
  %143 = vmatmul.mubr.f32.gmra.mxu0 %v23
  %v144 = vpop.f32.mrf.mxu0
  %v145 = vadd.f32 %v46, %v144
  %v146 = vpop.f32.mrf.mxu0
  %147 = vmatprep.mubr.f32.mxu0 0.0
  %148 = vmatmul.mubr.f32.gmra.mxu0 %v24
  %v149 = vpop.f32.mrf.mxu0
  %v150 = vadd.f32 %v46, %v149
  %v151 = vpop.f32.mrf.mxu0
  %152 = vdwg.mxu0
  %v153 = vld [vmem:[%s1] sm:$0xff]
  %v154 = vld [vmem:[%s1 + $0x8] sm:$0xff]
  %v155 = vld [vmem:[%s1 + $0x10] sm:$0xff]
  %v156 = vld [vmem:[%s1 + $0x18] sm:$0xff]
  %v157 = vld [vmem:[%s1 + $0x20] sm:$0xff]
  %v158 = vld [vmem:[%s1 + $0x28] sm:$0xff]
  %v159 = vld [vmem:[%s1 + $0x30] sm:$0xff]
  %v160 = vld [vmem:[%s1 + $0x38] sm:$0xff]
  %v161 = vadd.f32 %v115, %v153
  %v162 = vadd.f32 %v120, %v154
  %v163 = vadd.f32 %v125, %v155
  %v164 = vadd.f32 %v130, %v156
  %v165 = vadd.f32 %v135, %v157
  %v166 = vadd.f32 %v140, %v158
  %v167 = vadd.f32 %v145, %v159
  %v168 = vadd.f32 %v150, %v160
  %v169 = vmul.f32 %v161, 0.5
  %v170 = vmul.f32 %v162, 0.5
  %v171 = vmul.f32 %v163, 0.5
  %v172 = vmul.f32 %v164, 0.5
  %v173 = vmul.f32 %v165, 0.5
  %v174 = vmul.f32 %v166, 0.5
  %v175 = vmul.f32 %v167, 0.5
  %v176 = vmul.f32 %v168, 0.5
  %v177 = vmul.f32 %v161, 0.70710677
  %v178 = vmul.f32 %v162, 0.70710677
  %v179 = vmul.f32 %v163, 0.70710677
  %v180 = vmul.f32 %v164, 0.70710677
  %v181 = vmul.f32 %v165, 0.70710677
  %v182 = vmul.f32 %v166, 0.70710677
  %v183 = vmul.f32 %v167, 0.70710677
  %v184 = vmul.f32 %v168, 0.70710677
  %vm185 = vcmp.ge.f32.partialorder %v177, 0.0
  %vm186 = vcmp.ge.f32.partialorder %v178, 0.0
  %vm187 = vcmp.ge.f32.partialorder %v179, 0.0
  %vm188 = vcmp.ge.f32.partialorder %v180, 0.0
  %vm189 = vcmp.ge.f32.partialorder %v181, 0.0
  %vm190 = vcmp.ge.f32.partialorder %v182, 0.0
  %vm191 = vcmp.ge.f32.partialorder %v183, 0.0
  %vm192 = vcmp.ge.f32.partialorder %v184, 0.0
  %v193 = vsel %vm185, 1.0, -1.0
  %v194 = vsel %vm186, 1.0, -1.0
  %v195 = vsel %vm187, 1.0, -1.0
  %v196 = vsel %vm188, 1.0, -1.0
  %v197 = vsel %vm189, 1.0, -1.0
  %v198 = vsel %vm190, 1.0, -1.0
  %v199 = vsel %vm191, 1.0, -1.0
  %v200 = vsel %vm192, 1.0, -1.0
  %v201 = vand.u32 2147483647, %v177
  %v202 = vand.u32 2147483647, %v178
  %v203 = vand.u32 2147483647, %v179
  %v204 = vand.u32 2147483647, %v180
  %v205 = vand.u32 2147483647, %v181
  %v206 = vand.u32 2147483647, %v182
  %v207 = vand.u32 2147483647, %v183
  %v208 = vand.u32 2147483647, %v184
  %v209 = vmul.f32 %v201, 0.3275911
  %v210 = vmul.f32 %v202, 0.3275911
  %v211 = vmul.f32 %v203, 0.3275911
  %v212 = vmul.f32 %v204, 0.3275911
  %v213 = vmul.f32 %v205, 0.3275911
  %v214 = vmul.f32 %v206, 0.3275911
  %v215 = vmul.f32 %v207, 0.3275911
  %v216 = vmul.f32 %v208, 0.3275911
  %v217 = vadd.f32 %v209, 1.0
  %v218 = vadd.f32 %v210, 1.0
  %v219 = vadd.f32 %v211, 1.0
  %v220 = vadd.f32 %v212, 1.0
  %v221 = vadd.f32 %v213, 1.0
  %v222 = vadd.f32 %v214, 1.0
  %v223 = vadd.f32 %v215, 1.0
  %v224 = vadd.f32 %v216, 1.0
  %v225 = vrcp.pop %v217
  %v226 = vmul.f32 1.0, %v225
  %v227 = vrcp.pop %v218
  %v228 = vmul.f32 1.0, %v227
  %v229 = vrcp.pop %v219
  %v230 = vmul.f32 1.0, %v229
  %v231 = vrcp.pop %v220
  %v232 = vmul.f32 1.0, %v231
  %v233 = vrcp.pop %v221
  %v234 = vmul.f32 1.0, %v233
  %v235 = vrcp.pop %v222
  %v236 = vmul.f32 1.0, %v235
  %v237 = vrcp.pop %v223
  %v238 = vmul.f32 1.0, %v237
  %v239 = vrcp.pop %v224
  %v240 = vmul.f32 1.0, %v239
  %v241 = vmul.f32 %v226, 1.0614054
  %v242 = vmul.f32 %v228, 1.0614054
  %v243 = vmul.f32 %v230, 1.0614054
  %v244 = vmul.f32 %v232, 1.0614054
  %v245 = vmul.f32 %v234, 1.0614054
  %v246 = vmul.f32 %v236, 1.0614054
  %v247 = vmul.f32 %v238, 1.0614054
  %v248 = vmul.f32 %v240, 1.0614054
  %v249 = vadd.f32 %v241, -1.4531521
  %v250 = vadd.f32 %v242, -1.4531521
  %v251 = vadd.f32 %v243, -1.4531521
  %v252 = vadd.f32 %v244, -1.4531521
  %v253 = vadd.f32 %v245, -1.4531521
  %v254 = vadd.f32 %v246, -1.4531521
  %v255 = vadd.f32 %v247, -1.4531521
  %v256 = vadd.f32 %v248, -1.4531521
  %v257 = vmul.f32 %v249, %v226
  %v258 = vmul.f32 %v250, %v228
  %v259 = vmul.f32 %v251, %v230
  %v260 = vmul.f32 %v252, %v232
  %v261 = vmul.f32 %v253, %v234
  %v262 = vmul.f32 %v254, %v236
  %v263 = vmul.f32 %v255, %v238
  %v264 = vmul.f32 %v256, %v240
  %v265 = vadd.f32 %v257, 1.4214138
  %v266 = vadd.f32 %v258, 1.4214138
  %v267 = vadd.f32 %v259, 1.4214138
  %v268 = vadd.f32 %v260, 1.4214138
  %v269 = vadd.f32 %v261, 1.4214138
  %v270 = vadd.f32 %v262, 1.4214138
  %v271 = vadd.f32 %v263, 1.4214138
  %v272 = vadd.f32 %v264, 1.4214138
  %v273 = vmul.f32 %v265, %v226
  %v274 = vmul.f32 %v266, %v228
  %v275 = vmul.f32 %v267, %v230
  %v276 = vmul.f32 %v268, %v232
  %v277 = vmul.f32 %v269, %v234
  %v278 = vmul.f32 %v270, %v236
  %v279 = vmul.f32 %v271, %v238
  %v280 = vmul.f32 %v272, %v240
  %v281 = vadd.f32 %v273, -0.28449672
  %v282 = vadd.f32 %v274, -0.28449672
  %v283 = vadd.f32 %v275, -0.28449672
  %v284 = vadd.f32 %v276, -0.28449672
  %v285 = vadd.f32 %v277, -0.28449672
  %v286 = vadd.f32 %v278, -0.28449672
  %v287 = vadd.f32 %v279, -0.28449672
  %v288 = vadd.f32 %v280, -0.28449672
  %v289 = vmul.f32 %v281, %v226
  %v290 = vmul.f32 %v282, %v228
  %v291 = vmul.f32 %v283, %v230
  %v292 = vmul.f32 %v284, %v232
  %v293 = vmul.f32 %v285, %v234
  %v294 = vmul.f32 %v286, %v236
  %v295 = vmul.f32 %v287, %v238
  %v296 = vmul.f32 %v288, %v240
  %v297 = vadd.f32 %v289, 0.2548296
  %v298 = vadd.f32 %v290, 0.2548296
  %v299 = vadd.f32 %v291, 0.2548296
  %v300 = vadd.f32 %v292, 0.2548296
  %v301 = vadd.f32 %v293, 0.2548296
  %v302 = vadd.f32 %v294, 0.2548296
  %v303 = vadd.f32 %v295, 0.2548296
  %v304 = vadd.f32 %v296, 0.2548296
  %v305 = vmul.f32 %v297, %v226
  %v306 = vmul.f32 %v298, %v228
  %v307 = vmul.f32 %v299, %v230
  %v308 = vmul.f32 %v300, %v232
  %v309 = vmul.f32 %v301, %v234
  %v310 = vmul.f32 %v302, %v236
  %v311 = vmul.f32 %v303, %v238
  %v312 = vmul.f32 %v304, %v240
  %v313 = vsub.f32 0.0, %v201
  %v314 = vsub.f32 0.0, %v202
  %v315 = vsub.f32 0.0, %v203
  %v316 = vsub.f32 0.0, %v204
  %v317 = vsub.f32 0.0, %v205
  %v318 = vsub.f32 0.0, %v206
  %v319 = vsub.f32 0.0, %v207
  %v320 = vsub.f32 0.0, %v208
  %v321 = vmul.f32 %v313, %v201
  %v322 = vmul.f32 %v314, %v202
  %v323 = vmul.f32 %v315, %v203
  %v324 = vmul.f32 %v316, %v204
  %v325 = vmul.f32 %v317, %v205
  %v326 = vmul.f32 %v318, %v206
  %v327 = vmul.f32 %v319, %v207
  %v328 = vmul.f32 %v320, %v208
  %v329 = vmul.f32 %v321, 1.442695
  %v330 = vpow.pop %v329
  %v331 = vmul.f32 %v322, 1.442695
  %v332 = vpow.pop %v331
  %v333 = vmul.f32 %v323, 1.442695
  %v334 = vpow.pop %v333
  %v335 = vmul.f32 %v324, 1.442695
  %v336 = vpow.pop %v335
  %v337 = vmul.f32 %v325, 1.442695
  %v338 = vpow.pop %v337
  %v339 = vmul.f32 %v326, 1.442695
  %v340 = vpow.pop %v339
  %v341 = vmul.f32 %v327, 1.442695
  %v342 = vpow.pop %v341
  %v343 = vmul.f32 %v328, 1.442695
  %v344 = vpow.pop %v343
  %v345 = vmul.f32 %v305, %v330
  %v346 = vmul.f32 %v306, %v332
  %v347 = vmul.f32 %v307, %v334
  %v348 = vmul.f32 %v308, %v336
  %v349 = vmul.f32 %v309, %v338
  %v350 = vmul.f32 %v310, %v340
  %v351 = vmul.f32 %v311, %v342
  %v352 = vmul.f32 %v312, %v344
  %v353 = vsub.f32 1.0, %v345
  %v354 = vsub.f32 1.0, %v346
  %v355 = vsub.f32 1.0, %v347
  %v356 = vsub.f32 1.0, %v348
  %v357 = vsub.f32 1.0, %v349
  %v358 = vsub.f32 1.0, %v350
  %v359 = vsub.f32 1.0, %v351
  %v360 = vsub.f32 1.0, %v352
  %v361 = vmul.f32 %v193, %v353
  %v362 = vmul.f32 %v194, %v354
  %v363 = vmul.f32 %v195, %v355
  %v364 = vmul.f32 %v196, %v356
  %v365 = vmul.f32 %v197, %v357
  %v366 = vmul.f32 %v198, %v358
  %v367 = vmul.f32 %v199, %v359
  %v368 = vmul.f32 %v200, %v360
  %v369 = vadd.f32 %v361, 1.0
  %v370 = vadd.f32 %v362, 1.0
  %v371 = vadd.f32 %v363, 1.0
  %v372 = vadd.f32 %v364, 1.0
  %v373 = vadd.f32 %v365, 1.0
  %v374 = vadd.f32 %v366, 1.0
  %v375 = vadd.f32 %v367, 1.0
  %v376 = vadd.f32 %v368, 1.0
  %v377 = vmul.f32 %v169, %v369
  %v378 = vmul.f32 %v170, %v370
  %v379 = vmul.f32 %v171, %v371
  %v380 = vmul.f32 %v172, %v372
  %v381 = vmul.f32 %v173, %v373
  %v382 = vmul.f32 %v174, %v374
  %v383 = vmul.f32 %v175, %v375
  %v384 = vmul.f32 %v176, %v376
  %385 = vst [vmem:[%s4] sm:$0xff] %v377
  %386 = vst [vmem:[%s4 + $0x8] sm:$0xff] %v378
  %387 = vst [vmem:[%s4 + $0x10] sm:$0xff] %v379
  %388 = vst [vmem:[%s4 + $0x18] sm:$0xff] %v380
  %389 = vst [vmem:[%s4 + $0x20] sm:$0xff] %v381
  %390 = vst [vmem:[%s4 + $0x28] sm:$0xff] %v382
  %391 = vst [vmem:[%s4 + $0x30] sm:$0xff] %v383
  %392 = vst [vmem:[%s4 + $0x38] sm:$0xff] %v384
  // Predicated region
  $region18: #{fno_forward.8} parent=0 // pred_check
    _
  $region19: #{fno_forward.8} parent=0 // pred_check_branch
    %394 = sbr.rel (0) target = $region21
  $region20: #{fno_forward.8} parent=0 // pred_region
    _
  $region21: #{fno_forward.8} parent=0 // pred_fallthru
    _
  // Predicated region
  $region22: #{fno_forward.8} parent=0 // pred_check
    _
  $region23: #{fno_forward.8} parent=0 // pred_check_branch
    %396 = sbr.rel (0) target = $region25
  $region24: #{fno_forward.8} parent=0 // pred_region
    _
  $region25: #{fno_forward.8} parent=0 // pred_fallthru
    _

// kernel: fno_forward.11
$region0: #{fno_forward.11}
  #allocation0 [shape = 'u32[]', space=smem, size = 0x4, offset = 0x4, fixed_abs, tag = 'smem constant byte address 0x4 - core index']
  #allocation1 [shape = 'u32[144,128]{1,0:T(1,128)}', space=vmem, size = 0x12000, scoped, tag = 'internal scratch']
  %s0 = inlined_call_operand.vmem [shape: f32[64,128], index: 0, kind: input, shape index: {}]
  %s1 = inlined_call_operand.vmem [shape: f32[128,1024], index: 1, kind: input, shape index: {}]
  %s2 = inlined_call_operand.vmem [shape: f32[1,1024], index: 2, kind: input, shape index: {}]
  %s3 = inlined_call_operand.vmem [shape: f32[1024,16], index: 3, kind: input, shape index: {}]
  %s4 = inlined_call_operand.vmem [shape: f32[1,16], index: 4, kind: input, shape index: {}]
  %s5 = inlined_call_operand.vmem [shape: f32[64,16], index: 5, kind: output, shape index: {}]
  %s6 = sld [smem:[#allocation0]]
  $region30: #{fno_forward.11} parent=0
    _
  %s8 = ssub.s32 1, %s6
  %s9 = scalar_select 0, %s8, %s6
  // Predicated region
  $region2: #{fno_forward.11} parent=0 // pred_check
    _
  $region3: #{fno_forward.11} parent=0 // pred_check_branch
    %11 = sbr.rel (0) target = $region5
  $region4: #{fno_forward.11} parent=0 // pred_region
    _
  $region5: #{fno_forward.11} parent=0 // pred_fallthru
    _
  // Predicated region
  $region6: #{fno_forward.11} parent=0 // pred_check
    _
  $region7: #{fno_forward.11} parent=0 // pred_check_branch
    %13 = sbr.rel (0) target = $region9
  $region8: #{fno_forward.11} parent=0 // pred_region
    _
  $region9: #{fno_forward.11} parent=0 // pred_fallthru
    _
  // Predicated region
  $region10: #{fno_forward.11} parent=0 // pred_check
    _
  $region11: #{fno_forward.11} parent=0 // pred_check_branch
    %15 = sbr.rel (0) target = $region13
  $region12: #{fno_forward.11} parent=0 // pred_region
    _
  $region13: #{fno_forward.11} parent=0 // pred_fallthru
    _
  // Predicated region
  $region14: #{fno_forward.11} parent=0 // pred_check
    _
  $region15: #{fno_forward.11} parent=0 // pred_check_branch
    %17 = sbr.rel (0) target = $region17
  $region16: #{fno_forward.11} parent=0 // pred_region
    _
  $region17: #{fno_forward.11} parent=0 // pred_fallthru
    _
  // Predicated region
  $region18: #{fno_forward.11} parent=0 // pred_check
    _
  $region19: #{fno_forward.11} parent=0 // pred_check_branch
    %19 = sbr.rel (0) target = $region21
  $region20: #{fno_forward.11} parent=0 // pred_region
    _
  $region21: #{fno_forward.11} parent=0 // pred_fallthru
    _
  %v20 = vld [vmem:[%s0] sm:$0xff]
  %v21 = vld [vmem:[%s0 + $0x8] sm:$0xff]
  %v22 = vld [vmem:[%s0 + $0x10] sm:$0xff]
  %v23 = vld [vmem:[%s0 + $0x18] sm:$0xff]
  %v24 = vld [vmem:[%s0 + $0x20] sm:$0xff]
  %v25 = vld [vmem:[%s0 + $0x28] sm:$0xff]
  %v26 = vld [vmem:[%s0 + $0x30] sm:$0xff]
  %v27 = vld [vmem:[%s0 + $0x38] sm:$0xff]
  %v28 = vld [vmem:[%s1] sm:$0xff]
  %v29 = vld [vmem:[%s1 + $0x8] sm:$0xff]
  %v30 = vld [vmem:[%s1 + $0x10] sm:$0xff]
  %v31 = vld [vmem:[%s1 + $0x18] sm:$0xff]
  %v32 = vld [vmem:[%s1 + $0x20] sm:$0xff]
  %v33 = vld [vmem:[%s1 + $0x28] sm:$0xff]
  %v34 = vld [vmem:[%s1 + $0x30] sm:$0xff]
  %v35 = vld [vmem:[%s1 + $0x38] sm:$0xff]
  %v36 = vld [vmem:[%s1 + $0x40] sm:$0xff]
  %v37 = vld [vmem:[%s1 + $0x48] sm:$0xff]
  %v38 = vld [vmem:[%s1 + $0x50] sm:$0xff]
  %v39 = vld [vmem:[%s1 + $0x58] sm:$0xff]
  %v40 = vld [vmem:[%s1 + $0x60] sm:$0xff]
  %v41 = vld [vmem:[%s1 + $0x68] sm:$0xff]
  %v42 = vld [vmem:[%s1 + $0x70] sm:$0xff]
  %v43 = vld [vmem:[%s1 + $0x78] sm:$0xff]
  %v44 = vld [vmem:[%s1 + $0x80] sm:$0xff]
  %v45 = vld [vmem:[%s1 + $0x88] sm:$0xff]
  %v46 = vld [vmem:[%s1 + $0x90] sm:$0xff]
  %v47 = vld [vmem:[%s1 + $0x98] sm:$0xff]
  %v48 = vld [vmem:[%s1 + $0xa0] sm:$0xff]
  %v49 = vld [vmem:[%s1 + $0xa8] sm:$0xff]
  %v50 = vld [vmem:[%s1 + $0xb0] sm:$0xff]
  %v51 = vld [vmem:[%s1 + $0xb8] sm:$0xff]
  %v52 = vld [vmem:[%s1 + $0xc0] sm:$0xff]
  %v53 = vld [vmem:[%s1 + $0xc8] sm:$0xff]
  %v54 = vld [vmem:[%s1 + $0xd0] sm:$0xff]
  %v55 = vld [vmem:[%s1 + $0xd8] sm:$0xff]
  %v56 = vld [vmem:[%s1 + $0xe0] sm:$0xff]
  %v57 = vld [vmem:[%s1 + $0xe8] sm:$0xff]
  %v58 = vld [vmem:[%s1 + $0xf0] sm:$0xff]
  %v59 = vld [vmem:[%s1 + $0xf8] sm:$0xff]
  %v60 = vld [vmem:[%s1 + $0x100] sm:$0xff]
  %v61 = vld [vmem:[%s1 + $0x108] sm:$0xff]
  %v62 = vld [vmem:[%s1 + $0x110] sm:$0xff]
  %v63 = vld [vmem:[%s1 + $0x118] sm:$0xff]
  %v64 = vld [vmem:[%s1 + $0x120] sm:$0xff]
  %v65 = vld [vmem:[%s1 + $0x128] sm:$0xff]
  %v66 = vld [vmem:[%s1 + $0x130] sm:$0xff]
  %v67 = vld [vmem:[%s1 + $0x138] sm:$0xff]
  %v68 = vld [vmem:[%s1 + $0x140] sm:$0xff]
  %v69 = vld [vmem:[%s1 + $0x148] sm:$0xff]
  %v70 = vld [vmem:[%s1 + $0x150] sm:$0xff]
  %v71 = vld [vmem:[%s1 + $0x158] sm:$0xff]
  %v72 = vld [vmem:[%s1 + $0x160] sm:$0xff]
  %v73 = vld [vmem:[%s1 + $0x168] sm:$0xff]
  %v74 = vld [vmem:[%s1 + $0x170] sm:$0xff]
  %v75 = vld [vmem:[%s1 + $0x178] sm:$0xff]
  %v76 = vld [vmem:[%s1 + $0x180] sm:$0xff]
  %v77 = vld [vmem:[%s1 + $0x188] sm:$0xff]
  %v78 = vld [vmem:[%s1 + $0x190] sm:$0xff]
  %v79 = vld [vmem:[%s1 + $0x198] sm:$0xff]
  %v80 = vld [vmem:[%s1 + $0x1a0] sm:$0xff]
  %v81 = vld [vmem:[%s1 + $0x1a8] sm:$0xff]
  %v82 = vld [vmem:[%s1 + $0x1b0] sm:$0xff]
  %v83 = vld [vmem:[%s1 + $0x1b8] sm:$0xff]
  %v84 = vld [vmem:[%s1 + $0x1c0] sm:$0xff]
  %v85 = vld [vmem:[%s1 + $0x1c8] sm:$0xff]
  %v86 = vld [vmem:[%s1 + $0x1d0] sm:$0xff]
  %v87 = vld [vmem:[%s1 + $0x1d8] sm:$0xff]
  %v88 = vld [vmem:[%s1 + $0x1e0] sm:$0xff]
  %v89 = vld [vmem:[%s1 + $0x1e8] sm:$0xff]
  %v90 = vld [vmem:[%s1 + $0x1f0] sm:$0xff]
  %v91 = vld [vmem:[%s1 + $0x1f8] sm:$0xff]
  %v92 = vld [vmem:[%s1 + $0x200] sm:$0xff]
  %v93 = vld [vmem:[%s1 + $0x208] sm:$0xff]
  %v94 = vld [vmem:[%s1 + $0x210] sm:$0xff]
  %v95 = vld [vmem:[%s1 + $0x218] sm:$0xff]
  %v96 = vld [vmem:[%s1 + $0x220] sm:$0xff]
  %v97 = vld [vmem:[%s1 + $0x228] sm:$0xff]
  %v98 = vld [vmem:[%s1 + $0x230] sm:$0xff]
  %v99 = vld [vmem:[%s1 + $0x238] sm:$0xff]
  %v100 = vld [vmem:[%s1 + $0x240] sm:$0xff]
  %v101 = vld [vmem:[%s1 + $0x248] sm:$0xff]
  %v102 = vld [vmem:[%s1 + $0x250] sm:$0xff]
  %v103 = vld [vmem:[%s1 + $0x258] sm:$0xff]
  %v104 = vld [vmem:[%s1 + $0x260] sm:$0xff]
  %v105 = vld [vmem:[%s1 + $0x268] sm:$0xff]
  %v106 = vld [vmem:[%s1 + $0x270] sm:$0xff]
  %v107 = vld [vmem:[%s1 + $0x278] sm:$0xff]
  %v108 = vld [vmem:[%s1 + $0x280] sm:$0xff]
  %v109 = vld [vmem:[%s1 + $0x288] sm:$0xff]
  %v110 = vld [vmem:[%s1 + $0x290] sm:$0xff]
  %v111 = vld [vmem:[%s1 + $0x298] sm:$0xff]
  %v112 = vld [vmem:[%s1 + $0x2a0] sm:$0xff]
  %v113 = vld [vmem:[%s1 + $0x2a8] sm:$0xff]
  %v114 = vld [vmem:[%s1 + $0x2b0] sm:$0xff]
  %v115 = vld [vmem:[%s1 + $0x2b8] sm:$0xff]
  %v116 = vld [vmem:[%s1 + $0x2c0] sm:$0xff]
  %v117 = vld [vmem:[%s1 + $0x2c8] sm:$0xff]
  %v118 = vld [vmem:[%s1 + $0x2d0] sm:$0xff]
  %v119 = vld [vmem:[%s1 + $0x2d8] sm:$0xff]
  %v120 = vld [vmem:[%s1 + $0x2e0] sm:$0xff]
  %v121 = vld [vmem:[%s1 + $0x2e8] sm:$0xff]
  %v122 = vld [vmem:[%s1 + $0x2f0] sm:$0xff]
  %v123 = vld [vmem:[%s1 + $0x2f8] sm:$0xff]
  %v124 = vld [vmem:[%s1 + $0x300] sm:$0xff]
  %v125 = vld [vmem:[%s1 + $0x308] sm:$0xff]
  %v126 = vld [vmem:[%s1 + $0x310] sm:$0xff]
  %v127 = vld [vmem:[%s1 + $0x318] sm:$0xff]
  %v128 = vld [vmem:[%s1 + $0x320] sm:$0xff]
  %v129 = vld [vmem:[%s1 + $0x328] sm:$0xff]
  %v130 = vld [vmem:[%s1 + $0x330] sm:$0xff]
  %v131 = vld [vmem:[%s1 + $0x338] sm:$0xff]
  %v132 = vld [vmem:[%s1 + $0x340] sm:$0xff]
  %v133 = vld [vmem:[%s1 + $0x348] sm:$0xff]
  %v134 = vld [vmem:[%s1 + $0x350] sm:$0xff]
  %v135 = vld [vmem:[%s1 + $0x358] sm:$0xff]
  %v136 = vld [vmem:[%s1 + $0x360] sm:$0xff]
  %v137 = vld [vmem:[%s1 + $0x368] sm:$0xff]
  %v138 = vld [vmem:[%s1 + $0x370] sm:$0xff]
  %v139 = vld [vmem:[%s1 + $0x378] sm:$0xff]
  %v140 = vld [vmem:[%s1 + $0x380] sm:$0xff]
  %v141 = vld [vmem:[%s1 + $0x388] sm:$0xff]
  %v142 = vld [vmem:[%s1 + $0x390] sm:$0xff]
  %v143 = vld [vmem:[%s1 + $0x398] sm:$0xff]
  %v144 = vld [vmem:[%s1 + $0x3a0] sm:$0xff]
  %v145 = vld [vmem:[%s1 + $0x3a8] sm:$0xff]
  %v146 = vld [vmem:[%s1 + $0x3b0] sm:$0xff]
  %v147 = vld [vmem:[%s1 + $0x3b8] sm:$0xff]
  %v148 = vld [vmem:[%s1 + $0x3c0] sm:$0xff]
  %v149 = vld [vmem:[%s1 + $0x3c8] sm:$0xff]
  %v150 = vld [vmem:[%s1 + $0x3d0] sm:$0xff]
  %v151 = vld [vmem:[%s1 + $0x3d8] sm:$0xff]
  %v152 = vld [vmem:[%s1 + $0x3e0] sm:$0xff]
  %v153 = vld [vmem:[%s1 + $0x3e8] sm:$0xff]
  %v154 = vld [vmem:[%s1 + $0x3f0] sm:$0xff]
  %v155 = vld [vmem:[%s1 + $0x3f8] sm:$0xff]
  %v156 = vld [vmem:[%s2] sm:$0xff]
  %v158 = vlaneseq
  %v159 = vshrl.u32 %v158, 7
  %v160 = vsub.s32 0, %v159
  %v161 = vrot.slane %v156, %v160
  %v162 = vlaneseq
  %v163 = vshrl.u32 %v162, 7
  %v164 = vsub.s32 1, %v163
  %v165 = vrot.slane %v156, %v164
  %v166 = vlaneseq
  %v167 = vshrl.u32 %v166, 7
  %v168 = vsub.s32 2, %v167
  %v169 = vrot.slane %v156, %v168
  %v170 = vlaneseq
  %v171 = vshrl.u32 %v170, 7
  %v172 = vsub.s32 3, %v171
  %v173 = vrot.slane %v156, %v172
  %v174 = vlaneseq
  %v175 = vshrl.u32 %v174, 7
  %v176 = vsub.s32 4, %v175
  %v177 = vrot.slane %v156, %v176
  %v178 = vlaneseq
  %v179 = vshrl.u32 %v178, 7
  %v180 = vsub.s32 5, %v179
  %v181 = vrot.slane %v156, %v180
  %v182 = vlaneseq
  %v183 = vshrl.u32 %v182, 7
  %v184 = vsub.s32 6, %v183
  %v185 = vrot.slane %v156, %v184
  %v186 = vlaneseq
  %v187 = vshrl.u32 %v186, 7
  %v188 = vsub.s32 7, %v187
  %v189 = vrot.slane %v156, %v188
  %198 = vmatprep.subr.mxu0 %v149
  %199 = vmatpush1.msra.mxu0 %v148
  %200 = vmatprep.subr.mxu0 %v141
  %201 = vmatpush1.msra.mxu0 %v140
  %202 = vmatprep.subr.mxu0 %v133
  %203 = vmatpush1.msra.mxu0 %v132
  %204 = vmatprep.subr.mxu0 %v125
  %205 = vmatpush1.msra.mxu0 %v124
  %206 = vmatprep.subr.mxu0 %v117
  %207 = vmatpush1.msra.mxu0 %v116
  %208 = vmatprep.subr.mxu0 %v109
  %209 = vmatpush1.msra.mxu0 %v108
  %210 = vmatprep.subr.mxu0 %v101
  %211 = vmatpush1.msra.mxu0 %v100
  %212 = vmatprep.subr.mxu0 %v93
  %213 = vmatpush1.msra.mxu0 %v92
  %214 = vmatprep.subr.mxu0 %v85
  %215 = vmatpush1.msra.mxu0 %v84
  %216 = vmatprep.subr.mxu0 %v77
  %217 = vmatpush1.msra.mxu0 %v76
  %218 = vmatprep.subr.mxu0 %v69
  %219 = vmatpush1.msra.mxu0 %v68
  %220 = vmatprep.subr.mxu0 %v61
  %221 = vmatpush1.msra.mxu0 %v60
  %222 = vmatprep.subr.mxu0 %v53
  %223 = vmatpush1.msra.mxu0 %v52
  %224 = vmatprep.subr.mxu0 %v45
  %225 = vmatpush1.msra.mxu0 %v44
  %226 = vmatprep.subr.mxu0 %v37
  %227 = vmatpush1.msra.mxu0 %v36
  %228 = vmatprep.subr.mxu0 %v29
  %229 = vmatpush1.msra.mxu0 %v28
  %230 = vmatprep.subr.mxu0 0.0
  %231 = vmatpush2.msra.mxu0 0.0
  %232 = vmatprep.subr.mxu0 0.0
  %233 = vmatpush2.msra.mxu0 0.0
  %234 = vmatprep.subr.mxu0 0.0
  %235 = vmatpush2.msra.mxu0 0.0
  %236 = vmatprep.subr.mxu0 0.0
  %237 = vmatpush2.msra.mxu0 0.0
  %238 = vmatprep.subr.mxu0 0.0
  %239 = vmatpush2.msra.mxu0 0.0
  %240 = vmatprep.subr.mxu0 0.0
  %241 = vmatpush2.msra.mxu0 0.0
  %242 = vmatprep.subr.mxu0 0.0
  %243 = vmatpush2.msra.mxu0 0.0
  %244 = vmatprep.subr.mxu0 0.0
  %245 = vmatpush2.msra.mxu0 0.0
  %246 = vmatprep.subr.mxu0 0.0
  %247 = vmatpush2.msra.mxu0 0.0
  %248 = vmatprep.subr.mxu0 0.0
  %249 = vmatpush2.msra.mxu0 0.0
  %250 = vmatprep.subr.mxu0 0.0
  %251 = vmatpush2.msra.mxu0 0.0
  %252 = vmatprep.subr.mxu0 0.0
  %253 = vmatpush2.msra.mxu0 0.0
  %254 = vmatprep.subr.mxu0 0.0
  %255 = vmatpush2.msra.mxu0 0.0
  %256 = vmatprep.subr.mxu0 0.0
  %257 = vmatpush2.msra.mxu0 0.0
  %258 = vmatprep.subr.mxu0 0.0
  %259 = vmatpush2.msra.mxu0 0.0
  %260 = vmatprep.subr.mxu0 0.0
  %261 = vmatpush2.msra.mxu0 0.0
  %262 = vmatprep.mubr.f32.mxu0 0.0
  %263 = vmatmul.mubr.f32.gmra.mxu0 %v20
  %v264 = vpop.f32.mrf.mxu0
  %v265 = vadd.f32 %v161, %v264
  %v266 = vpop.f32.mrf.mxu0
  %v267 = vadd.f32 %v165, %v266
  %268 = vmatprep.mubr.f32.mxu0 0.0
  %269 = vmatmul.mubr.f32.gmra.mxu0 %v21
  %v270 = vpop.f32.mrf.mxu0
  %v271 = vadd.f32 %v161, %v270
  %v272 = vpop.f32.mrf.mxu0
  %v273 = vadd.f32 %v165, %v272
  %274 = vmatprep.mubr.f32.mxu0 0.0
  %275 = vmatmul.mubr.f32.gmra.mxu0 %v22
  %v276 = vpop.f32.mrf.mxu0
  %v277 = vadd.f32 %v161, %v276
  %v278 = vpop.f32.mrf.mxu0
  %v279 = vadd.f32 %v165, %v278
  %280 = vmatprep.mubr.f32.mxu0 0.0
  %281 = vmatmul.mubr.f32.gmra.mxu0 %v23
  %v282 = vpop.f32.mrf.mxu0
  %v283 = vadd.f32 %v161, %v282
  %v284 = vpop.f32.mrf.mxu0
  %v285 = vadd.f32 %v165, %v284
  %286 = vmatprep.mubr.f32.mxu0 0.0
  %287 = vmatmul.mubr.f32.gmra.mxu0 %v24
  %v288 = vpop.f32.mrf.mxu0
  %v289 = vadd.f32 %v161, %v288
  %v290 = vpop.f32.mrf.mxu0
  %v291 = vadd.f32 %v165, %v290
  %292 = vmatprep.mubr.f32.mxu0 0.0
  %293 = vmatmul.mubr.f32.gmra.mxu0 %v25
  %v294 = vpop.f32.mrf.mxu0
  %v295 = vadd.f32 %v161, %v294
  %v296 = vpop.f32.mrf.mxu0
  %v297 = vadd.f32 %v165, %v296
  %298 = vmatprep.mubr.f32.mxu0 0.0
  %299 = vmatmul.mubr.f32.gmra.mxu0 %v26
  %v300 = vpop.f32.mrf.mxu0
  %v301 = vadd.f32 %v161, %v300
  %v302 = vpop.f32.mrf.mxu0
  %v303 = vadd.f32 %v165, %v302
  %304 = vmatprep.mubr.f32.mxu0 0.0
  %305 = vmatmul.mubr.f32.gmra.mxu0 %v27
  %v306 = vpop.f32.mrf.mxu0
  %v307 = vadd.f32 %v161, %v306
  %v308 = vpop.f32.mrf.mxu0
  %v309 = vadd.f32 %v165, %v308
  %310 = vdwg.mxu0
  %311 = vmatprep.subr.mxu0 %v151
  %312 = vmatpush1.msra.mxu0 %v150
  %313 = vmatprep.subr.mxu0 %v143
  %314 = vmatpush1.msra.mxu0 %v142
  %315 = vmatprep.subr.mxu0 %v135
  %316 = vmatpush1.msra.mxu0 %v134
  %317 = vmatprep.subr.mxu0 %v127
  %318 = vmatpush1.msra.mxu0 %v126
  %319 = vmatprep.subr.mxu0 %v119
  %320 = vmatpush1.msra.mxu0 %v118
  %321 = vmatprep.subr.mxu0 %v111
  %322 = vmatpush1.msra.mxu0 %v110
  %323 = vmatprep.subr.mxu0 %v103
  %324 = vmatpush1.msra.mxu0 %v102
  %325 = vmatprep.subr.mxu0 %v95
  %326 = vmatpush1.msra.mxu0 %v94
  %327 = vmatprep.subr.mxu0 %v87
  %328 = vmatpush1.msra.mxu0 %v86
  %329 = vmatprep.subr.mxu0 %v79
  %330 = vmatpush1.msra.mxu0 %v78
  %331 = vmatprep.subr.mxu0 %v71
  %332 = vmatpush1.msra.mxu0 %v70
  %333 = vmatprep.subr.mxu0 %v63
  %334 = vmatpush1.msra.mxu0 %v62
  %335 = vmatprep.subr.mxu0 %v55
  %336 = vmatpush1.msra.mxu0 %v54
  %337 = vmatprep.subr.mxu0 %v47
  %338 = vmatpush1.msra.mxu0 %v46
  %339 = vmatprep.subr.mxu0 %v39
  %340 = vmatpush1.msra.mxu0 %v38
  %341 = vmatprep.subr.mxu0 %v31
  %342 = vmatpush1.msra.mxu0 %v30
  %343 = vmatprep.subr.mxu0 0.0
  %344 = vmatpush2.msra.mxu0 0.0
  %345 = vmatprep.subr.mxu0 0.0
  %346 = vmatpush2.msra.mxu0 0.0
  %347 = vmatprep.subr.mxu0 0.0
  %348 = vmatpush2.msra.mxu0 0.0
  %349 = vmatprep.subr.mxu0 0.0
  %350 = vmatpush2.msra.mxu0 0.0
  %351 = vmatprep.subr.mxu0 0.0
  %352 = vmatpush2.msra.mxu0 0.0
  %353 = vmatprep.subr.mxu0 0.0
  %354 = vmatpush2.msra.mxu0 0.0
  %355 = vmatprep.subr.mxu0 0.0
  %356 = vmatpush2.msra.mxu0 0.0
  %357 = vmatprep.subr.mxu0 0.0
  %358 = vmatpush2.msra.mxu0 0.0
  %359 = vmatprep.subr.mxu0 0.0
  %360 = vmatpush2.msra.mxu0 0.0
  %361 = vmatprep.subr.mxu0 0.0
  %362 = vmatpush2.msra.mxu0 0.0
  %363 = vmatprep.subr.mxu0 0.0
  %364 = vmatpush2.msra.mxu0 0.0
  %365 = vmatprep.subr.mxu0 0.0
  %366 = vmatpush2.msra.mxu0 0.0
  %367 = vmatprep.subr.mxu0 0.0
  %368 = vmatpush2.msra.mxu0 0.0
  %369 = vmatprep.subr.mxu0 0.0
  %370 = vmatpush2.msra.mxu0 0.0
  %371 = vmatprep.subr.mxu0 0.0
  %372 = vmatpush2.msra.mxu0 0.0
  %373 = vmatprep.subr.mxu0 0.0
  %374 = vmatpush2.msra.mxu0 0.0
  %375 = vmatprep.mubr.f32.mxu0 0.0
  %376 = vmatmul.mubr.f32.gmra.mxu0 %v20
  %v377 = vpop.f32.mrf.mxu0
  %v378 = vadd.f32 %v169, %v377
  %v379 = vpop.f32.mrf.mxu0
  %v380 = vadd.f32 %v173, %v379
  %381 = vmatprep.mubr.f32.mxu0 0.0
  %382 = vmatmul.mubr.f32.gmra.mxu0 %v21
  %v383 = vpop.f32.mrf.mxu0
  %v384 = vadd.f32 %v169, %v383
  %v385 = vpop.f32.mrf.mxu0
  %v386 = vadd.f32 %v173, %v385
  %387 = vmatprep.mubr.f32.mxu0 0.0
  %388 = vmatmul.mubr.f32.gmra.mxu0 %v22
  %v389 = vpop.f32.mrf.mxu0
  %v390 = vadd.f32 %v169, %v389
  %v391 = vpop.f32.mrf.mxu0
  %v392 = vadd.f32 %v173, %v391
  %393 = vmatprep.mubr.f32.mxu0 0.0
  %394 = vmatmul.mubr.f32.gmra.mxu0 %v23
  %v395 = vpop.f32.mrf.mxu0
  %v396 = vadd.f32 %v169, %v395
  %v397 = vpop.f32.mrf.mxu0
  %v398 = vadd.f32 %v173, %v397
  %399 = vmatprep.mubr.f32.mxu0 0.0
  %400 = vmatmul.mubr.f32.gmra.mxu0 %v24
  %v401 = vpop.f32.mrf.mxu0
  %v402 = vadd.f32 %v169, %v401
  %v403 = vpop.f32.mrf.mxu0
  %v404 = vadd.f32 %v173, %v403
  %405 = vmatprep.mubr.f32.mxu0 0.0
  %406 = vmatmul.mubr.f32.gmra.mxu0 %v25
  %v407 = vpop.f32.mrf.mxu0
  %v408 = vadd.f32 %v169, %v407
  %v409 = vpop.f32.mrf.mxu0
  %v410 = vadd.f32 %v173, %v409
  %411 = vmatprep.mubr.f32.mxu0 0.0
  %412 = vmatmul.mubr.f32.gmra.mxu0 %v26
  %v413 = vpop.f32.mrf.mxu0
  %v414 = vadd.f32 %v169, %v413
  %v415 = vpop.f32.mrf.mxu0
  %v416 = vadd.f32 %v173, %v415
  %417 = vmatprep.mubr.f32.mxu0 0.0
  %418 = vmatmul.mubr.f32.gmra.mxu0 %v27
  %v419 = vpop.f32.mrf.mxu0
  %v420 = vadd.f32 %v169, %v419
  %v421 = vpop.f32.mrf.mxu0
  %v422 = vadd.f32 %v173, %v421
  %423 = vdwg.mxu0
  %424 = vmatprep.subr.mxu0 %v153
  %425 = vmatpush1.msra.mxu0 %v152
  %426 = vmatprep.subr.mxu0 %v145
  %427 = vmatpush1.msra.mxu0 %v144
  %428 = vmatprep.subr.mxu0 %v137
  %429 = vmatpush1.msra.mxu0 %v136
  %430 = vmatprep.subr.mxu0 %v129
  %431 = vmatpush1.msra.mxu0 %v128
  %432 = vmatprep.subr.mxu0 %v121
  %433 = vmatpush1.msra.mxu0 %v120
  %434 = vmatprep.subr.mxu0 %v113
  %435 = vmatpush1.msra.mxu0 %v112
  %436 = vmatprep.subr.mxu0 %v105
  %437 = vmatpush1.msra.mxu0 %v104
  %438 = vmatprep.subr.mxu0 %v97
  %439 = vmatpush1.msra.mxu0 %v96
  %440 = vmatprep.subr.mxu0 %v89
  %441 = vmatpush1.msra.mxu0 %v88
  %442 = vmatprep.subr.mxu0 %v81
  %443 = vmatpush1.msra.mxu0 %v80
  %444 = vmatprep.subr.mxu0 %v73
  %445 = vmatpush1.msra.mxu0 %v72
  %446 = vmatprep.subr.mxu0 %v65
  %447 = vmatpush1.msra.mxu0 %v64
  %448 = vmatprep.subr.mxu0 %v57
  %449 = vmatpush1.msra.mxu0 %v56
  %450 = vmatprep.subr.mxu0 %v49
  %451 = vmatpush1.msra.mxu0 %v48
  %452 = vmatprep.subr.mxu0 %v41
  %453 = vmatpush1.msra.mxu0 %v40
  %454 = vmatprep.subr.mxu0 %v33
  %455 = vmatpush1.msra.mxu0 %v32
  %456 = vmatprep.subr.mxu0 0.0
  %457 = vmatpush2.msra.mxu0 0.0
  %458 = vmatprep.subr.mxu0 0.0
  %459 = vmatpush2.msra.mxu0 0.0
  %460 = vmatprep.subr.mxu0 0.0
  %461 = vmatpush2.msra.mxu0 0.0
  %462 = vmatprep.subr.mxu0 0.0
  %463 = vmatpush2.msra.mxu0 0.0
  %464 = vmatprep.subr.mxu0 0.0
  %465 = vmatpush2.msra.mxu0 0.0
  %466 = vmatprep.subr.mxu0 0.0
  %467 = vmatpush2.msra.mxu0 0.0
  %468 = vmatprep.subr.mxu0 0.0
  %469 = vmatpush2.msra.mxu0 0.0
  %470 = vmatprep.subr.mxu0 0.0
  %471 = vmatpush2.msra.mxu0 0.0
  %472 = vmatprep.subr.mxu0 0.0
  %473 = vmatpush2.msra.mxu0 0.0
  %474 = vmatprep.subr.mxu0 0.0
  %475 = vmatpush2.msra.mxu0 0.0
  %476 = vmatprep.subr.mxu0 0.0
  %477 = vmatpush2.msra.mxu0 0.0
  %478 = vmatprep.subr.mxu0 0.0
  %479 = vmatpush2.msra.mxu0 0.0
  %480 = vmatprep.subr.mxu0 0.0
  %481 = vmatpush2.msra.mxu0 0.0
  %482 = vmatprep.subr.mxu0 0.0
  %483 = vmatpush2.msra.mxu0 0.0
  %484 = vmatprep.subr.mxu0 0.0
  %485 = vmatpush2.msra.mxu0 0.0
  %486 = vmatprep.subr.mxu0 0.0
  %487 = vmatpush2.msra.mxu0 0.0
  %488 = vmatprep.mubr.f32.mxu0 0.0
  %489 = vmatmul.mubr.f32.gmra.mxu0 %v20
  %v490 = vpop.f32.mrf.mxu0
  %v491 = vadd.f32 %v177, %v490
  %v492 = vpop.f32.mrf.mxu0
  %v493 = vadd.f32 %v181, %v492
  %494 = vmatprep.mubr.f32.mxu0 0.0
  %495 = vmatmul.mubr.f32.gmra.mxu0 %v21
  %v496 = vpop.f32.mrf.mxu0
  %v497 = vadd.f32 %v177, %v496
  %v498 = vpop.f32.mrf.mxu0
  %v499 = vadd.f32 %v181, %v498
  %500 = vmatprep.mubr.f32.mxu0 0.0
  %501 = vmatmul.mubr.f32.gmra.mxu0 %v22
  %v502 = vpop.f32.mrf.mxu0
  %v503 = vadd.f32 %v177, %v502
  %v504 = vpop.f32.mrf.mxu0
  %v505 = vadd.f32 %v181, %v504
  %506 = vmatprep.mubr.f32.mxu0 0.0
  %507 = vmatmul.mubr.f32.gmra.mxu0 %v23
  %v508 = vpop.f32.mrf.mxu0
  %v509 = vadd.f32 %v177, %v508
  %v510 = vpop.f32.mrf.mxu0
  %v511 = vadd.f32 %v181, %v510
  %512 = vmatprep.mubr.f32.mxu0 0.0
  %513 = vmatmul.mubr.f32.gmra.mxu0 %v24
  %v514 = vpop.f32.mrf.mxu0
  %v515 = vadd.f32 %v177, %v514
  %v516 = vpop.f32.mrf.mxu0
  %v517 = vadd.f32 %v181, %v516
  %518 = vmatprep.mubr.f32.mxu0 0.0
  %519 = vmatmul.mubr.f32.gmra.mxu0 %v25
  %v520 = vpop.f32.mrf.mxu0
  %v521 = vadd.f32 %v177, %v520
  %v522 = vpop.f32.mrf.mxu0
  %v523 = vadd.f32 %v181, %v522
  %524 = vmatprep.mubr.f32.mxu0 0.0
  %525 = vmatmul.mubr.f32.gmra.mxu0 %v26
  %v526 = vpop.f32.mrf.mxu0
  %v527 = vadd.f32 %v177, %v526
  %v528 = vpop.f32.mrf.mxu0
  %v529 = vadd.f32 %v181, %v528
  %530 = vmatprep.mubr.f32.mxu0 0.0
  %531 = vmatmul.mubr.f32.gmra.mxu0 %v27
  %v532 = vpop.f32.mrf.mxu0
  %v533 = vadd.f32 %v177, %v532
  %v534 = vpop.f32.mrf.mxu0
  %v535 = vadd.f32 %v181, %v534
  %536 = vdwg.mxu0
  %537 = vmatprep.subr.mxu0 %v155
  %538 = vmatpush1.msra.mxu0 %v154
  %539 = vmatprep.subr.mxu0 %v147
  %540 = vmatpush1.msra.mxu0 %v146
  %541 = vmatprep.subr.mxu0 %v139
  %542 = vmatpush1.msra.mxu0 %v138
  %543 = vmatprep.subr.mxu0 %v131
  %544 = vmatpush1.msra.mxu0 %v130
  %545 = vmatprep.subr.mxu0 %v123
  %546 = vmatpush1.msra.mxu0 %v122
  %547 = vmatprep.subr.mxu0 %v115
  %548 = vmatpush1.msra.mxu0 %v114
  %549 = vmatprep.subr.mxu0 %v107
  %550 = vmatpush1.msra.mxu0 %v106
  %551 = vmatprep.subr.mxu0 %v99
  %552 = vmatpush1.msra.mxu0 %v98
  %553 = vmatprep.subr.mxu0 %v91
  %554 = vmatpush1.msra.mxu0 %v90
  %555 = vmatprep.subr.mxu0 %v83
  %556 = vmatpush1.msra.mxu0 %v82
  %557 = vmatprep.subr.mxu0 %v75
  %558 = vmatpush1.msra.mxu0 %v74
  %559 = vmatprep.subr.mxu0 %v67
  %560 = vmatpush1.msra.mxu0 %v66
  %561 = vmatprep.subr.mxu0 %v59
  %562 = vmatpush1.msra.mxu0 %v58
  %563 = vmatprep.subr.mxu0 %v51
  %564 = vmatpush1.msra.mxu0 %v50
  %565 = vmatprep.subr.mxu0 %v43
  %566 = vmatpush1.msra.mxu0 %v42
  %567 = vmatprep.subr.mxu0 %v35
  %568 = vmatpush1.msra.mxu0 %v34
  %569 = vmatprep.subr.mxu0 0.0
  %570 = vmatpush2.msra.mxu0 0.0
  %571 = vmatprep.subr.mxu0 0.0
  %572 = vmatpush2.msra.mxu0 0.0
  %573 = vmatprep.subr.mxu0 0.0
  %574 = vmatpush2.msra.mxu0 0.0
  %575 = vmatprep.subr.mxu0 0.0
  %576 = vmatpush2.msra.mxu0 0.0
  %577 = vmatprep.subr.mxu0 0.0
  %578 = vmatpush2.msra.mxu0 0.0
  %579 = vmatprep.subr.mxu0 0.0
  %580 = vmatpush2.msra.mxu0 0.0
  %581 = vmatprep.subr.mxu0 0.0
  %582 = vmatpush2.msra.mxu0 0.0
  %583 = vmatprep.subr.mxu0 0.0
  %584 = vmatpush2.msra.mxu0 0.0
  %585 = vmatprep.subr.mxu0 0.0
  %586 = vmatpush2.msra.mxu0 0.0
  %587 = vmatprep.subr.mxu0 0.0
  %588 = vmatpush2.msra.mxu0 0.0
  %589 = vmatprep.subr.mxu0 0.0
  %590 = vmatpush2.msra.mxu0 0.0
  %591 = vmatprep.subr.mxu0 0.0
  %592 = vmatpush2.msra.mxu0 0.0
  %593 = vmatprep.subr.mxu0 0.0
  %594 = vmatpush2.msra.mxu0 0.0
  %595 = vmatprep.subr.mxu0 0.0
  %596 = vmatpush2.msra.mxu0 0.0
  %597 = vmatprep.subr.mxu0 0.0
  %598 = vmatpush2.msra.mxu0 0.0
  %599 = vmatprep.subr.mxu0 0.0
  %600 = vmatpush2.msra.mxu0 0.0
  %601 = vmatprep.mubr.f32.mxu0 0.0
  %602 = vmatmul.mubr.f32.gmra.mxu0 %v20
  %v603 = vpop.f32.mrf.mxu0
  %v604 = vadd.f32 %v185, %v603
  %v605 = vpop.f32.mrf.mxu0
  %v606 = vadd.f32 %v189, %v605
  %607 = vmatprep.mubr.f32.mxu0 0.0
  %608 = vmatmul.mubr.f32.gmra.mxu0 %v21
  %v609 = vpop.f32.mrf.mxu0
  %v610 = vadd.f32 %v185, %v609
  %v611 = vpop.f32.mrf.mxu0
  %v612 = vadd.f32 %v189, %v611
  %613 = vmatprep.mubr.f32.mxu0 0.0
  %614 = vmatmul.mubr.f32.gmra.mxu0 %v22
  %v615 = vpop.f32.mrf.mxu0
  %v616 = vadd.f32 %v185, %v615
  %v617 = vpop.f32.mrf.mxu0
  %v618 = vadd.f32 %v189, %v617
  %619 = vmatprep.mubr.f32.mxu0 0.0
  %620 = vmatmul.mubr.f32.gmra.mxu0 %v23
  %v621 = vpop.f32.mrf.mxu0
  %v622 = vadd.f32 %v185, %v621
  %v623 = vpop.f32.mrf.mxu0
  %v624 = vadd.f32 %v189, %v623
  %625 = vmatprep.mubr.f32.mxu0 0.0
  %626 = vmatmul.mubr.f32.gmra.mxu0 %v24
  %v627 = vpop.f32.mrf.mxu0
  %v628 = vadd.f32 %v185, %v627
  %v629 = vpop.f32.mrf.mxu0
  %v630 = vadd.f32 %v189, %v629
  %631 = vmatprep.mubr.f32.mxu0 0.0
  %632 = vmatmul.mubr.f32.gmra.mxu0 %v25
  %v633 = vpop.f32.mrf.mxu0
  %v634 = vadd.f32 %v185, %v633
  %v635 = vpop.f32.mrf.mxu0
  %v636 = vadd.f32 %v189, %v635
  %637 = vmatprep.mubr.f32.mxu0 0.0
  %638 = vmatmul.mubr.f32.gmra.mxu0 %v26
  %v639 = vpop.f32.mrf.mxu0
  %v640 = vadd.f32 %v185, %v639
  %v641 = vpop.f32.mrf.mxu0
  %v642 = vadd.f32 %v189, %v641
  %643 = vmatprep.mubr.f32.mxu0 0.0
  %644 = vmatmul.mubr.f32.gmra.mxu0 %v27
  %v645 = vpop.f32.mrf.mxu0
  %v646 = vadd.f32 %v185, %v645
  %v647 = vpop.f32.mrf.mxu0
  %v648 = vadd.f32 %v189, %v647
  %649 = vdwg.mxu0
  %v650 = vmul.f32 %v265, 0.5
  %v651 = vmul.f32 %v267, 0.5
  %v652 = vmul.f32 %v378, 0.5
  %v653 = vmul.f32 %v380, 0.5
  %v654 = vmul.f32 %v491, 0.5
  %v655 = vmul.f32 %v493, 0.5
  %v656 = vmul.f32 %v604, 0.5
  %v657 = vmul.f32 %v606, 0.5
  %v658 = vmul.f32 %v271, 0.5
  %v659 = vmul.f32 %v273, 0.5
  %v660 = vmul.f32 %v384, 0.5
  %v661 = vmul.f32 %v386, 0.5
  %v662 = vmul.f32 %v497, 0.5
  %v663 = vmul.f32 %v499, 0.5
  %v664 = vmul.f32 %v610, 0.5
  %v665 = vmul.f32 %v612, 0.5
  %v666 = vmul.f32 %v277, 0.5
  %v667 = vmul.f32 %v279, 0.5
  %v668 = vmul.f32 %v390, 0.5
  %v669 = vmul.f32 %v392, 0.5
  %v670 = vmul.f32 %v503, 0.5
  %v671 = vmul.f32 %v505, 0.5
  %v672 = vmul.f32 %v616, 0.5
  %v673 = vmul.f32 %v618, 0.5
  %v674 = vmul.f32 %v283, 0.5
  %v675 = vmul.f32 %v285, 0.5
  %v676 = vmul.f32 %v396, 0.5
  %v677 = vmul.f32 %v398, 0.5
  %v678 = vmul.f32 %v509, 0.5
  %v679 = vmul.f32 %v511, 0.5
  %v680 = vmul.f32 %v622, 0.5
  %v681 = vmul.f32 %v624, 0.5
  %v682 = vmul.f32 %v289, 0.5
  %v683 = vmul.f32 %v291, 0.5
  %v684 = vmul.f32 %v402, 0.5
  %v685 = vmul.f32 %v404, 0.5
  %v686 = vmul.f32 %v515, 0.5
  %v687 = vmul.f32 %v517, 0.5
  %v688 = vmul.f32 %v628, 0.5
  %v689 = vmul.f32 %v630, 0.5
  %v690 = vmul.f32 %v295, 0.5
  %v691 = vmul.f32 %v297, 0.5
  %v692 = vmul.f32 %v408, 0.5
  %v693 = vmul.f32 %v410, 0.5
  %v694 = vmul.f32 %v521, 0.5
  %v695 = vmul.f32 %v523, 0.5
  %v696 = vmul.f32 %v634, 0.5
  %v697 = vmul.f32 %v636, 0.5
  %v698 = vmul.f32 %v301, 0.5
  %v699 = vmul.f32 %v303, 0.5
  %v700 = vmul.f32 %v414, 0.5
  %v701 = vmul.f32 %v416, 0.5
  %v702 = vmul.f32 %v527, 0.5
  %v703 = vmul.f32 %v529, 0.5
  %v704 = vmul.f32 %v640, 0.5
  %v705 = vmul.f32 %v642, 0.5
  %v706 = vmul.f32 %v307, 0.5
  %v707 = vmul.f32 %v309, 0.5
  %v708 = vmul.f32 %v420, 0.5
  %v709 = vmul.f32 %v422, 0.5
  %v710 = vmul.f32 %v533, 0.5
  %v711 = vmul.f32 %v535, 0.5
  %v712 = vmul.f32 %v646, 0.5
  %v713 = vmul.f32 %v648, 0.5
  %v714 = vmul.f32 %v265, 0.70710677
  %v715 = vmul.f32 %v267, 0.70710677
  %v716 = vmul.f32 %v378, 0.70710677
  %v717 = vmul.f32 %v380, 0.70710677
  %v718 = vmul.f32 %v491, 0.70710677
  %v719 = vmul.f32 %v493, 0.70710677
  %v720 = vmul.f32 %v604, 0.70710677
  %v721 = vmul.f32 %v606, 0.70710677
  %v722 = vmul.f32 %v271, 0.70710677
  %v723 = vmul.f32 %v273, 0.70710677
  %v724 = vmul.f32 %v384, 0.70710677
  %v725 = vmul.f32 %v386, 0.70710677
  %v726 = vmul.f32 %v497, 0.70710677
  %v727 = vmul.f32 %v499, 0.70710677
  %v728 = vmul.f32 %v610, 0.70710677
  %v729 = vmul.f32 %v612, 0.70710677
  %v730 = vmul.f32 %v277, 0.70710677
  %v731 = vmul.f32 %v279, 0.70710677
  %v732 = vmul.f32 %v390, 0.70710677
  %v733 = vmul.f32 %v392, 0.70710677
  %v734 = vmul.f32 %v503, 0.70710677
  %v735 = vmul.f32 %v505, 0.70710677
  %v736 = vmul.f32 %v616, 0.70710677
  %v737 = vmul.f32 %v618, 0.70710677
  %v738 = vmul.f32 %v283, 0.70710677
  %v739 = vmul.f32 %v285, 0.70710677
  %v740 = vmul.f32 %v396, 0.70710677
  %v741 = vmul.f32 %v398, 0.70710677
  %v742 = vmul.f32 %v509, 0.70710677
  %v743 = vmul.f32 %v511, 0.70710677
  %v744 = vmul.f32 %v622, 0.70710677
  %v745 = vmul.f32 %v624, 0.70710677
  %v746 = vmul.f32 %v289, 0.70710677
  %v747 = vmul.f32 %v291, 0.70710677
  %v748 = vmul.f32 %v402, 0.70710677
  %v749 = vmul.f32 %v404, 0.70710677
  %v750 = vmul.f32 %v515, 0.70710677
  %v751 = vmul.f32 %v517, 0.70710677
  %v752 = vmul.f32 %v628, 0.70710677
  %v753 = vmul.f32 %v630, 0.70710677
  %v754 = vmul.f32 %v295, 0.70710677
  %v755 = vmul.f32 %v297, 0.70710677
  %v756 = vmul.f32 %v408, 0.70710677
  %v757 = vmul.f32 %v410, 0.70710677
  %v758 = vmul.f32 %v521, 0.70710677
  %v759 = vmul.f32 %v523, 0.70710677
  %v760 = vmul.f32 %v634, 0.70710677
  %v761 = vmul.f32 %v636, 0.70710677
  %v762 = vmul.f32 %v301, 0.70710677
  %v763 = vmul.f32 %v303, 0.70710677
  %v764 = vmul.f32 %v414, 0.70710677
  %v765 = vmul.f32 %v416, 0.70710677
  %v766 = vmul.f32 %v527, 0.70710677
  %v767 = vmul.f32 %v529, 0.70710677
  %v768 = vmul.f32 %v640, 0.70710677
  %v769 = vmul.f32 %v642, 0.70710677
  %v770 = vmul.f32 %v307, 0.70710677
  %v771 = vmul.f32 %v309, 0.70710677
  %v772 = vmul.f32 %v420, 0.70710677
  %v773 = vmul.f32 %v422, 0.70710677
  %v774 = vmul.f32 %v533, 0.70710677
  %v775 = vmul.f32 %v535, 0.70710677
  %v776 = vmul.f32 %v646, 0.70710677
  %v777 = vmul.f32 %v648, 0.70710677
  %vm778 = vcmp.ge.f32.partialorder %v714, 0.0
  %vm779 = vcmp.ge.f32.partialorder %v715, 0.0
  %vm780 = vcmp.ge.f32.partialorder %v716, 0.0
  %vm781 = vcmp.ge.f32.partialorder %v717, 0.0
  %vm782 = vcmp.ge.f32.partialorder %v718, 0.0
  %vm783 = vcmp.ge.f32.partialorder %v719, 0.0
  %vm784 = vcmp.ge.f32.partialorder %v720, 0.0
  %vm785 = vcmp.ge.f32.partialorder %v721, 0.0
  %vm786 = vcmp.ge.f32.partialorder %v722, 0.0
  %vm787 = vcmp.ge.f32.partialorder %v723, 0.0
  %vm788 = vcmp.ge.f32.partialorder %v724, 0.0
  %vm789 = vcmp.ge.f32.partialorder %v725, 0.0
  %vm790 = vcmp.ge.f32.partialorder %v726, 0.0
  %vm791 = vcmp.ge.f32.partialorder %v727, 0.0
  %vm792 = vcmp.ge.f32.partialorder %v728, 0.0
  %vm793 = vcmp.ge.f32.partialorder %v729, 0.0
  %vm794 = vcmp.ge.f32.partialorder %v730, 0.0
  %vm795 = vcmp.ge.f32.partialorder %v731, 0.0
  %vm796 = vcmp.ge.f32.partialorder %v732, 0.0
  %vm797 = vcmp.ge.f32.partialorder %v733, 0.0
  %vm798 = vcmp.ge.f32.partialorder %v734, 0.0
  %vm799 = vcmp.ge.f32.partialorder %v735, 0.0
  %vm800 = vcmp.ge.f32.partialorder %v736, 0.0
  %vm801 = vcmp.ge.f32.partialorder %v737, 0.0
  %vm802 = vcmp.ge.f32.partialorder %v738, 0.0
  %vm803 = vcmp.ge.f32.partialorder %v739, 0.0
  %vm804 = vcmp.ge.f32.partialorder %v740, 0.0
  %vm805 = vcmp.ge.f32.partialorder %v741, 0.0
  %vm806 = vcmp.ge.f32.partialorder %v742, 0.0
  %vm807 = vcmp.ge.f32.partialorder %v743, 0.0
  %vm808 = vcmp.ge.f32.partialorder %v744, 0.0
  %vm809 = vcmp.ge.f32.partialorder %v745, 0.0
  %vm810 = vcmp.ge.f32.partialorder %v746, 0.0
  %vm811 = vcmp.ge.f32.partialorder %v747, 0.0
  %vm812 = vcmp.ge.f32.partialorder %v748, 0.0
  %vm813 = vcmp.ge.f32.partialorder %v749, 0.0
  %vm814 = vcmp.ge.f32.partialorder %v750, 0.0
  %vm815 = vcmp.ge.f32.partialorder %v751, 0.0
  %vm816 = vcmp.ge.f32.partialorder %v752, 0.0
  %vm817 = vcmp.ge.f32.partialorder %v753, 0.0
  %vm818 = vcmp.ge.f32.partialorder %v754, 0.0
  %vm819 = vcmp.ge.f32.partialorder %v755, 0.0
  %vm820 = vcmp.ge.f32.partialorder %v756, 0.0
  %vm821 = vcmp.ge.f32.partialorder %v757, 0.0
  %vm822 = vcmp.ge.f32.partialorder %v758, 0.0
  %vm823 = vcmp.ge.f32.partialorder %v759, 0.0
  %vm824 = vcmp.ge.f32.partialorder %v760, 0.0
  %vm825 = vcmp.ge.f32.partialorder %v761, 0.0
  %vm826 = vcmp.ge.f32.partialorder %v762, 0.0
  %vm827 = vcmp.ge.f32.partialorder %v763, 0.0
  %vm828 = vcmp.ge.f32.partialorder %v764, 0.0
  %vm829 = vcmp.ge.f32.partialorder %v765, 0.0
  %vm830 = vcmp.ge.f32.partialorder %v766, 0.0
  %vm831 = vcmp.ge.f32.partialorder %v767, 0.0
  %vm832 = vcmp.ge.f32.partialorder %v768, 0.0
  %vm833 = vcmp.ge.f32.partialorder %v769, 0.0
  %vm834 = vcmp.ge.f32.partialorder %v770, 0.0
  %vm835 = vcmp.ge.f32.partialorder %v771, 0.0
  %vm836 = vcmp.ge.f32.partialorder %v772, 0.0
  %vm837 = vcmp.ge.f32.partialorder %v773, 0.0
  %vm838 = vcmp.ge.f32.partialorder %v774, 0.0
  %vm839 = vcmp.ge.f32.partialorder %v775, 0.0
  %vm840 = vcmp.ge.f32.partialorder %v776, 0.0
  %vm841 = vcmp.ge.f32.partialorder %v777, 0.0
  %v842 = vsel %vm778, 1.0, -1.0
  %v843 = vsel %vm779, 1.0, -1.0
  %v844 = vsel %vm780, 1.0, -1.0
  %v845 = vsel %vm781, 1.0, -1.0
  %v846 = vsel %vm782, 1.0, -1.0
  %v847 = vsel %vm783, 1.0, -1.0
  %v848 = vsel %vm784, 1.0, -1.0
  %v849 = vsel %vm785, 1.0, -1.0
  %v850 = vsel %vm786, 1.0, -1.0
  %v851 = vsel %vm787, 1.0, -1.0
  %v852 = vsel %vm788, 1.0, -1.0
  %v853 = vsel %vm789, 1.0, -1.0
  %v854 = vsel %vm790, 1.0, -1.0
  %v855 = vsel %vm791, 1.0, -1.0
  %v856 = vsel %vm792, 1.0, -1.0
  %v857 = vsel %vm793, 1.0, -1.0
  %v858 = vsel %vm794, 1.0, -1.0
  %v859 = vsel %vm795, 1.0, -1.0
  %v860 = vsel %vm796, 1.0, -1.0
  %v861 = vsel %vm797, 1.0, -1.0
  %v862 = vsel %vm798, 1.0, -1.0
  %v863 = vsel %vm799, 1.0, -1.0
  %v864 = vsel %vm800, 1.0, -1.0
  %v865 = vsel %vm801, 1.0, -1.0
  %v866 = vsel %vm802, 1.0, -1.0
  %v867 = vsel %vm803, 1.0, -1.0
  %v868 = vsel %vm804, 1.0, -1.0
  %v869 = vsel %vm805, 1.0, -1.0
  %v870 = vsel %vm806, 1.0, -1.0
  %v871 = vsel %vm807, 1.0, -1.0
  %v872 = vsel %vm808, 1.0, -1.0
  %v873 = vsel %vm809, 1.0, -1.0
  %v874 = vsel %vm810, 1.0, -1.0
  %v875 = vsel %vm811, 1.0, -1.0
  %v876 = vsel %vm812, 1.0, -1.0
  %v877 = vsel %vm813, 1.0, -1.0
  %v878 = vsel %vm814, 1.0, -1.0
  %v879 = vsel %vm815, 1.0, -1.0
  %v880 = vsel %vm816, 1.0, -1.0
  %v881 = vsel %vm817, 1.0, -1.0
  %v882 = vsel %vm818, 1.0, -1.0
  %v883 = vsel %vm819, 1.0, -1.0
  %v884 = vsel %vm820, 1.0, -1.0
  %v885 = vsel %vm821, 1.0, -1.0
  %v886 = vsel %vm822, 1.0, -1.0
  %v887 = vsel %vm823, 1.0, -1.0
  %v888 = vsel %vm824, 1.0, -1.0
  %v889 = vsel %vm825, 1.0, -1.0
  %v890 = vsel %vm826, 1.0, -1.0
  %v891 = vsel %vm827, 1.0, -1.0
  %v892 = vsel %vm828, 1.0, -1.0
  %v893 = vsel %vm829, 1.0, -1.0
  %v894 = vsel %vm830, 1.0, -1.0
  %v895 = vsel %vm831, 1.0, -1.0
  %v896 = vsel %vm832, 1.0, -1.0
  %v897 = vsel %vm833, 1.0, -1.0
  %v898 = vsel %vm834, 1.0, -1.0
  %v899 = vsel %vm835, 1.0, -1.0
  %v900 = vsel %vm836, 1.0, -1.0
  %v901 = vsel %vm837, 1.0, -1.0
  %v902 = vsel %vm838, 1.0, -1.0
  %v903 = vsel %vm839, 1.0, -1.0
  %v904 = vsel %vm840, 1.0, -1.0
  %v905 = vsel %vm841, 1.0, -1.0
  %v906 = vand.u32 2147483647, %v714
  %v907 = vand.u32 2147483647, %v715
  %v908 = vand.u32 2147483647, %v716
  %v909 = vand.u32 2147483647, %v717
  %v910 = vand.u32 2147483647, %v718
  %v911 = vand.u32 2147483647, %v719
  %v912 = vand.u32 2147483647, %v720
  %v913 = vand.u32 2147483647, %v721
  %v914 = vand.u32 2147483647, %v722
  %v915 = vand.u32 2147483647, %v723
  %v916 = vand.u32 2147483647, %v724
  %v917 = vand.u32 2147483647, %v725
  %v918 = vand.u32 2147483647, %v726
  %v919 = vand.u32 2147483647, %v727
  %v920 = vand.u32 2147483647, %v728
  %v921 = vand.u32 2147483647, %v729
  %v922 = vand.u32 2147483647, %v730
  %v923 = vand.u32 2147483647, %v731
  %v924 = vand.u32 2147483647, %v732
  %v925 = vand.u32 2147483647, %v733
  %v926 = vand.u32 2147483647, %v734
  %v927 = vand.u32 2147483647, %v735
  %v928 = vand.u32 2147483647, %v736
  %v929 = vand.u32 2147483647, %v737
  %v930 = vand.u32 2147483647, %v738
  %v931 = vand.u32 2147483647, %v739
  %v932 = vand.u32 2147483647, %v740
  %v933 = vand.u32 2147483647, %v741
  %v934 = vand.u32 2147483647, %v742
  %v935 = vand.u32 2147483647, %v743
  %v936 = vand.u32 2147483647, %v744
  %v937 = vand.u32 2147483647, %v745
  %v938 = vand.u32 2147483647, %v746
  %v939 = vand.u32 2147483647, %v747
  %v940 = vand.u32 2147483647, %v748
  %v941 = vand.u32 2147483647, %v749
  %v942 = vand.u32 2147483647, %v750
  %v943 = vand.u32 2147483647, %v751
  %v944 = vand.u32 2147483647, %v752
  %v945 = vand.u32 2147483647, %v753
  %v946 = vand.u32 2147483647, %v754
  %v947 = vand.u32 2147483647, %v755
  %v948 = vand.u32 2147483647, %v756
  %v949 = vand.u32 2147483647, %v757
  %v950 = vand.u32 2147483647, %v758
  %v951 = vand.u32 2147483647, %v759
  %v952 = vand.u32 2147483647, %v760
  %v953 = vand.u32 2147483647, %v761
  %v954 = vand.u32 2147483647, %v762
  %v955 = vand.u32 2147483647, %v763
  %v956 = vand.u32 2147483647, %v764
  %v957 = vand.u32 2147483647, %v765
  %v958 = vand.u32 2147483647, %v766
  %v959 = vand.u32 2147483647, %v767
  %v960 = vand.u32 2147483647, %v768
  %v961 = vand.u32 2147483647, %v769
  %v962 = vand.u32 2147483647, %v770
  %v963 = vand.u32 2147483647, %v771
  %v964 = vand.u32 2147483647, %v772
  %v965 = vand.u32 2147483647, %v773
  %v966 = vand.u32 2147483647, %v774
  %v967 = vand.u32 2147483647, %v775
  %v968 = vand.u32 2147483647, %v776
  %v969 = vand.u32 2147483647, %v777
  %v970 = vmul.f32 %v906, 0.3275911
  %v971 = vmul.f32 %v907, 0.3275911
  %v972 = vmul.f32 %v908, 0.3275911
  %v973 = vmul.f32 %v909, 0.3275911
  %v974 = vmul.f32 %v910, 0.3275911
  %v975 = vmul.f32 %v911, 0.3275911
  %v976 = vmul.f32 %v912, 0.3275911
  %v977 = vmul.f32 %v913, 0.3275911
  %v978 = vmul.f32 %v914, 0.3275911
  %v979 = vmul.f32 %v915, 0.3275911
  %v980 = vmul.f32 %v916, 0.3275911
  %v981 = vmul.f32 %v917, 0.3275911
  %v982 = vmul.f32 %v918, 0.3275911
  %v983 = vmul.f32 %v919, 0.3275911
  %v984 = vmul.f32 %v920, 0.3275911
  %v985 = vmul.f32 %v921, 0.3275911
  %v986 = vmul.f32 %v922, 0.3275911
  %v987 = vmul.f32 %v923, 0.3275911
  %v988 = vmul.f32 %v924, 0.3275911
  %v989 = vmul.f32 %v925, 0.3275911
  %v990 = vmul.f32 %v926, 0.3275911
  %v991 = vmul.f32 %v927, 0.3275911
  %v992 = vmul.f32 %v928, 0.3275911
  %v993 = vmul.f32 %v929, 0.3275911
  %v994 = vmul.f32 %v930, 0.3275911
  %v995 = vmul.f32 %v931, 0.3275911
  %v996 = vmul.f32 %v932, 0.3275911
  %v997 = vmul.f32 %v933, 0.3275911
  %v998 = vmul.f32 %v934, 0.3275911
  %v999 = vmul.f32 %v935, 0.3275911
  %v1000 = vmul.f32 %v936, 0.3275911
  %v1001 = vmul.f32 %v937, 0.3275911
  %v1002 = vmul.f32 %v938, 0.3275911
  %v1003 = vmul.f32 %v939, 0.3275911
  %v1004 = vmul.f32 %v940, 0.3275911
  %v1005 = vmul.f32 %v941, 0.3275911
  %v1006 = vmul.f32 %v942, 0.3275911
  %v1007 = vmul.f32 %v943, 0.3275911
  %v1008 = vmul.f32 %v944, 0.3275911
  %v1009 = vmul.f32 %v945, 0.3275911
  %v1010 = vmul.f32 %v946, 0.3275911
  %v1011 = vmul.f32 %v947, 0.3275911
  %v1012 = vmul.f32 %v948, 0.3275911
  %v1013 = vmul.f32 %v949, 0.3275911
  %v1014 = vmul.f32 %v950, 0.3275911
  %v1015 = vmul.f32 %v951, 0.3275911
  %v1016 = vmul.f32 %v952, 0.3275911
  %v1017 = vmul.f32 %v953, 0.3275911
  %v1018 = vmul.f32 %v954, 0.3275911
  %v1019 = vmul.f32 %v955, 0.3275911
  %v1020 = vmul.f32 %v956, 0.3275911
  %v1021 = vmul.f32 %v957, 0.3275911
  %v1022 = vmul.f32 %v958, 0.3275911
  %v1023 = vmul.f32 %v959, 0.3275911
  %v1024 = vmul.f32 %v960, 0.3275911
  %v1025 = vmul.f32 %v961, 0.3275911
  %v1026 = vmul.f32 %v962, 0.3275911
  %v1027 = vmul.f32 %v963, 0.3275911
  %v1028 = vmul.f32 %v964, 0.3275911
  %v1029 = vmul.f32 %v965, 0.3275911
  %v1030 = vmul.f32 %v966, 0.3275911
  %v1031 = vmul.f32 %v967, 0.3275911
  %v1032 = vmul.f32 %v968, 0.3275911
  %v1033 = vmul.f32 %v969, 0.3275911
  %v1034 = vadd.f32 %v970, 1.0
  %v1035 = vadd.f32 %v971, 1.0
  %v1036 = vadd.f32 %v972, 1.0
  %v1037 = vadd.f32 %v973, 1.0
  %v1038 = vadd.f32 %v974, 1.0
  %v1039 = vadd.f32 %v975, 1.0
  %v1040 = vadd.f32 %v976, 1.0
  %v1041 = vadd.f32 %v977, 1.0
  %v1042 = vadd.f32 %v978, 1.0
  %v1043 = vadd.f32 %v979, 1.0
  %v1044 = vadd.f32 %v980, 1.0
  %v1045 = vadd.f32 %v981, 1.0
  %v1046 = vadd.f32 %v982, 1.0
  %v1047 = vadd.f32 %v983, 1.0
  %v1048 = vadd.f32 %v984, 1.0
  %v1049 = vadd.f32 %v985, 1.0
  %v1050 = vadd.f32 %v986, 1.0
  %v1051 = vadd.f32 %v987, 1.0
  %v1052 = vadd.f32 %v988, 1.0
  %v1053 = vadd.f32 %v989, 1.0
  %v1054 = vadd.f32 %v990, 1.0
  %v1055 = vadd.f32 %v991, 1.0
  %v1056 = vadd.f32 %v992, 1.0
  %v1057 = vadd.f32 %v993, 1.0
  %v1058 = vadd.f32 %v994, 1.0
  %v1059 = vadd.f32 %v995, 1.0
  %v1060 = vadd.f32 %v996, 1.0
  %v1061 = vadd.f32 %v997, 1.0
  %v1062 = vadd.f32 %v998, 1.0
  %v1063 = vadd.f32 %v999, 1.0
  %v1064 = vadd.f32 %v1000, 1.0
  %v1065 = vadd.f32 %v1001, 1.0
  %v1066 = vadd.f32 %v1002, 1.0
  %v1067 = vadd.f32 %v1003, 1.0
  %v1068 = vadd.f32 %v1004, 1.0
  %v1069 = vadd.f32 %v1005, 1.0
  %v1070 = vadd.f32 %v1006, 1.0
  %v1071 = vadd.f32 %v1007, 1.0
  %v1072 = vadd.f32 %v1008, 1.0
  %v1073 = vadd.f32 %v1009, 1.0
  %v1074 = vadd.f32 %v1010, 1.0
  %v1075 = vadd.f32 %v1011, 1.0
  %v1076 = vadd.f32 %v1012, 1.0
  %v1077 = vadd.f32 %v1013, 1.0
  %v1078 = vadd.f32 %v1014, 1.0
  %v1079 = vadd.f32 %v1015, 1.0
  %v1080 = vadd.f32 %v1016, 1.0
  %v1081 = vadd.f32 %v1017, 1.0
  %v1082 = vadd.f32 %v1018, 1.0
  %v1083 = vadd.f32 %v1019, 1.0
  %v1084 = vadd.f32 %v1020, 1.0
  %v1085 = vadd.f32 %v1021, 1.0
  %v1086 = vadd.f32 %v1022, 1.0
  %v1087 = vadd.f32 %v1023, 1.0
  %v1088 = vadd.f32 %v1024, 1.0
  %v1089 = vadd.f32 %v1025, 1.0
  %v1090 = vadd.f32 %v1026, 1.0
  %v1091 = vadd.f32 %v1027, 1.0
  %v1092 = vadd.f32 %v1028, 1.0
  %v1093 = vadd.f32 %v1029, 1.0
  %v1094 = vadd.f32 %v1030, 1.0
  %v1095 = vadd.f32 %v1031, 1.0
  %v1096 = vadd.f32 %v1032, 1.0
  %v1097 = vadd.f32 %v1033, 1.0
  %v1098 = vrcp.pop %v1034
  %v1099 = vmul.f32 1.0, %v1098
  %v1100 = vrcp.pop %v1035
  %v1101 = vmul.f32 1.0, %v1100
  %v1102 = vrcp.pop %v1036
  %v1103 = vmul.f32 1.0, %v1102
  %v1104 = vrcp.pop %v1037
  %v1105 = vmul.f32 1.0, %v1104
  %v1106 = vrcp.pop %v1038
  %v1107 = vmul.f32 1.0, %v1106
  %v1108 = vrcp.pop %v1039
  %v1109 = vmul.f32 1.0, %v1108
  %v1110 = vrcp.pop %v1040
  %v1111 = vmul.f32 1.0, %v1110
  %v1112 = vrcp.pop %v1041
  %v1113 = vmul.f32 1.0, %v1112
  %v1114 = vrcp.pop %v1042
  %v1115 = vmul.f32 1.0, %v1114
  %v1116 = vrcp.pop %v1043
  %v1117 = vmul.f32 1.0, %v1116
  %v1118 = vrcp.pop %v1044
  %v1119 = vmul.f32 1.0, %v1118
  %v1120 = vrcp.pop %v1045
  %v1121 = vmul.f32 1.0, %v1120
  %v1122 = vrcp.pop %v1046
  %v1123 = vmul.f32 1.0, %v1122
  %v1124 = vrcp.pop %v1047
  %v1125 = vmul.f32 1.0, %v1124
  %v1126 = vrcp.pop %v1048
  %v1127 = vmul.f32 1.0, %v1126
  %v1128 = vrcp.pop %v1049
  %v1129 = vmul.f32 1.0, %v1128
  %v1130 = vrcp.pop %v1050
  %v1131 = vmul.f32 1.0, %v1130
  %v1132 = vrcp.pop %v1051
  %v1133 = vmul.f32 1.0, %v1132
  %v1134 = vrcp.pop %v1052
  %v1135 = vmul.f32 1.0, %v1134
  %v1136 = vrcp.pop %v1053
  %v1137 = vmul.f32 1.0, %v1136
  %v1138 = vrcp.pop %v1054
  %v1139 = vmul.f32 1.0, %v1138
  %v1140 = vrcp.pop %v1055
  %v1141 = vmul.f32 1.0, %v1140
  %v1142 = vrcp.pop %v1056
  %v1143 = vmul.f32 1.0, %v1142
  %v1144 = vrcp.pop %v1057
  %v1145 = vmul.f32 1.0, %v1144
  %v1146 = vrcp.pop %v1058
  %v1147 = vmul.f32 1.0, %v1146
  %v1148 = vrcp.pop %v1059
  %v1149 = vmul.f32 1.0, %v1148
  %v1150 = vrcp.pop %v1060
  %v1151 = vmul.f32 1.0, %v1150
  %v1152 = vrcp.pop %v1061
  %v1153 = vmul.f32 1.0, %v1152
  %v1154 = vrcp.pop %v1062
  %v1155 = vmul.f32 1.0, %v1154
  %v1156 = vrcp.pop %v1063
  %v1157 = vmul.f32 1.0, %v1156
  %v1158 = vrcp.pop %v1064
  %v1159 = vmul.f32 1.0, %v1158
  %v1160 = vrcp.pop %v1065
  %v1161 = vmul.f32 1.0, %v1160
  %v1162 = vrcp.pop %v1066
  %v1163 = vmul.f32 1.0, %v1162
  %v1164 = vrcp.pop %v1067
  %v1165 = vmul.f32 1.0, %v1164
  %v1166 = vrcp.pop %v1068
  %v1167 = vmul.f32 1.0, %v1166
  %v1168 = vrcp.pop %v1069
  %v1169 = vmul.f32 1.0, %v1168
  %v1170 = vrcp.pop %v1070
  %v1171 = vmul.f32 1.0, %v1170
  %v1172 = vrcp.pop %v1071
  %v1173 = vmul.f32 1.0, %v1172
  %v1174 = vrcp.pop %v1072
  %v1175 = vmul.f32 1.0, %v1174
  %v1176 = vrcp.pop %v1073
  %v1177 = vmul.f32 1.0, %v1176
  %v1178 = vrcp.pop %v1074
  %v1179 = vmul.f32 1.0, %v1178
  %v1180 = vrcp.pop %v1075
  %v1181 = vmul.f32 1.0, %v1180
  %v1182 = vrcp.pop %v1076
  %v1183 = vmul.f32 1.0, %v1182
  %v1184 = vrcp.pop %v1077
  %v1185 = vmul.f32 1.0, %v1184
  %v1186 = vrcp.pop %v1078
  %v1187 = vmul.f32 1.0, %v1186
  %v1188 = vrcp.pop %v1079
  %v1189 = vmul.f32 1.0, %v1188
  %v1190 = vrcp.pop %v1080
  %v1191 = vmul.f32 1.0, %v1190
  %v1192 = vrcp.pop %v1081
  %v1193 = vmul.f32 1.0, %v1192
  %v1194 = vrcp.pop %v1082
  %v1195 = vmul.f32 1.0, %v1194
  %v1196 = vrcp.pop %v1083
  %v1197 = vmul.f32 1.0, %v1196
  %v1198 = vrcp.pop %v1084
  %v1199 = vmul.f32 1.0, %v1198
  %v1200 = vrcp.pop %v1085
  %v1201 = vmul.f32 1.0, %v1200
  %v1202 = vrcp.pop %v1086
  %v1203 = vmul.f32 1.0, %v1202
  %v1204 = vrcp.pop %v1087
  %v1205 = vmul.f32 1.0, %v1204
  %v1206 = vrcp.pop %v1088
  %v1207 = vmul.f32 1.0, %v1206
  %v1208 = vrcp.pop %v1089
  %v1209 = vmul.f32 1.0, %v1208
  %v1210 = vrcp.pop %v1090
  %v1211 = vmul.f32 1.0, %v1210
  %v1212 = vrcp.pop %v1091
  %v1213 = vmul.f32 1.0, %v1212
  %v1214 = vrcp.pop %v1092
  %v1215 = vmul.f32 1.0, %v1214
  %v1216 = vrcp.pop %v1093
  %v1217 = vmul.f32 1.0, %v1216
  %v1218 = vrcp.pop %v1094
  %v1219 = vmul.f32 1.0, %v1218
  %v1220 = vrcp.pop %v1095
  %v1221 = vmul.f32 1.0, %v1220
  %v1222 = vrcp.pop %v1096
  %v1223 = vmul.f32 1.0, %v1222
  %v1224 = vrcp.pop %v1097
  %v1225 = vmul.f32 1.0, %v1224
  %v1226 = vmul.f32 %v1099, 1.0614054
  %v1227 = vmul.f32 %v1101, 1.0614054
  %v1228 = vmul.f32 %v1103, 1.0614054
  %v1229 = vmul.f32 %v1105, 1.0614054
  %v1230 = vmul.f32 %v1107, 1.0614054
  %v1231 = vmul.f32 %v1109, 1.0614054
  %v1232 = vmul.f32 %v1111, 1.0614054
  %v1233 = vmul.f32 %v1113, 1.0614054
  %v1234 = vmul.f32 %v1115, 1.0614054
  %v1235 = vmul.f32 %v1117, 1.0614054
  %v1236 = vmul.f32 %v1119, 1.0614054
  %v1237 = vmul.f32 %v1121, 1.0614054
  %v1238 = vmul.f32 %v1123, 1.0614054
  %v1239 = vmul.f32 %v1125, 1.0614054
  %v1240 = vmul.f32 %v1127, 1.0614054
  %v1241 = vmul.f32 %v1129, 1.0614054
  %v1242 = vmul.f32 %v1131, 1.0614054
  %v1243 = vmul.f32 %v1133, 1.0614054
  %v1244 = vmul.f32 %v1135, 1.0614054
  %v1245 = vmul.f32 %v1137, 1.0614054
  %v1246 = vmul.f32 %v1139, 1.0614054
  %v1247 = vmul.f32 %v1141, 1.0614054
  %v1248 = vmul.f32 %v1143, 1.0614054
  %v1249 = vmul.f32 %v1145, 1.0614054
  %v1250 = vmul.f32 %v1147, 1.0614054
  %v1251 = vmul.f32 %v1149, 1.0614054
  %v1252 = vmul.f32 %v1151, 1.0614054
  %v1253 = vmul.f32 %v1153, 1.0614054
  %v1254 = vmul.f32 %v1155, 1.0614054
  %v1255 = vmul.f32 %v1157, 1.0614054
  %v1256 = vmul.f32 %v1159, 1.0614054
  %v1257 = vmul.f32 %v1161, 1.0614054
  %v1258 = vmul.f32 %v1163, 1.0614054
  %v1259 = vmul.f32 %v1165, 1.0614054
  %v1260 = vmul.f32 %v1167, 1.0614054
  %v1261 = vmul.f32 %v1169, 1.0614054
  %v1262 = vmul.f32 %v1171, 1.0614054
  %v1263 = vmul.f32 %v1173, 1.0614054
  %v1264 = vmul.f32 %v1175, 1.0614054
  %v1265 = vmul.f32 %v1177, 1.0614054
  %v1266 = vmul.f32 %v1179, 1.0614054
  %v1267 = vmul.f32 %v1181, 1.0614054
  %v1268 = vmul.f32 %v1183, 1.0614054
  %v1269 = vmul.f32 %v1185, 1.0614054
  %v1270 = vmul.f32 %v1187, 1.0614054
  %v1271 = vmul.f32 %v1189, 1.0614054
  %v1272 = vmul.f32 %v1191, 1.0614054
  %v1273 = vmul.f32 %v1193, 1.0614054
  %v1274 = vmul.f32 %v1195, 1.0614054
  %v1275 = vmul.f32 %v1197, 1.0614054
  %v1276 = vmul.f32 %v1199, 1.0614054
  %v1277 = vmul.f32 %v1201, 1.0614054
  %v1278 = vmul.f32 %v1203, 1.0614054
  %v1279 = vmul.f32 %v1205, 1.0614054
  %v1280 = vmul.f32 %v1207, 1.0614054
  %v1281 = vmul.f32 %v1209, 1.0614054
  %v1282 = vmul.f32 %v1211, 1.0614054
  %v1283 = vmul.f32 %v1213, 1.0614054
  %v1284 = vmul.f32 %v1215, 1.0614054
  %v1285 = vmul.f32 %v1217, 1.0614054
  %v1286 = vmul.f32 %v1219, 1.0614054
  %v1287 = vmul.f32 %v1221, 1.0614054
  %v1288 = vmul.f32 %v1223, 1.0614054
  %v1289 = vmul.f32 %v1225, 1.0614054
  %v1290 = vadd.f32 %v1226, -1.4531521
  %v1291 = vadd.f32 %v1227, -1.4531521
  %v1292 = vadd.f32 %v1228, -1.4531521
  %v1293 = vadd.f32 %v1229, -1.4531521
  %v1294 = vadd.f32 %v1230, -1.4531521
  %v1295 = vadd.f32 %v1231, -1.4531521
  %v1296 = vadd.f32 %v1232, -1.4531521
  %v1297 = vadd.f32 %v1233, -1.4531521
  %v1298 = vadd.f32 %v1234, -1.4531521
  %v1299 = vadd.f32 %v1235, -1.4531521
  %v1300 = vadd.f32 %v1236, -1.4531521
  %v1301 = vadd.f32 %v1237, -1.4531521
  %v1302 = vadd.f32 %v1238, -1.4531521
  %v1303 = vadd.f32 %v1239, -1.4531521
  %v1304 = vadd.f32 %v1240, -1.4531521
  %v1305 = vadd.f32 %v1241, -1.4531521
  %v1306 = vadd.f32 %v1242, -1.4531521
  %v1307 = vadd.f32 %v1243, -1.4531521
  %v1308 = vadd.f32 %v1244, -1.4531521
  %v1309 = vadd.f32 %v1245, -1.4531521
  %v1310 = vadd.f32 %v1246, -1.4531521
  %v1311 = vadd.f32 %v1247, -1.4531521
  %v1312 = vadd.f32 %v1248, -1.4531521
  %v1313 = vadd.f32 %v1249, -1.4531521
  %v1314 = vadd.f32 %v1250, -1.4531521
  %v1315 = vadd.f32 %v1251, -1.4531521
  %v1316 = vadd.f32 %v1252, -1.4531521
  %v1317 = vadd.f32 %v1253, -1.4531521
  %v1318 = vadd.f32 %v1254, -1.4531521
  %v1319 = vadd.f32 %v1255, -1.4531521
  %v1320 = vadd.f32 %v1256, -1.4531521
  %v1321 = vadd.f32 %v1257, -1.4531521
  %v1322 = vadd.f32 %v1258, -1.4531521
  %v1323 = vadd.f32 %v1259, -1.4531521
  %v1324 = vadd.f32 %v1260, -1.4531521
  %v1325 = vadd.f32 %v1261, -1.4531521
  %v1326 = vadd.f32 %v1262, -1.4531521
  %v1327 = vadd.f32 %v1263, -1.4531521
  %v1328 = vadd.f32 %v1264, -1.4531521
  %v1329 = vadd.f32 %v1265, -1.4531521
  %v1330 = vadd.f32 %v1266, -1.4531521
  %v1331 = vadd.f32 %v1267, -1.4531521
  %v1332 = vadd.f32 %v1268, -1.4531521
  %v1333 = vadd.f32 %v1269, -1.4531521
  %v1334 = vadd.f32 %v1270, -1.4531521
  %v1335 = vadd.f32 %v1271, -1.4531521
  %v1336 = vadd.f32 %v1272, -1.4531521
  %v1337 = vadd.f32 %v1273, -1.4531521
  %v1338 = vadd.f32 %v1274, -1.4531521
  %v1339 = vadd.f32 %v1275, -1.4531521
  %v1340 = vadd.f32 %v1276, -1.4531521
  %v1341 = vadd.f32 %v1277, -1.4531521
  %v1342 = vadd.f32 %v1278, -1.4531521
  %v1343 = vadd.f32 %v1279, -1.4531521
  %v1344 = vadd.f32 %v1280, -1.4531521
  %v1345 = vadd.f32 %v1281, -1.4531521
  %v1346 = vadd.f32 %v1282, -1.4531521
  %v1347 = vadd.f32 %v1283, -1.4531521
  %v1348 = vadd.f32 %v1284, -1.4531521
  %v1349 = vadd.f32 %v1285, -1.4531521
  %v1350 = vadd.f32 %v1286, -1.4531521
  %v1351 = vadd.f32 %v1287, -1.4531521
  %v1352 = vadd.f32 %v1288, -1.4531521
  %v1353 = vadd.f32 %v1289, -1.4531521
  %v1354 = vmul.f32 %v1290, %v1099
  %v1355 = vmul.f32 %v1291, %v1101
  %v1356 = vmul.f32 %v1292, %v1103
  %v1357 = vmul.f32 %v1293, %v1105
  %v1358 = vmul.f32 %v1294, %v1107
  %v1359 = vmul.f32 %v1295, %v1109
  %v1360 = vmul.f32 %v1296, %v1111
  %v1361 = vmul.f32 %v1297, %v1113
  %v1362 = vmul.f32 %v1298, %v1115
  %v1363 = vmul.f32 %v1299, %v1117
  %v1364 = vmul.f32 %v1300, %v1119
  %v1365 = vmul.f32 %v1301, %v1121
  %v1366 = vmul.f32 %v1302, %v1123
  %v1367 = vmul.f32 %v1303, %v1125
  %v1368 = vmul.f32 %v1304, %v1127
  %v1369 = vmul.f32 %v1305, %v1129
  %v1370 = vmul.f32 %v1306, %v1131
  %v1371 = vmul.f32 %v1307, %v1133
  %v1372 = vmul.f32 %v1308, %v1135
  %v1373 = vmul.f32 %v1309, %v1137
  %v1374 = vmul.f32 %v1310, %v1139
  %v1375 = vmul.f32 %v1311, %v1141
  %v1376 = vmul.f32 %v1312, %v1143
  %v1377 = vmul.f32 %v1313, %v1145
  %v1378 = vmul.f32 %v1314, %v1147
  %v1379 = vmul.f32 %v1315, %v1149
  %v1380 = vmul.f32 %v1316, %v1151
  %v1381 = vmul.f32 %v1317, %v1153
  %v1382 = vmul.f32 %v1318, %v1155
  %v1383 = vmul.f32 %v1319, %v1157
  %v1384 = vmul.f32 %v1320, %v1159
  %v1385 = vmul.f32 %v1321, %v1161
  %v1386 = vmul.f32 %v1322, %v1163
  %v1387 = vmul.f32 %v1323, %v1165
  %v1388 = vmul.f32 %v1324, %v1167
  %v1389 = vmul.f32 %v1325, %v1169
  %v1390 = vmul.f32 %v1326, %v1171
  %v1391 = vmul.f32 %v1327, %v1173
  %v1392 = vmul.f32 %v1328, %v1175
  %v1393 = vmul.f32 %v1329, %v1177
  %v1394 = vmul.f32 %v1330, %v1179
  %v1395 = vmul.f32 %v1331, %v1181
  %v1396 = vmul.f32 %v1332, %v1183
  %v1397 = vmul.f32 %v1333, %v1185
  %v1398 = vmul.f32 %v1334, %v1187
  %v1399 = vmul.f32 %v1335, %v1189
  %v1400 = vmul.f32 %v1336, %v1191
  %v1401 = vmul.f32 %v1337, %v1193
  %v1402 = vmul.f32 %v1338, %v1195
  %v1403 = vmul.f32 %v1339, %v1197
  %v1404 = vmul.f32 %v1340, %v1199
  %v1405 = vmul.f32 %v1341, %v1201
  %v1406 = vmul.f32 %v1342, %v1203
  %v1407 = vmul.f32 %v1343, %v1205
  %v1408 = vmul.f32 %v1344, %v1207
  %v1409 = vmul.f32 %v1345, %v1209
  %v1410 = vmul.f32 %v1346, %v1211
  %v1411 = vmul.f32 %v1347, %v1213
  %v1412 = vmul.f32 %v1348, %v1215
  %v1413 = vmul.f32 %v1349, %v1217
  %v1414 = vmul.f32 %v1350, %v1219
  %v1415 = vmul.f32 %v1351, %v1221
  %v1416 = vmul.f32 %v1352, %v1223
  %v1417 = vmul.f32 %v1353, %v1225
  %v1418 = vadd.f32 %v1354, 1.4214138
  %v1419 = vadd.f32 %v1355, 1.4214138
  %v1420 = vadd.f32 %v1356, 1.4214138
  %v1421 = vadd.f32 %v1357, 1.4214138
  %v1422 = vadd.f32 %v1358, 1.4214138
  %v1423 = vadd.f32 %v1359, 1.4214138
  %v1424 = vadd.f32 %v1360, 1.4214138
  %v1425 = vadd.f32 %v1361, 1.4214138
  %v1426 = vadd.f32 %v1362, 1.4214138
  %v1427 = vadd.f32 %v1363, 1.4214138
  %v1428 = vadd.f32 %v1364, 1.4214138
  %v1429 = vadd.f32 %v1365, 1.4214138
  %v1430 = vadd.f32 %v1366, 1.4214138
  %v1431 = vadd.f32 %v1367, 1.4214138
  %v1432 = vadd.f32 %v1368, 1.4214138
  %v1433 = vadd.f32 %v1369, 1.4214138
  %v1434 = vadd.f32 %v1370, 1.4214138
  %v1435 = vadd.f32 %v1371, 1.4214138
  %v1436 = vadd.f32 %v1372, 1.4214138
  %v1437 = vadd.f32 %v1373, 1.4214138
  %v1438 = vadd.f32 %v1374, 1.4214138
  %v1439 = vadd.f32 %v1375, 1.4214138
  %v1440 = vadd.f32 %v1376, 1.4214138
  %v1441 = vadd.f32 %v1377, 1.4214138
  %v1442 = vadd.f32 %v1378, 1.4214138
  %v1443 = vadd.f32 %v1379, 1.4214138
  %v1444 = vadd.f32 %v1380, 1.4214138
  %v1445 = vadd.f32 %v1381, 1.4214138
  %v1446 = vadd.f32 %v1382, 1.4214138
  %v1447 = vadd.f32 %v1383, 1.4214138
  %v1448 = vadd.f32 %v1384, 1.4214138
  %v1449 = vadd.f32 %v1385, 1.4214138
  %v1450 = vadd.f32 %v1386, 1.4214138
  %v1451 = vadd.f32 %v1387, 1.4214138
  %v1452 = vadd.f32 %v1388, 1.4214138
  %v1453 = vadd.f32 %v1389, 1.4214138
  %v1454 = vadd.f32 %v1390, 1.4214138
  %v1455 = vadd.f32 %v1391, 1.4214138
  %v1456 = vadd.f32 %v1392, 1.4214138
  %v1457 = vadd.f32 %v1393, 1.4214138
  %v1458 = vadd.f32 %v1394, 1.4214138
  %v1459 = vadd.f32 %v1395, 1.4214138
  %v1460 = vadd.f32 %v1396, 1.4214138
  %v1461 = vadd.f32 %v1397, 1.4214138
  %v1462 = vadd.f32 %v1398, 1.4214138
  %v1463 = vadd.f32 %v1399, 1.4214138
  %v1464 = vadd.f32 %v1400, 1.4214138
  %v1465 = vadd.f32 %v1401, 1.4214138
  %v1466 = vadd.f32 %v1402, 1.4214138
  %v1467 = vadd.f32 %v1403, 1.4214138
  %v1468 = vadd.f32 %v1404, 1.4214138
  %v1469 = vadd.f32 %v1405, 1.4214138
  %v1470 = vadd.f32 %v1406, 1.4214138
  %v1471 = vadd.f32 %v1407, 1.4214138
  %v1472 = vadd.f32 %v1408, 1.4214138
  %v1473 = vadd.f32 %v1409, 1.4214138
  %v1474 = vadd.f32 %v1410, 1.4214138
  %v1475 = vadd.f32 %v1411, 1.4214138
  %v1476 = vadd.f32 %v1412, 1.4214138
  %v1477 = vadd.f32 %v1413, 1.4214138
  %v1478 = vadd.f32 %v1414, 1.4214138
  %v1479 = vadd.f32 %v1415, 1.4214138
  %v1480 = vadd.f32 %v1416, 1.4214138
  %v1481 = vadd.f32 %v1417, 1.4214138
  %v1482 = vmul.f32 %v1418, %v1099
  %v1483 = vmul.f32 %v1419, %v1101
  %v1484 = vmul.f32 %v1420, %v1103
  %v1485 = vmul.f32 %v1421, %v1105
  %v1486 = vmul.f32 %v1422, %v1107
  %v1487 = vmul.f32 %v1423, %v1109
  %v1488 = vmul.f32 %v1424, %v1111
  %v1489 = vmul.f32 %v1425, %v1113
  %v1490 = vmul.f32 %v1426, %v1115
  %v1491 = vmul.f32 %v1427, %v1117
  %v1492 = vmul.f32 %v1428, %v1119
  %v1493 = vmul.f32 %v1429, %v1121
  %v1494 = vmul.f32 %v1430, %v1123
  %v1495 = vmul.f32 %v1431, %v1125
  %v1496 = vmul.f32 %v1432, %v1127
  %v1497 = vmul.f32 %v1433, %v1129
  %v1498 = vmul.f32 %v1434, %v1131
  %v1499 = vmul.f32 %v1435, %v1133
  %v1500 = vmul.f32 %v1436, %v1135
  %v1501 = vmul.f32 %v1437, %v1137
  %v1502 = vmul.f32 %v1438, %v1139
  %v1503 = vmul.f32 %v1439, %v1141
  %v1504 = vmul.f32 %v1440, %v1143
  %v1505 = vmul.f32 %v1441, %v1145
  %v1506 = vmul.f32 %v1442, %v1147
  %v1507 = vmul.f32 %v1443, %v1149
  %v1508 = vmul.f32 %v1444, %v1151
  %v1509 = vmul.f32 %v1445, %v1153
  %v1510 = vmul.f32 %v1446, %v1155
  %v1511 = vmul.f32 %v1447, %v1157
  %v1512 = vmul.f32 %v1448, %v1159
  %v1513 = vmul.f32 %v1449, %v1161
  %v1514 = vmul.f32 %v1450, %v1163
  %v1515 = vmul.f32 %v1451, %v1165
  %v1516 = vmul.f32 %v1452, %v1167
  %v1517 = vmul.f32 %v1453, %v1169
  %v1518 = vmul.f32 %v1454, %v1171
  %v1519 = vmul.f32 %v1455, %v1173
  %v1520 = vmul.f32 %v1456, %v1175
  %v1521 = vmul.f32 %v1457, %v1177
  %v1522 = vmul.f32 %v1458, %v1179
  %v1523 = vmul.f32 %v1459, %v1181
  %v1524 = vmul.f32 %v1460, %v1183
  %v1525 = vmul.f32 %v1461, %v1185
  %v1526 = vmul.f32 %v1462, %v1187
  %v1527 = vmul.f32 %v1463, %v1189
  %v1528 = vmul.f32 %v1464, %v1191
  %v1529 = vmul.f32 %v1465, %v1193
  %v1530 = vmul.f32 %v1466, %v1195
  %v1531 = vmul.f32 %v1467, %v1197
  %v1532 = vmul.f32 %v1468, %v1199
  %v1533 = vmul.f32 %v1469, %v1201
  %v1534 = vmul.f32 %v1470, %v1203
  %v1535 = vmul.f32 %v1471, %v1205
  %v1536 = vmul.f32 %v1472, %v1207
  %v1537 = vmul.f32 %v1473, %v1209
  %v1538 = vmul.f32 %v1474, %v1211
  %v1539 = vmul.f32 %v1475, %v1213
  %v1540 = vmul.f32 %v1476, %v1215
  %v1541 = vmul.f32 %v1477, %v1217
  %v1542 = vmul.f32 %v1478, %v1219
  %v1543 = vmul.f32 %v1479, %v1221
  %v1544 = vmul.f32 %v1480, %v1223
  %v1545 = vmul.f32 %v1481, %v1225
  %v1546 = vadd.f32 %v1482, -0.28449672
  %v1547 = vadd.f32 %v1483, -0.28449672
  %v1548 = vadd.f32 %v1484, -0.28449672
  %v1549 = vadd.f32 %v1485, -0.28449672
  %v1550 = vadd.f32 %v1486, -0.28449672
  %v1551 = vadd.f32 %v1487, -0.28449672
  %v1552 = vadd.f32 %v1488, -0.28449672
  %v1553 = vadd.f32 %v1489, -0.28449672
  %v1554 = vadd.f32 %v1490, -0.28449672
  %v1555 = vadd.f32 %v1491, -0.28449672
  %v1556 = vadd.f32 %v1492, -0.28449672
  %v1557 = vadd.f32 %v1493, -0.28449672
  %v1558 = vadd.f32 %v1494, -0.28449672
  %v1559 = vadd.f32 %v1495, -0.28449672
  %v1560 = vadd.f32 %v1496, -0.28449672
  %v1561 = vadd.f32 %v1497, -0.28449672
  %v1562 = vadd.f32 %v1498, -0.28449672
  %v1563 = vadd.f32 %v1499, -0.28449672
  %v1564 = vadd.f32 %v1500, -0.28449672
  %v1565 = vadd.f32 %v1501, -0.28449672
  %v1566 = vadd.f32 %v1502, -0.28449672
  %v1567 = vadd.f32 %v1503, -0.28449672
  %v1568 = vadd.f32 %v1504, -0.28449672
  %v1569 = vadd.f32 %v1505, -0.28449672
  %v1570 = vadd.f32 %v1506, -0.28449672
  %v1571 = vadd.f32 %v1507, -0.28449672
  %v1572 = vadd.f32 %v1508, -0.28449672
  %v1573 = vadd.f32 %v1509, -0.28449672
  %v1574 = vadd.f32 %v1510, -0.28449672
  %v1575 = vadd.f32 %v1511, -0.28449672
  %v1576 = vadd.f32 %v1512, -0.28449672
  %v1577 = vadd.f32 %v1513, -0.28449672
  %v1578 = vadd.f32 %v1514, -0.28449672
  %v1579 = vadd.f32 %v1515, -0.28449672
  %v1580 = vadd.f32 %v1516, -0.28449672
  %v1581 = vadd.f32 %v1517, -0.28449672
  %v1582 = vadd.f32 %v1518, -0.28449672
  %v1583 = vadd.f32 %v1519, -0.28449672
  %v1584 = vadd.f32 %v1520, -0.28449672
  %v1585 = vadd.f32 %v1521, -0.28449672
  %v1586 = vadd.f32 %v1522, -0.28449672
  %v1587 = vadd.f32 %v1523, -0.28449672
  %v1588 = vadd.f32 %v1524, -0.28449672
  %v1589 = vadd.f32 %v1525, -0.28449672
  %v1590 = vadd.f32 %v1526, -0.28449672
  %v1591 = vadd.f32 %v1527, -0.28449672
  %v1592 = vadd.f32 %v1528, -0.28449672
  %v1593 = vadd.f32 %v1529, -0.28449672
  %v1594 = vadd.f32 %v1530, -0.28449672
  %v1595 = vadd.f32 %v1531, -0.28449672
  %v1596 = vadd.f32 %v1532, -0.28449672
  %v1597 = vadd.f32 %v1533, -0.28449672
  %v1598 = vadd.f32 %v1534, -0.28449672
  %v1599 = vadd.f32 %v1535, -0.28449672
  %v1600 = vadd.f32 %v1536, -0.28449672
  %v1601 = vadd.f32 %v1537, -0.28449672
  %v1602 = vadd.f32 %v1538, -0.28449672
  %v1603 = vadd.f32 %v1539, -0.28449672
  %v1604 = vadd.f32 %v1540, -0.28449672
  %v1605 = vadd.f32 %v1541, -0.28449672
  %v1606 = vadd.f32 %v1542, -0.28449672
  %v1607 = vadd.f32 %v1543, -0.28449672
  %v1608 = vadd.f32 %v1544, -0.28449672
  %v1609 = vadd.f32 %v1545, -0.28449672
  %v1610 = vmul.f32 %v1546, %v1099
  %v1611 = vmul.f32 %v1547, %v1101
  %v1612 = vmul.f32 %v1548, %v1103
  %v1613 = vmul.f32 %v1549, %v1105
  %v1614 = vmul.f32 %v1550, %v1107
  %v1615 = vmul.f32 %v1551, %v1109
  %v1616 = vmul.f32 %v1552, %v1111
  %v1617 = vmul.f32 %v1553, %v1113
  %v1618 = vmul.f32 %v1554, %v1115
  %v1619 = vmul.f32 %v1555, %v1117
  %v1620 = vmul.f32 %v1556, %v1119
  %v1621 = vmul.f32 %v1557, %v1121
  %v1622 = vmul.f32 %v1558, %v1123
  %v1623 = vmul.f32 %v1559, %v1125
  %v1624 = vmul.f32 %v1560, %v1127
  %v1625 = vmul.f32 %v1561, %v1129
  %v1626 = vmul.f32 %v1562, %v1131
  %v1627 = vmul.f32 %v1563, %v1133
  %v1628 = vmul.f32 %v1564, %v1135
  %v1629 = vmul.f32 %v1565, %v1137
  %v1630 = vmul.f32 %v1566, %v1139
  %v1631 = vmul.f32 %v1567, %v1141
  %v1632 = vmul.f32 %v1568, %v1143
  %v1633 = vmul.f32 %v1569, %v1145
  %v1634 = vmul.f32 %v1570, %v1147
  %v1635 = vmul.f32 %v1571, %v1149
  %v1636 = vmul.f32 %v1572, %v1151
  %v1637 = vmul.f32 %v1573, %v1153
  %v1638 = vmul.f32 %v1574, %v1155
  %v1639 = vmul.f32 %v1575, %v1157
  %v1640 = vmul.f32 %v1576, %v1159
  %v1641 = vmul.f32 %v1577, %v1161
  %v1642 = vmul.f32 %v1578, %v1163
  %v1643 = vmul.f32 %v1579, %v1165
  %v1644 = vmul.f32 %v1580, %v1167
  %v1645 = vmul.f32 %v1581, %v1169
  %v1646 = vmul.f32 %v1582, %v1171
  %v1647 = vmul.f32 %v1583, %v1173
  %v1648 = vmul.f32 %v1584, %v1175
  %v1649 = vmul.f32 %v1585, %v1177
  %v1650 = vmul.f32 %v1586, %v1179
  %v1651 = vmul.f32 %v1587, %v1181
  %v1652 = vmul.f32 %v1588, %v1183
  %v1653 = vmul.f32 %v1589, %v1185
  %v1654 = vmul.f32 %v1590, %v1187
  %v1655 = vmul.f32 %v1591, %v1189
  %v1656 = vmul.f32 %v1592, %v1191
  %v1657 = vmul.f32 %v1593, %v1193
  %v1658 = vmul.f32 %v1594, %v1195
  %v1659 = vmul.f32 %v1595, %v1197
  %v1660 = vmul.f32 %v1596, %v1199
  %v1661 = vmul.f32 %v1597, %v1201
  %v1662 = vmul.f32 %v1598, %v1203
  %v1663 = vmul.f32 %v1599, %v1205
  %v1664 = vmul.f32 %v1600, %v1207
  %v1665 = vmul.f32 %v1601, %v1209
  %v1666 = vmul.f32 %v1602, %v1211
  %v1667 = vmul.f32 %v1603, %v1213
  %v1668 = vmul.f32 %v1604, %v1215
  %v1669 = vmul.f32 %v1605, %v1217
  %v1670 = vmul.f32 %v1606, %v1219
  %v1671 = vmul.f32 %v1607, %v1221
  %v1672 = vmul.f32 %v1608, %v1223
  %v1673 = vmul.f32 %v1609, %v1225
  %v1674 = vadd.f32 %v1610, 0.2548296
  %v1675 = vadd.f32 %v1611, 0.2548296
  %v1676 = vadd.f32 %v1612, 0.2548296
  %v1677 = vadd.f32 %v1613, 0.2548296
  %v1678 = vadd.f32 %v1614, 0.2548296
  %v1679 = vadd.f32 %v1615, 0.2548296
  %v1680 = vadd.f32 %v1616, 0.2548296
  %v1681 = vadd.f32 %v1617, 0.2548296
  %v1682 = vadd.f32 %v1618, 0.2548296
  %v1683 = vadd.f32 %v1619, 0.2548296
  %v1684 = vadd.f32 %v1620, 0.2548296
  %v1685 = vadd.f32 %v1621, 0.2548296
  %v1686 = vadd.f32 %v1622, 0.2548296
  %v1687 = vadd.f32 %v1623, 0.2548296
  %v1688 = vadd.f32 %v1624, 0.2548296
  %v1689 = vadd.f32 %v1625, 0.2548296
  %v1690 = vadd.f32 %v1626, 0.2548296
  %v1691 = vadd.f32 %v1627, 0.2548296
  %v1692 = vadd.f32 %v1628, 0.2548296
  %v1693 = vadd.f32 %v1629, 0.2548296
  %v1694 = vadd.f32 %v1630, 0.2548296
  %v1695 = vadd.f32 %v1631, 0.2548296
  %v1696 = vadd.f32 %v1632, 0.2548296
  %v1697 = vadd.f32 %v1633, 0.2548296
  %v1698 = vadd.f32 %v1634, 0.2548296
  %v1699 = vadd.f32 %v1635, 0.2548296
  %v1700 = vadd.f32 %v1636, 0.2548296
  %v1701 = vadd.f32 %v1637, 0.2548296
  %v1702 = vadd.f32 %v1638, 0.2548296
  %v1703 = vadd.f32 %v1639, 0.2548296
  %v1704 = vadd.f32 %v1640, 0.2548296
  %v1705 = vadd.f32 %v1641, 0.2548296
  %v1706 = vadd.f32 %v1642, 0.2548296
  %v1707 = vadd.f32 %v1643, 0.2548296
  %v1708 = vadd.f32 %v1644, 0.2548296
  %v1709 = vadd.f32 %v1645, 0.2548296
  %v1710 = vadd.f32 %v1646, 0.2548296
  %v1711 = vadd.f32 %v1647, 0.2548296
  %v1712 = vadd.f32 %v1648, 0.2548296
  %v1713 = vadd.f32 %v1649, 0.2548296
  %v1714 = vadd.f32 %v1650, 0.2548296
  %v1715 = vadd.f32 %v1651, 0.2548296
  %v1716 = vadd.f32 %v1652, 0.2548296
  %v1717 = vadd.f32 %v1653, 0.2548296
  %v1718 = vadd.f32 %v1654, 0.2548296
  %v1719 = vadd.f32 %v1655, 0.2548296
  %v1720 = vadd.f32 %v1656, 0.2548296
  %v1721 = vadd.f32 %v1657, 0.2548296
  %v1722 = vadd.f32 %v1658, 0.2548296
  %v1723 = vadd.f32 %v1659, 0.2548296
  %v1724 = vadd.f32 %v1660, 0.2548296
  %v1725 = vadd.f32 %v1661, 0.2548296
  %v1726 = vadd.f32 %v1662, 0.2548296
  %v1727 = vadd.f32 %v1663, 0.2548296
  %v1728 = vadd.f32 %v1664, 0.2548296
  %v1729 = vadd.f32 %v1665, 0.2548296
  %v1730 = vadd.f32 %v1666, 0.2548296
  %v1731 = vadd.f32 %v1667, 0.2548296
  %v1732 = vadd.f32 %v1668, 0.2548296
  %v1733 = vadd.f32 %v1669, 0.2548296
  %v1734 = vadd.f32 %v1670, 0.2548296
  %v1735 = vadd.f32 %v1671, 0.2548296
  %v1736 = vadd.f32 %v1672, 0.2548296
  %v1737 = vadd.f32 %v1673, 0.2548296
  %v1738 = vmul.f32 %v1674, %v1099
  %v1739 = vmul.f32 %v1675, %v1101
  %v1740 = vmul.f32 %v1676, %v1103
  %v1741 = vmul.f32 %v1677, %v1105
  %v1742 = vmul.f32 %v1678, %v1107
  %v1743 = vmul.f32 %v1679, %v1109
  %v1744 = vmul.f32 %v1680, %v1111
  %v1745 = vmul.f32 %v1681, %v1113
  %v1746 = vmul.f32 %v1682, %v1115
  %v1747 = vmul.f32 %v1683, %v1117
  %v1748 = vmul.f32 %v1684, %v1119
  %v1749 = vmul.f32 %v1685, %v1121
  %v1750 = vmul.f32 %v1686, %v1123
  %v1751 = vmul.f32 %v1687, %v1125
  %v1752 = vmul.f32 %v1688, %v1127
  %v1753 = vmul.f32 %v1689, %v1129
  %v1754 = vmul.f32 %v1690, %v1131
  %v1755 = vmul.f32 %v1691, %v1133
  %v1756 = vmul.f32 %v1692, %v1135
  %v1757 = vmul.f32 %v1693, %v1137
  %v1758 = vmul.f32 %v1694, %v1139
  %v1759 = vmul.f32 %v1695, %v1141
  %v1760 = vmul.f32 %v1696, %v1143
  %v1761 = vmul.f32 %v1697, %v1145
  %v1762 = vmul.f32 %v1698, %v1147
  %v1763 = vmul.f32 %v1699, %v1149
  %v1764 = vmul.f32 %v1700, %v1151
  %v1765 = vmul.f32 %v1701, %v1153
  %v1766 = vmul.f32 %v1702, %v1155
  %v1767 = vmul.f32 %v1703, %v1157
  %v1768 = vmul.f32 %v1704, %v1159
  %v1769 = vmul.f32 %v1705, %v1161
  %v1770 = vmul.f32 %v1706, %v1163
  %v1771 = vmul.f32 %v1707, %v1165
  %v1772 = vmul.f32 %v1708, %v1167
  %v1773 = vmul.f32 %v1709, %v1169
  %v1774 = vmul.f32 %v1710, %v1171
  %v1775 = vmul.f32 %v1711, %v1173
  %v1776 = vmul.f32 %v1712, %v1175
  %v1777 = vmul.f32 %v1713, %v1177
  %v1778 = vmul.f32 %v1714, %v1179
  %v1779 = vmul.f32 %v1715, %v1181
  %v1780 = vmul.f32 %v1716, %v1183
  %v1781 = vmul.f32 %v1717, %v1185
  %v1782 = vmul.f32 %v1718, %v1187
  %v1783 = vmul.f32 %v1719, %v1189
  %v1784 = vmul.f32 %v1720, %v1191
  %v1785 = vmul.f32 %v1721, %v1193
  %v1786 = vmul.f32 %v1722, %v1195
  %v1787 = vmul.f32 %v1723, %v1197
  %v1788 = vmul.f32 %v1724, %v1199
  %v1789 = vmul.f32 %v1725, %v1201
  %v1790 = vmul.f32 %v1726, %v1203
  %v1791 = vmul.f32 %v1727, %v1205
  %v1792 = vmul.f32 %v1728, %v1207
  %v1793 = vmul.f32 %v1729, %v1209
  %v1794 = vmul.f32 %v1730, %v1211
  %v1795 = vmul.f32 %v1731, %v1213
  %v1796 = vmul.f32 %v1732, %v1215
  %v1797 = vmul.f32 %v1733, %v1217
  %v1798 = vmul.f32 %v1734, %v1219
  %v1799 = vmul.f32 %v1735, %v1221
  %v1800 = vmul.f32 %v1736, %v1223
  %v1801 = vmul.f32 %v1737, %v1225
  %v1802 = vsub.f32 0.0, %v906
  %v1803 = vsub.f32 0.0, %v907
  %v1804 = vsub.f32 0.0, %v908
  %v1805 = vsub.f32 0.0, %v909
  %v1806 = vsub.f32 0.0, %v910
  %v1807 = vsub.f32 0.0, %v911
  %v1808 = vsub.f32 0.0, %v912
  %v1809 = vsub.f32 0.0, %v913
  %v1810 = vsub.f32 0.0, %v914
  %v1811 = vsub.f32 0.0, %v915
  %v1812 = vsub.f32 0.0, %v916
  %v1813 = vsub.f32 0.0, %v917
  %v1814 = vsub.f32 0.0, %v918
  %v1815 = vsub.f32 0.0, %v919
  %v1816 = vsub.f32 0.0, %v920
  %v1817 = vsub.f32 0.0, %v921
  %v1818 = vsub.f32 0.0, %v922
  %v1819 = vsub.f32 0.0, %v923
  %v1820 = vsub.f32 0.0, %v924
  %v1821 = vsub.f32 0.0, %v925
  %v1822 = vsub.f32 0.0, %v926
  %v1823 = vsub.f32 0.0, %v927
  %v1824 = vsub.f32 0.0, %v928
  %v1825 = vsub.f32 0.0, %v929
  %v1826 = vsub.f32 0.0, %v930
  %v1827 = vsub.f32 0.0, %v931
  %v1828 = vsub.f32 0.0, %v932
  %v1829 = vsub.f32 0.0, %v933
  %v1830 = vsub.f32 0.0, %v934
  %v1831 = vsub.f32 0.0, %v935
  %v1832 = vsub.f32 0.0, %v936
  %v1833 = vsub.f32 0.0, %v937
  %v1834 = vsub.f32 0.0, %v938
  %v1835 = vsub.f32 0.0, %v939
  %v1836 = vsub.f32 0.0, %v940
  %v1837 = vsub.f32 0.0, %v941
  %v1838 = vsub.f32 0.0, %v942
  %v1839 = vsub.f32 0.0, %v943
  %v1840 = vsub.f32 0.0, %v944
  %v1841 = vsub.f32 0.0, %v945
  %v1842 = vsub.f32 0.0, %v946
  %v1843 = vsub.f32 0.0, %v947
  %v1844 = vsub.f32 0.0, %v948
  %v1845 = vsub.f32 0.0, %v949
  %v1846 = vsub.f32 0.0, %v950
  %v1847 = vsub.f32 0.0, %v951
  %v1848 = vsub.f32 0.0, %v952
  %v1849 = vsub.f32 0.0, %v953
  %v1850 = vsub.f32 0.0, %v954
  %v1851 = vsub.f32 0.0, %v955
  %v1852 = vsub.f32 0.0, %v956
  %v1853 = vsub.f32 0.0, %v957
  %v1854 = vsub.f32 0.0, %v958
  %v1855 = vsub.f32 0.0, %v959
  %v1856 = vsub.f32 0.0, %v960
  %v1857 = vsub.f32 0.0, %v961
  %v1858 = vsub.f32 0.0, %v962
  %v1859 = vsub.f32 0.0, %v963
  %v1860 = vsub.f32 0.0, %v964
  %v1861 = vsub.f32 0.0, %v965
  %v1862 = vsub.f32 0.0, %v966
  %v1863 = vsub.f32 0.0, %v967
  %v1864 = vsub.f32 0.0, %v968
  %v1865 = vsub.f32 0.0, %v969
  %v1866 = vmul.f32 %v1802, %v906
  %v1867 = vmul.f32 %v1803, %v907
  %v1868 = vmul.f32 %v1804, %v908
  %v1869 = vmul.f32 %v1805, %v909
  %v1870 = vmul.f32 %v1806, %v910
  %v1871 = vmul.f32 %v1807, %v911
  %v1872 = vmul.f32 %v1808, %v912
  %v1873 = vmul.f32 %v1809, %v913
  %v1874 = vmul.f32 %v1810, %v914
  %v1875 = vmul.f32 %v1811, %v915
  %v1876 = vmul.f32 %v1812, %v916
  %v1877 = vmul.f32 %v1813, %v917
  %v1878 = vmul.f32 %v1814, %v918
  %v1879 = vmul.f32 %v1815, %v919
  %v1880 = vmul.f32 %v1816, %v920
  %v1881 = vmul.f32 %v1817, %v921
  %v1882 = vmul.f32 %v1818, %v922
  %v1883 = vmul.f32 %v1819, %v923
  %v1884 = vmul.f32 %v1820, %v924
  %v1885 = vmul.f32 %v1821, %v925
  %v1886 = vmul.f32 %v1822, %v926
  %v1887 = vmul.f32 %v1823, %v927
  %v1888 = vmul.f32 %v1824, %v928
  %v1889 = vmul.f32 %v1825, %v929
  %v1890 = vmul.f32 %v1826, %v930
  %v1891 = vmul.f32 %v1827, %v931
  %v1892 = vmul.f32 %v1828, %v932
  %v1893 = vmul.f32 %v1829, %v933
  %v1894 = vmul.f32 %v1830, %v934
  %v1895 = vmul.f32 %v1831, %v935
  %v1896 = vmul.f32 %v1832, %v936
  %v1897 = vmul.f32 %v1833, %v937
  %v1898 = vmul.f32 %v1834, %v938
  %v1899 = vmul.f32 %v1835, %v939
  %v1900 = vmul.f32 %v1836, %v940
  %v1901 = vmul.f32 %v1837, %v941
  %v1902 = vmul.f32 %v1838, %v942
  %v1903 = vmul.f32 %v1839, %v943
  %v1904 = vmul.f32 %v1840, %v944
  %v1905 = vmul.f32 %v1841, %v945
  %v1906 = vmul.f32 %v1842, %v946
  %v1907 = vmul.f32 %v1843, %v947
  %v1908 = vmul.f32 %v1844, %v948
  %v1909 = vmul.f32 %v1845, %v949
  %v1910 = vmul.f32 %v1846, %v950
  %v1911 = vmul.f32 %v1847, %v951
  %v1912 = vmul.f32 %v1848, %v952
  %v1913 = vmul.f32 %v1849, %v953
  %v1914 = vmul.f32 %v1850, %v954
  %v1915 = vmul.f32 %v1851, %v955
  %v1916 = vmul.f32 %v1852, %v956
  %v1917 = vmul.f32 %v1853, %v957
  %v1918 = vmul.f32 %v1854, %v958
  %v1919 = vmul.f32 %v1855, %v959
  %v1920 = vmul.f32 %v1856, %v960
  %v1921 = vmul.f32 %v1857, %v961
  %v1922 = vmul.f32 %v1858, %v962
  %v1923 = vmul.f32 %v1859, %v963
  %v1924 = vmul.f32 %v1860, %v964
  %v1925 = vmul.f32 %v1861, %v965
  %v1926 = vmul.f32 %v1862, %v966
  %v1927 = vmul.f32 %v1863, %v967
  %v1928 = vmul.f32 %v1864, %v968
  %v1929 = vmul.f32 %v1865, %v969
  %v1930 = vmul.f32 %v1866, 1.442695
  %v1931 = vpow.pop %v1930
  %v1932 = vmul.f32 %v1867, 1.442695
  %v1933 = vpow.pop %v1932
  %v1934 = vmul.f32 %v1868, 1.442695
  %v1935 = vpow.pop %v1934
  %v1936 = vmul.f32 %v1869, 1.442695
  %v1937 = vpow.pop %v1936
  %v1938 = vmul.f32 %v1870, 1.442695
  %v1939 = vpow.pop %v1938
  %v1940 = vmul.f32 %v1871, 1.442695
  %v1941 = vpow.pop %v1940
  %v1942 = vmul.f32 %v1872, 1.442695
  %v1943 = vpow.pop %v1942
  %v1944 = vmul.f32 %v1873, 1.442695
  %v1945 = vpow.pop %v1944
  %v1946 = vmul.f32 %v1874, 1.442695
  %v1947 = vpow.pop %v1946
  %v1948 = vmul.f32 %v1875, 1.442695
  %v1949 = vpow.pop %v1948
  %v1950 = vmul.f32 %v1876, 1.442695
  %v1951 = vpow.pop %v1950
  %v1952 = vmul.f32 %v1877, 1.442695
  %v1953 = vpow.pop %v1952
  %v1954 = vmul.f32 %v1878, 1.442695
  %v1955 = vpow.pop %v1954
  %v1956 = vmul.f32 %v1879, 1.442695
  %v1957 = vpow.pop %v1956
  %v1958 = vmul.f32 %v1880, 1.442695
  %v1959 = vpow.pop %v1958
  %v1960 = vmul.f32 %v1881, 1.442695
  %v1961 = vpow.pop %v1960
  %v1962 = vmul.f32 %v1882, 1.442695
  %v1963 = vpow.pop %v1962
  %v1964 = vmul.f32 %v1883, 1.442695
  %v1965 = vpow.pop %v1964
  %v1966 = vmul.f32 %v1884, 1.442695
  %v1967 = vpow.pop %v1966
  %v1968 = vmul.f32 %v1885, 1.442695
  %v1969 = vpow.pop %v1968
  %v1970 = vmul.f32 %v1886, 1.442695
  %v1971 = vpow.pop %v1970
  %v1972 = vmul.f32 %v1887, 1.442695
  %v1973 = vpow.pop %v1972
  %v1974 = vmul.f32 %v1888, 1.442695
  %v1975 = vpow.pop %v1974
  %v1976 = vmul.f32 %v1889, 1.442695
  %v1977 = vpow.pop %v1976
  %v1978 = vmul.f32 %v1890, 1.442695
  %v1979 = vpow.pop %v1978
  %v1980 = vmul.f32 %v1891, 1.442695
  %v1981 = vpow.pop %v1980
  %v1982 = vmul.f32 %v1892, 1.442695
  %v1983 = vpow.pop %v1982
  %v1984 = vmul.f32 %v1893, 1.442695
  %v1985 = vpow.pop %v1984
  %v1986 = vmul.f32 %v1894, 1.442695
  %v1987 = vpow.pop %v1986
  %v1988 = vmul.f32 %v1895, 1.442695
  %v1989 = vpow.pop %v1988
  %v1990 = vmul.f32 %v1896, 1.442695
  %v1991 = vpow.pop %v1990
  %v1992 = vmul.f32 %v1897, 1.442695
  %v1993 = vpow.pop %v1992
  %v1994 = vmul.f32 %v1898, 1.442695
  %v1995 = vpow.pop %v1994
  %v1996 = vmul.f32 %v1899, 1.442695
  %v1997 = vpow.pop %v1996
  %v1998 = vmul.f32 %v1900, 1.442695
  %v1999 = vpow.pop %v1998
  %v2000 = vmul.f32 %v1901, 1.442695
  %v2001 = vpow.pop %v2000
  %v2002 = vmul.f32 %v1902, 1.442695
  %v2003 = vpow.pop %v2002
  %v2004 = vmul.f32 %v1903, 1.442695
  %v2005 = vpow.pop %v2004
  %v2006 = vmul.f32 %v1904, 1.442695
  %v2007 = vpow.pop %v2006
  %v2008 = vmul.f32 %v1905, 1.442695
  %v2009 = vpow.pop %v2008
  %v2010 = vmul.f32 %v1906, 1.442695
  %v2011 = vpow.pop %v2010
  %v2012 = vmul.f32 %v1907, 1.442695
  %v2013 = vpow.pop %v2012
  %v2014 = vmul.f32 %v1908, 1.442695
  %v2015 = vpow.pop %v2014
  %v2016 = vmul.f32 %v1909, 1.442695
  %v2017 = vpow.pop %v2016
  %v2018 = vmul.f32 %v1910, 1.442695
  %v2019 = vpow.pop %v2018
  %v2020 = vmul.f32 %v1911, 1.442695
  %v2021 = vpow.pop %v2020
  %v2022 = vmul.f32 %v1912, 1.442695
  %v2023 = vpow.pop %v2022
  %v2024 = vmul.f32 %v1913, 1.442695
  %v2025 = vpow.pop %v2024
  %v2026 = vmul.f32 %v1914, 1.442695
  %v2027 = vpow.pop %v2026
  %v2028 = vmul.f32 %v1915, 1.442695
  %v2029 = vpow.pop %v2028
  %v2030 = vmul.f32 %v1916, 1.442695
  %v2031 = vpow.pop %v2030
  %v2032 = vmul.f32 %v1917, 1.442695
  %v2033 = vpow.pop %v2032
  %v2034 = vmul.f32 %v1918, 1.442695
  %v2035 = vpow.pop %v2034
  %v2036 = vmul.f32 %v1919, 1.442695
  %v2037 = vpow.pop %v2036
  %v2038 = vmul.f32 %v1920, 1.442695
  %v2039 = vpow.pop %v2038
  %v2040 = vmul.f32 %v1921, 1.442695
  %v2041 = vpow.pop %v2040
  %v2042 = vmul.f32 %v1922, 1.442695
  %v2043 = vpow.pop %v2042
  %v2044 = vmul.f32 %v1923, 1.442695
  %v2045 = vpow.pop %v2044
  %v2046 = vmul.f32 %v1924, 1.442695
  %v2047 = vpow.pop %v2046
  %v2048 = vmul.f32 %v1925, 1.442695
  %v2049 = vpow.pop %v2048
  %v2050 = vmul.f32 %v1926, 1.442695
  %v2051 = vpow.pop %v2050
  %v2052 = vmul.f32 %v1927, 1.442695
  %v2053 = vpow.pop %v2052
  %v2054 = vmul.f32 %v1928, 1.442695
  %v2055 = vpow.pop %v2054
  %v2056 = vmul.f32 %v1929, 1.442695
  %v2057 = vpow.pop %v2056
  %v2058 = vmul.f32 %v1738, %v1931
  %v2059 = vmul.f32 %v1739, %v1933
  %v2060 = vmul.f32 %v1740, %v1935
  %v2061 = vmul.f32 %v1741, %v1937
  %v2062 = vmul.f32 %v1742, %v1939
  %v2063 = vmul.f32 %v1743, %v1941
  %v2064 = vmul.f32 %v1744, %v1943
  %v2065 = vmul.f32 %v1745, %v1945
  %v2066 = vmul.f32 %v1746, %v1947
  %v2067 = vmul.f32 %v1747, %v1949
  %v2068 = vmul.f32 %v1748, %v1951
  %v2069 = vmul.f32 %v1749, %v1953
  %v2070 = vmul.f32 %v1750, %v1955
  %v2071 = vmul.f32 %v1751, %v1957
  %v2072 = vmul.f32 %v1752, %v1959
  %v2073 = vmul.f32 %v1753, %v1961
  %v2074 = vmul.f32 %v1754, %v1963
  %v2075 = vmul.f32 %v1755, %v1965
  %v2076 = vmul.f32 %v1756, %v1967
  %v2077 = vmul.f32 %v1757, %v1969
  %v2078 = vmul.f32 %v1758, %v1971
  %v2079 = vmul.f32 %v1759, %v1973
  %v2080 = vmul.f32 %v1760, %v1975
  %v2081 = vmul.f32 %v1761, %v1977
  %v2082 = vmul.f32 %v1762, %v1979
  %v2083 = vmul.f32 %v1763, %v1981
  %v2084 = vmul.f32 %v1764, %v1983
  %v2085 = vmul.f32 %v1765, %v1985
  %v2086 = vmul.f32 %v1766, %v1987
  %v2087 = vmul.f32 %v1767, %v1989
  %v2088 = vmul.f32 %v1768, %v1991
  %v2089 = vmul.f32 %v1769, %v1993
  %v2090 = vmul.f32 %v1770, %v1995
  %v2091 = vmul.f32 %v1771, %v1997
  %v2092 = vmul.f32 %v1772, %v1999
  %v2093 = vmul.f32 %v1773, %v2001
  %v2094 = vmul.f32 %v1774, %v2003
  %v2095 = vmul.f32 %v1775, %v2005
  %v2096 = vmul.f32 %v1776, %v2007
  %v2097 = vmul.f32 %v1777, %v2009
  %v2098 = vmul.f32 %v1778, %v2011
  %v2099 = vmul.f32 %v1779, %v2013
  %v2100 = vmul.f32 %v1780, %v2015
  %v2101 = vmul.f32 %v1781, %v2017
  %v2102 = vmul.f32 %v1782, %v2019
  %v2103 = vmul.f32 %v1783, %v2021
  %v2104 = vmul.f32 %v1784, %v2023
  %v2105 = vmul.f32 %v1785, %v2025
  %v2106 = vmul.f32 %v1786, %v2027
  %v2107 = vmul.f32 %v1787, %v2029
  %v2108 = vmul.f32 %v1788, %v2031
  %v2109 = vmul.f32 %v1789, %v2033
  %v2110 = vmul.f32 %v1790, %v2035
  %v2111 = vmul.f32 %v1791, %v2037
  %v2112 = vmul.f32 %v1792, %v2039
  %v2113 = vmul.f32 %v1793, %v2041
  %v2114 = vmul.f32 %v1794, %v2043
  %v2115 = vmul.f32 %v1795, %v2045
  %v2116 = vmul.f32 %v1796, %v2047
  %v2117 = vmul.f32 %v1797, %v2049
  %v2118 = vmul.f32 %v1798, %v2051
  %v2119 = vmul.f32 %v1799, %v2053
  %v2120 = vmul.f32 %v1800, %v2055
  %v2121 = vmul.f32 %v1801, %v2057
  %v2122 = vsub.f32 1.0, %v2058
  %v2123 = vsub.f32 1.0, %v2059
  %v2124 = vsub.f32 1.0, %v2060
  %v2125 = vsub.f32 1.0, %v2061
  %v2126 = vsub.f32 1.0, %v2062
  %v2127 = vsub.f32 1.0, %v2063
  %v2128 = vsub.f32 1.0, %v2064
  %v2129 = vsub.f32 1.0, %v2065
  %v2130 = vsub.f32 1.0, %v2066
  %v2131 = vsub.f32 1.0, %v2067
  %v2132 = vsub.f32 1.0, %v2068
  %v2133 = vsub.f32 1.0, %v2069
  %v2134 = vsub.f32 1.0, %v2070
  %v2135 = vsub.f32 1.0, %v2071
  %v2136 = vsub.f32 1.0, %v2072
  %v2137 = vsub.f32 1.0, %v2073
  %v2138 = vsub.f32 1.0, %v2074
  %v2139 = vsub.f32 1.0, %v2075
  %v2140 = vsub.f32 1.0, %v2076
  %v2141 = vsub.f32 1.0, %v2077
  %v2142 = vsub.f32 1.0, %v2078
  %v2143 = vsub.f32 1.0, %v2079
  %v2144 = vsub.f32 1.0, %v2080
  %v2145 = vsub.f32 1.0, %v2081
  %v2146 = vsub.f32 1.0, %v2082
  %v2147 = vsub.f32 1.0, %v2083
  %v2148 = vsub.f32 1.0, %v2084
  %v2149 = vsub.f32 1.0, %v2085
  %v2150 = vsub.f32 1.0, %v2086
  %v2151 = vsub.f32 1.0, %v2087
  %v2152 = vsub.f32 1.0, %v2088
  %v2153 = vsub.f32 1.0, %v2089
  %v2154 = vsub.f32 1.0, %v2090
  %v2155 = vsub.f32 1.0, %v2091
  %v2156 = vsub.f32 1.0, %v2092
  %v2157 = vsub.f32 1.0, %v2093
  %v2158 = vsub.f32 1.0, %v2094
  %v2159 = vsub.f32 1.0, %v2095
  %v2160 = vsub.f32 1.0, %v2096
  %v2161 = vsub.f32 1.0, %v2097
  %v2162 = vsub.f32 1.0, %v2098
  %v2163 = vsub.f32 1.0, %v2099
  %v2164 = vsub.f32 1.0, %v2100
  %v2165 = vsub.f32 1.0, %v2101
  %v2166 = vsub.f32 1.0, %v2102
  %v2167 = vsub.f32 1.0, %v2103
  %v2168 = vsub.f32 1.0, %v2104
  %v2169 = vsub.f32 1.0, %v2105
  %v2170 = vsub.f32 1.0, %v2106
  %v2171 = vsub.f32 1.0, %v2107
  %v2172 = vsub.f32 1.0, %v2108
  %v2173 = vsub.f32 1.0, %v2109
  %v2174 = vsub.f32 1.0, %v2110
  %v2175 = vsub.f32 1.0, %v2111
  %v2176 = vsub.f32 1.0, %v2112
  %v2177 = vsub.f32 1.0, %v2113
  %v2178 = vsub.f32 1.0, %v2114
  %v2179 = vsub.f32 1.0, %v2115
  %v2180 = vsub.f32 1.0, %v2116
  %v2181 = vsub.f32 1.0, %v2117
  %v2182 = vsub.f32 1.0, %v2118
  %v2183 = vsub.f32 1.0, %v2119
  %v2184 = vsub.f32 1.0, %v2120
  %v2185 = vsub.f32 1.0, %v2121
  %v2186 = vmul.f32 %v842, %v2122
  %v2187 = vmul.f32 %v843, %v2123
  %v2188 = vmul.f32 %v844, %v2124
  %v2189 = vmul.f32 %v845, %v2125
  %v2190 = vmul.f32 %v846, %v2126
  %v2191 = vmul.f32 %v847, %v2127
  %v2192 = vmul.f32 %v848, %v2128
  %v2193 = vmul.f32 %v849, %v2129
  %v2194 = vmul.f32 %v850, %v2130
  %v2195 = vmul.f32 %v851, %v2131
  %v2196 = vmul.f32 %v852, %v2132
  %v2197 = vmul.f32 %v853, %v2133
  %v2198 = vmul.f32 %v854, %v2134
  %v2199 = vmul.f32 %v855, %v2135
  %v2200 = vmul.f32 %v856, %v2136
  %v2201 = vmul.f32 %v857, %v2137
  %v2202 = vmul.f32 %v858, %v2138
  %v2203 = vmul.f32 %v859, %v2139
  %v2204 = vmul.f32 %v860, %v2140
  %v2205 = vmul.f32 %v861, %v2141
  %v2206 = vmul.f32 %v862, %v2142
  %v2207 = vmul.f32 %v863, %v2143
  %v2208 = vmul.f32 %v864, %v2144
  %v2209 = vmul.f32 %v865, %v2145
  %v2210 = vmul.f32 %v866, %v2146
  %v2211 = vmul.f32 %v867, %v2147
  %v2212 = vmul.f32 %v868, %v2148
  %v2213 = vmul.f32 %v869, %v2149
  %v2214 = vmul.f32 %v870, %v2150
  %v2215 = vmul.f32 %v871, %v2151
  %v2216 = vmul.f32 %v872, %v2152
  %v2217 = vmul.f32 %v873, %v2153
  %v2218 = vmul.f32 %v874, %v2154
  %v2219 = vmul.f32 %v875, %v2155
  %v2220 = vmul.f32 %v876, %v2156
  %v2221 = vmul.f32 %v877, %v2157
  %v2222 = vmul.f32 %v878, %v2158
  %v2223 = vmul.f32 %v879, %v2159
  %v2224 = vmul.f32 %v880, %v2160
  %v2225 = vmul.f32 %v881, %v2161
  %v2226 = vmul.f32 %v882, %v2162
  %v2227 = vmul.f32 %v883, %v2163
  %v2228 = vmul.f32 %v884, %v2164
  %v2229 = vmul.f32 %v885, %v2165
  %v2230 = vmul.f32 %v886, %v2166
  %v2231 = vmul.f32 %v887, %v2167
  %v2232 = vmul.f32 %v888, %v2168
  %v2233 = vmul.f32 %v889, %v2169
  %v2234 = vmul.f32 %v890, %v2170
  %v2235 = vmul.f32 %v891, %v2171
  %v2236 = vmul.f32 %v892, %v2172
  %v2237 = vmul.f32 %v893, %v2173
  %v2238 = vmul.f32 %v894, %v2174
  %v2239 = vmul.f32 %v895, %v2175
  %v2240 = vmul.f32 %v896, %v2176
  %v2241 = vmul.f32 %v897, %v2177
  %v2242 = vmul.f32 %v898, %v2178
  %v2243 = vmul.f32 %v899, %v2179
  %v2244 = vmul.f32 %v900, %v2180
  %v2245 = vmul.f32 %v901, %v2181
  %v2246 = vmul.f32 %v902, %v2182
  %v2247 = vmul.f32 %v903, %v2183
  %v2248 = vmul.f32 %v904, %v2184
  %v2249 = vmul.f32 %v905, %v2185
  %v2250 = vadd.f32 %v2186, 1.0
  %v2251 = vadd.f32 %v2187, 1.0
  %v2252 = vadd.f32 %v2188, 1.0
  %v2253 = vadd.f32 %v2189, 1.0
  %v2254 = vadd.f32 %v2190, 1.0
  %v2255 = vadd.f32 %v2191, 1.0
  %v2256 = vadd.f32 %v2192, 1.0
  %v2257 = vadd.f32 %v2193, 1.0
  %v2258 = vadd.f32 %v2194, 1.0
  %v2259 = vadd.f32 %v2195, 1.0
  %v2260 = vadd.f32 %v2196, 1.0
  %v2261 = vadd.f32 %v2197, 1.0
  %v2262 = vadd.f32 %v2198, 1.0
  %v2263 = vadd.f32 %v2199, 1.0
  %v2264 = vadd.f32 %v2200, 1.0
  %v2265 = vadd.f32 %v2201, 1.0
  %v2266 = vadd.f32 %v2202, 1.0
  %v2267 = vadd.f32 %v2203, 1.0
  %v2268 = vadd.f32 %v2204, 1.0
  %v2269 = vadd.f32 %v2205, 1.0
  %v2270 = vadd.f32 %v2206, 1.0
  %v2271 = vadd.f32 %v2207, 1.0
  %v2272 = vadd.f32 %v2208, 1.0
  %v2273 = vadd.f32 %v2209, 1.0
  %v2274 = vadd.f32 %v2210, 1.0
  %v2275 = vadd.f32 %v2211, 1.0
  %v2276 = vadd.f32 %v2212, 1.0
  %v2277 = vadd.f32 %v2213, 1.0
  %v2278 = vadd.f32 %v2214, 1.0
  %v2279 = vadd.f32 %v2215, 1.0
  %v2280 = vadd.f32 %v2216, 1.0
  %v2281 = vadd.f32 %v2217, 1.0
  %v2282 = vadd.f32 %v2218, 1.0
  %v2283 = vadd.f32 %v2219, 1.0
  %v2284 = vadd.f32 %v2220, 1.0
  %v2285 = vadd.f32 %v2221, 1.0
  %v2286 = vadd.f32 %v2222, 1.0
  %v2287 = vadd.f32 %v2223, 1.0
  %v2288 = vadd.f32 %v2224, 1.0
  %v2289 = vadd.f32 %v2225, 1.0
  %v2290 = vadd.f32 %v2226, 1.0
  %v2291 = vadd.f32 %v2227, 1.0
  %v2292 = vadd.f32 %v2228, 1.0
  %v2293 = vadd.f32 %v2229, 1.0
  %v2294 = vadd.f32 %v2230, 1.0
  %v2295 = vadd.f32 %v2231, 1.0
  %v2296 = vadd.f32 %v2232, 1.0
  %v2297 = vadd.f32 %v2233, 1.0
  %v2298 = vadd.f32 %v2234, 1.0
  %v2299 = vadd.f32 %v2235, 1.0
  %v2300 = vadd.f32 %v2236, 1.0
  %v2301 = vadd.f32 %v2237, 1.0
  %v2302 = vadd.f32 %v2238, 1.0
  %v2303 = vadd.f32 %v2239, 1.0
  %v2304 = vadd.f32 %v2240, 1.0
  %v2305 = vadd.f32 %v2241, 1.0
  %v2306 = vadd.f32 %v2242, 1.0
  %v2307 = vadd.f32 %v2243, 1.0
  %v2308 = vadd.f32 %v2244, 1.0
  %v2309 = vadd.f32 %v2245, 1.0
  %v2310 = vadd.f32 %v2246, 1.0
  %v2311 = vadd.f32 %v2247, 1.0
  %v2312 = vadd.f32 %v2248, 1.0
  %v2313 = vadd.f32 %v2249, 1.0
  %v2314 = vmul.f32 %v650, %v2250
  %v2315 = vmul.f32 %v651, %v2251
  %v2316 = vmul.f32 %v652, %v2252
  %v2317 = vmul.f32 %v653, %v2253
  %v2318 = vmul.f32 %v654, %v2254
  %v2319 = vmul.f32 %v655, %v2255
  %v2320 = vmul.f32 %v656, %v2256
  %v2321 = vmul.f32 %v657, %v2257
  %v2322 = vmul.f32 %v658, %v2258
  %v2323 = vmul.f32 %v659, %v2259
  %v2324 = vmul.f32 %v660, %v2260
  %v2325 = vmul.f32 %v661, %v2261
  %v2326 = vmul.f32 %v662, %v2262
  %v2327 = vmul.f32 %v663, %v2263
  %v2328 = vmul.f32 %v664, %v2264
  %v2329 = vmul.f32 %v665, %v2265
  %v2330 = vmul.f32 %v666, %v2266
  %v2331 = vmul.f32 %v667, %v2267
  %v2332 = vmul.f32 %v668, %v2268
  %v2333 = vmul.f32 %v669, %v2269
  %v2334 = vmul.f32 %v670, %v2270
  %v2335 = vmul.f32 %v671, %v2271
  %v2336 = vmul.f32 %v672, %v2272
  %v2337 = vmul.f32 %v673, %v2273
  %v2338 = vmul.f32 %v674, %v2274
  %v2339 = vmul.f32 %v675, %v2275
  %v2340 = vmul.f32 %v676, %v2276
  %v2341 = vmul.f32 %v677, %v2277
  %v2342 = vmul.f32 %v678, %v2278
  %v2343 = vmul.f32 %v679, %v2279
  %v2344 = vmul.f32 %v680, %v2280
  %v2345 = vmul.f32 %v681, %v2281
  %v2346 = vmul.f32 %v682, %v2282
  %v2347 = vmul.f32 %v683, %v2283
  %v2348 = vmul.f32 %v684, %v2284
  %v2349 = vmul.f32 %v685, %v2285
  %v2350 = vmul.f32 %v686, %v2286
  %v2351 = vmul.f32 %v687, %v2287
  %v2352 = vmul.f32 %v688, %v2288
  %v2353 = vmul.f32 %v689, %v2289
  %v2354 = vmul.f32 %v690, %v2290
  %v2355 = vmul.f32 %v691, %v2291
  %v2356 = vmul.f32 %v692, %v2292
  %v2357 = vmul.f32 %v693, %v2293
  %v2358 = vmul.f32 %v694, %v2294
  %v2359 = vmul.f32 %v695, %v2295
  %v2360 = vmul.f32 %v696, %v2296
  %v2361 = vmul.f32 %v697, %v2297
  %v2362 = vmul.f32 %v698, %v2298
  %v2363 = vmul.f32 %v699, %v2299
  %v2364 = vmul.f32 %v700, %v2300
  %v2365 = vmul.f32 %v701, %v2301
  %v2366 = vmul.f32 %v702, %v2302
  %v2367 = vmul.f32 %v703, %v2303
  %v2368 = vmul.f32 %v704, %v2304
  %v2369 = vmul.f32 %v705, %v2305
  %v2370 = vmul.f32 %v706, %v2306
  %v2371 = vmul.f32 %v707, %v2307
  %v2372 = vmul.f32 %v708, %v2308
  %v2373 = vmul.f32 %v709, %v2309
  %v2374 = vmul.f32 %v710, %v2310
  %v2375 = vmul.f32 %v711, %v2311
  %v2376 = vmul.f32 %v712, %v2312
  %v2377 = vmul.f32 %v713, %v2313
  %v2378 = vld [vmem:[%s3] sm:$0xff]
  %v2379 = vld [vmem:[%s3 + $0x8] sm:$0xff]
  %v2380 = vld [vmem:[%s3 + $0x10] sm:$0xff]
  %v2381 = vld [vmem:[%s3 + $0x18] sm:$0xff]
  %v2382 = vld [vmem:[%s3 + $0x20] sm:$0xff]
  %v2383 = vld [vmem:[%s3 + $0x28] sm:$0xff]
  %v2384 = vld [vmem:[%s3 + $0x30] sm:$0xff]
  %v2385 = vld [vmem:[%s3 + $0x38] sm:$0xff]
  %v2386 = vld [vmem:[%s3 + $0x40] sm:$0xff]
  %v2387 = vld [vmem:[%s3 + $0x48] sm:$0xff]
  %v2388 = vld [vmem:[%s3 + $0x50] sm:$0xff]
  %v2389 = vld [vmem:[%s3 + $0x58] sm:$0xff]
  %v2390 = vld [vmem:[%s3 + $0x60] sm:$0xff]
  %v2391 = vld [vmem:[%s3 + $0x68] sm:$0xff]
  %v2392 = vld [vmem:[%s3 + $0x70] sm:$0xff]
  %v2393 = vld [vmem:[%s3 + $0x78] sm:$0xff]
  %v2394 = vld [vmem:[%s3 + $0x80] sm:$0xff]
  %v2395 = vld [vmem:[%s3 + $0x88] sm:$0xff]
  %v2396 = vld [vmem:[%s3 + $0x90] sm:$0xff]
  %v2397 = vld [vmem:[%s3 + $0x98] sm:$0xff]
  %v2398 = vld [vmem:[%s3 + $0xa0] sm:$0xff]
  %v2399 = vld [vmem:[%s3 + $0xa8] sm:$0xff]
  %v2400 = vld [vmem:[%s3 + $0xb0] sm:$0xff]
  %v2401 = vld [vmem:[%s3 + $0xb8] sm:$0xff]
  %v2402 = vld [vmem:[%s3 + $0xc0] sm:$0xff]
  %v2403 = vld [vmem:[%s3 + $0xc8] sm:$0xff]
  %v2404 = vld [vmem:[%s3 + $0xd0] sm:$0xff]
  %v2405 = vld [vmem:[%s3 + $0xd8] sm:$0xff]
  %v2406 = vld [vmem:[%s3 + $0xe0] sm:$0xff]
  %v2407 = vld [vmem:[%s3 + $0xe8] sm:$0xff]
  %v2408 = vld [vmem:[%s3 + $0xf0] sm:$0xff]
  %v2409 = vld [vmem:[%s3 + $0xf8] sm:$0xff]
  %v2410 = vld [vmem:[%s3 + $0x100] sm:$0xff]
  %v2411 = vld [vmem:[%s3 + $0x108] sm:$0xff]
  %v2412 = vld [vmem:[%s3 + $0x110] sm:$0xff]
  %v2413 = vld [vmem:[%s3 + $0x118] sm:$0xff]
  %v2414 = vld [vmem:[%s3 + $0x120] sm:$0xff]
  %v2415 = vld [vmem:[%s3 + $0x128] sm:$0xff]
  %v2416 = vld [vmem:[%s3 + $0x130] sm:$0xff]
  %v2417 = vld [vmem:[%s3 + $0x138] sm:$0xff]
  %v2418 = vld [vmem:[%s3 + $0x140] sm:$0xff]
  %v2419 = vld [vmem:[%s3 + $0x148] sm:$0xff]
  %v2420 = vld [vmem:[%s3 + $0x150] sm:$0xff]
  %v2421 = vld [vmem:[%s3 + $0x158] sm:$0xff]
  %v2422 = vld [vmem:[%s3 + $0x160] sm:$0xff]
  %v2423 = vld [vmem:[%s3 + $0x168] sm:$0xff]
  %v2424 = vld [vmem:[%s3 + $0x170] sm:$0xff]
  %v2425 = vld [vmem:[%s3 + $0x178] sm:$0xff]
  %v2426 = vld [vmem:[%s3 + $0x180] sm:$0xff]
  %v2427 = vld [vmem:[%s3 + $0x188] sm:$0xff]
  %v2428 = vld [vmem:[%s3 + $0x190] sm:$0xff]
  %v2429 = vld [vmem:[%s3 + $0x198] sm:$0xff]
  %v2430 = vld [vmem:[%s3 + $0x1a0] sm:$0xff]
  %v2431 = vld [vmem:[%s3 + $0x1a8] sm:$0xff]
  %v2432 = vld [vmem:[%s3 + $0x1b0] sm:$0xff]
  %v2433 = vld [vmem:[%s3 + $0x1b8] sm:$0xff]
  %v2434 = vld [vmem:[%s3 + $0x1c0] sm:$0xff]
  %v2435 = vld [vmem:[%s3 + $0x1c8] sm:$0xff]
  %v2436 = vld [vmem:[%s3 + $0x1d0] sm:$0xff]
  %v2437 = vld [vmem:[%s3 + $0x1d8] sm:$0xff]
  %v2438 = vld [vmem:[%s3 + $0x1e0] sm:$0xff]
  %v2439 = vld [vmem:[%s3 + $0x1e8] sm:$0xff]
  %v2440 = vld [vmem:[%s3 + $0x1f0] sm:$0xff]
  %v2441 = vld [vmem:[%s3 + $0x1f8] sm:$0xff]
  %v2442 = vld [vmem:[%s3 + $0x200] sm:$0xff]
  %v2443 = vld [vmem:[%s3 + $0x208] sm:$0xff]
  %v2444 = vld [vmem:[%s3 + $0x210] sm:$0xff]
  %v2445 = vld [vmem:[%s3 + $0x218] sm:$0xff]
  %v2446 = vld [vmem:[%s3 + $0x220] sm:$0xff]
  %v2447 = vld [vmem:[%s3 + $0x228] sm:$0xff]
  %v2448 = vld [vmem:[%s3 + $0x230] sm:$0xff]
  %v2449 = vld [vmem:[%s3 + $0x238] sm:$0xff]
  %v2450 = vld [vmem:[%s3 + $0x240] sm:$0xff]
  %v2451 = vld [vmem:[%s3 + $0x248] sm:$0xff]
  %v2452 = vld [vmem:[%s3 + $0x250] sm:$0xff]
  %v2453 = vld [vmem:[%s3 + $0x258] sm:$0xff]
  %v2454 = vld [vmem:[%s3 + $0x260] sm:$0xff]
  %v2455 = vld [vmem:[%s3 + $0x268] sm:$0xff]
  %v2456 = vld [vmem:[%s3 + $0x270] sm:$0xff]
  %v2457 = vld [vmem:[%s3 + $0x278] sm:$0xff]
  %v2458 = vld [vmem:[%s3 + $0x280] sm:$0xff]
  %v2459 = vld [vmem:[%s3 + $0x288] sm:$0xff]
  %v2460 = vld [vmem:[%s3 + $0x290] sm:$0xff]
  %v2461 = vld [vmem:[%s3 + $0x298] sm:$0xff]
  %v2462 = vld [vmem:[%s3 + $0x2a0] sm:$0xff]
  %v2463 = vld [vmem:[%s3 + $0x2a8] sm:$0xff]
  %v2464 = vld [vmem:[%s3 + $0x2b0] sm:$0xff]
  %v2465 = vld [vmem:[%s3 + $0x2b8] sm:$0xff]
  %v2466 = vld [vmem:[%s3 + $0x2c0] sm:$0xff]
  %v2467 = vld [vmem:[%s3 + $0x2c8] sm:$0xff]
  %v2468 = vld [vmem:[%s3 + $0x2d0] sm:$0xff]
  %v2469 = vld [vmem:[%s3 + $0x2d8] sm:$0xff]
  %v2470 = vld [vmem:[%s3 + $0x2e0] sm:$0xff]
  %v2471 = vld [vmem:[%s3 + $0x2e8] sm:$0xff]
  %v2472 = vld [vmem:[%s3 + $0x2f0] sm:$0xff]
  %v2473 = vld [vmem:[%s3 + $0x2f8] sm:$0xff]
  %v2474 = vld [vmem:[%s3 + $0x300] sm:$0xff]
  %v2475 = vld [vmem:[%s3 + $0x308] sm:$0xff]
  %v2476 = vld [vmem:[%s3 + $0x310] sm:$0xff]
  %v2477 = vld [vmem:[%s3 + $0x318] sm:$0xff]
  %v2478 = vld [vmem:[%s3 + $0x320] sm:$0xff]
  %v2479 = vld [vmem:[%s3 + $0x328] sm:$0xff]
  %v2480 = vld [vmem:[%s3 + $0x330] sm:$0xff]
  %v2481 = vld [vmem:[%s3 + $0x338] sm:$0xff]
  %v2482 = vld [vmem:[%s3 + $0x340] sm:$0xff]
  %v2483 = vld [vmem:[%s3 + $0x348] sm:$0xff]
  %v2484 = vld [vmem:[%s3 + $0x350] sm:$0xff]
  %v2485 = vld [vmem:[%s3 + $0x358] sm:$0xff]
  %v2486 = vld [vmem:[%s3 + $0x360] sm:$0xff]
  %v2487 = vld [vmem:[%s3 + $0x368] sm:$0xff]
  %v2488 = vld [vmem:[%s3 + $0x370] sm:$0xff]
  %v2489 = vld [vmem:[%s3 + $0x378] sm:$0xff]
  %v2490 = vld [vmem:[%s3 + $0x380] sm:$0xff]
  %v2491 = vld [vmem:[%s3 + $0x388] sm:$0xff]
  %v2492 = vld [vmem:[%s3 + $0x390] sm:$0xff]
  %v2493 = vld [vmem:[%s3 + $0x398] sm:$0xff]
  %v2494 = vld [vmem:[%s3 + $0x3a0] sm:$0xff]
  %v2495 = vld [vmem:[%s3 + $0x3a8] sm:$0xff]
  %v2496 = vld [vmem:[%s3 + $0x3b0] sm:$0xff]
  %v2497 = vld [vmem:[%s3 + $0x3b8] sm:$0xff]
  %v2498 = vld [vmem:[%s3 + $0x3c0] sm:$0xff]
  %v2499 = vld [vmem:[%s3 + $0x3c8] sm:$0xff]
  %v2500 = vld [vmem:[%s3 + $0x3d0] sm:$0xff]
  %v2501 = vld [vmem:[%s3 + $0x3d8] sm:$0xff]
  %v2502 = vld [vmem:[%s3 + $0x3e0] sm:$0xff]
  %v2503 = vld [vmem:[%s3 + $0x3e8] sm:$0xff]
  %v2504 = vld [vmem:[%s3 + $0x3f0] sm:$0xff]
  %v2505 = vld [vmem:[%s3 + $0x3f8] sm:$0xff]
  %v2506 = vld [vmem:[%s4] sm:$0x1]
  %v2508 = vlaneseq
  %v2509 = vshrl.u32 %v2508, 7
  %v2510 = vsub.s32 0, %v2509
  %v2511 = vrot.slane %v2506, %v2510
  %2513 = vmatprep.subr.mxu0 0.0
  %2514 = vmatpush1.msra.mxu0 %v2393
  %2515 = vmatprep.subr.mxu0 0.0
  %2516 = vmatpush1.msra.mxu0 %v2392
  %2517 = vmatprep.subr.mxu0 0.0
  %2518 = vmatpush1.msra.mxu0 %v2391
  %2519 = vmatprep.subr.mxu0 0.0
  %2520 = vmatpush1.msra.mxu0 %v2390
  %2521 = vmatprep.subr.mxu0 0.0
  %2522 = vmatpush1.msra.mxu0 %v2389
  %2523 = vmatprep.subr.mxu0 0.0
  %2524 = vmatpush1.msra.mxu0 %v2388
  %2525 = vmatprep.subr.mxu0 0.0
  %2526 = vmatpush1.msra.mxu0 %v2387
  %2527 = vmatprep.subr.mxu0 0.0
  %2528 = vmatpush1.msra.mxu0 %v2386
  %2529 = vmatprep.subr.mxu0 0.0
  %2530 = vmatpush1.msra.mxu0 %v2385
  %2531 = vmatprep.subr.mxu0 0.0
  %2532 = vmatpush1.msra.mxu0 %v2384
  %2533 = vmatprep.subr.mxu0 0.0
  %2534 = vmatpush1.msra.mxu0 %v2383
  %2535 = vmatprep.subr.mxu0 0.0
  %2536 = vmatpush1.msra.mxu0 %v2382
  %2537 = vmatprep.subr.mxu0 0.0
  %2538 = vmatpush1.msra.mxu0 %v2381
  %2539 = vmatprep.subr.mxu0 0.0
  %2540 = vmatpush1.msra.mxu0 %v2380
  %2541 = vmatprep.subr.mxu0 0.0
  %2542 = vmatpush1.msra.mxu0 %v2379
  %2543 = vmatprep.subr.mxu0 0.0
  %2544 = vmatpush1.msra.mxu0 %v2378
  %2545 = vmatprep.subr.mxu0 0.0
  %2546 = vmatpush2.msra.mxu0 %v2409
  %2547 = vmatprep.subr.mxu0 0.0
  %2548 = vmatpush2.msra.mxu0 %v2408
  %2549 = vmatprep.subr.mxu0 0.0
  %2550 = vmatpush2.msra.mxu0 %v2407
  %2551 = vmatprep.subr.mxu0 0.0
  %2552 = vmatpush2.msra.mxu0 %v2406
  %2553 = vmatprep.subr.mxu0 0.0
  %2554 = vmatpush2.msra.mxu0 %v2405
  %2555 = vmatprep.subr.mxu0 0.0
  %2556 = vmatpush2.msra.mxu0 %v2404
  %2557 = vmatprep.subr.mxu0 0.0
  %2558 = vmatpush2.msra.mxu0 %v2403
  %2559 = vmatprep.subr.mxu0 0.0
  %2560 = vmatpush2.msra.mxu0 %v2402
  %2561 = vmatprep.subr.mxu0 0.0
  %2562 = vmatpush2.msra.mxu0 %v2401
  %2563 = vmatprep.subr.mxu0 0.0
  %2564 = vmatpush2.msra.mxu0 %v2400
  %2565 = vmatprep.subr.mxu0 0.0
  %2566 = vmatpush2.msra.mxu0 %v2399
  %2567 = vmatprep.subr.mxu0 0.0
  %2568 = vmatpush2.msra.mxu0 %v2398
  %2569 = vmatprep.subr.mxu0 0.0
  %2570 = vmatpush2.msra.mxu0 %v2397
  %2571 = vmatprep.subr.mxu0 0.0
  %2572 = vmatpush2.msra.mxu0 %v2396
  %2573 = vmatprep.subr.mxu0 0.0
  %2574 = vmatpush2.msra.mxu0 %v2395
  %2575 = vmatprep.subr.mxu0 0.0
  %2576 = vmatpush2.msra.mxu0 %v2394
  %2577 = vmatprep.mubr.f32.mxu0 %v2315
  %2578 = vmatmul.mubr.f32.gmra.mxu0 %v2314
  %v2579 = vpop.f32.mrf.mxu0
  %v2580 = vadd.f32 %v2511, %v2579
  %v2581 = vpop.f32.mrf.mxu0
  %2582 = vmatprep.mubr.f32.mxu0 %v2323
  %2583 = vmatmul.mubr.f32.gmra.mxu0 %v2322
  %v2584 = vpop.f32.mrf.mxu0
  %v2585 = vadd.f32 %v2511, %v2584
  %v2586 = vpop.f32.mrf.mxu0
  %2587 = vmatprep.mubr.f32.mxu0 %v2331
  %2588 = vmatmul.mubr.f32.gmra.mxu0 %v2330
  %v2589 = vpop.f32.mrf.mxu0
  %v2590 = vadd.f32 %v2511, %v2589
  %v2591 = vpop.f32.mrf.mxu0
  %2592 = vmatprep.mubr.f32.mxu0 %v2339
  %2593 = vmatmul.mubr.f32.gmra.mxu0 %v2338
  %v2594 = vpop.f32.mrf.mxu0
  %v2595 = vadd.f32 %v2511, %v2594
  %v2596 = vpop.f32.mrf.mxu0
  %2597 = vmatprep.mubr.f32.mxu0 %v2347
  %2598 = vmatmul.mubr.f32.gmra.mxu0 %v2346
  %v2599 = vpop.f32.mrf.mxu0
  %v2600 = vadd.f32 %v2511, %v2599
  %v2601 = vpop.f32.mrf.mxu0
  %2602 = vmatprep.mubr.f32.mxu0 %v2355
  %2603 = vmatmul.mubr.f32.gmra.mxu0 %v2354
  %v2604 = vpop.f32.mrf.mxu0
  %v2605 = vadd.f32 %v2511, %v2604
  %v2606 = vpop.f32.mrf.mxu0
  %2607 = vmatprep.mubr.f32.mxu0 %v2363
  %2608 = vmatmul.mubr.f32.gmra.mxu0 %v2362
  %v2609 = vpop.f32.mrf.mxu0
  %v2610 = vadd.f32 %v2511, %v2609
  %v2611 = vpop.f32.mrf.mxu0
  %2612 = vmatprep.mubr.f32.mxu0 %v2371
  %2613 = vmatmul.mubr.f32.gmra.mxu0 %v2370
  %v2614 = vpop.f32.mrf.mxu0
  %v2615 = vadd.f32 %v2511, %v2614
  %v2616 = vpop.f32.mrf.mxu0
  %2617 = vdwg.mxu0
  %2618 = vmatprep.subr.mxu0 0.0
  %2619 = vmatpush1.msra.mxu0 %v2425
  %2620 = vmatprep.subr.mxu0 0.0
  %2621 = vmatpush1.msra.mxu0 %v2424
  %2622 = vmatprep.subr.mxu0 0.0
  %2623 = vmatpush1.msra.mxu0 %v2423
  %2624 = vmatprep.subr.mxu0 0.0
  %2625 = vmatpush1.msra.mxu0 %v2422
  %2626 = vmatprep.subr.mxu0 0.0
  %2627 = vmatpush1.msra.mxu0 %v2421
  %2628 = vmatprep.subr.mxu0 0.0
  %2629 = vmatpush1.msra.mxu0 %v2420
  %2630 = vmatprep.subr.mxu0 0.0
  %2631 = vmatpush1.msra.mxu0 %v2419
  %2632 = vmatprep.subr.mxu0 0.0
  %2633 = vmatpush1.msra.mxu0 %v2418
  %2634 = vmatprep.subr.mxu0 0.0
  %2635 = vmatpush1.msra.mxu0 %v2417
  %2636 = vmatprep.subr.mxu0 0.0
  %2637 = vmatpush1.msra.mxu0 %v2416
  %2638 = vmatprep.subr.mxu0 0.0
  %2639 = vmatpush1.msra.mxu0 %v2415
  %2640 = vmatprep.subr.mxu0 0.0
  %2641 = vmatpush1.msra.mxu0 %v2414
  %2642 = vmatprep.subr.mxu0 0.0
  %2643 = vmatpush1.msra.mxu0 %v2413
  %2644 = vmatprep.subr.mxu0 0.0
  %2645 = vmatpush1.msra.mxu0 %v2412
  %2646 = vmatprep.subr.mxu0 0.0
  %2647 = vmatpush1.msra.mxu0 %v2411
  %2648 = vmatprep.subr.mxu0 0.0
  %2649 = vmatpush1.msra.mxu0 %v2410
  %2650 = vmatprep.subr.mxu0 0.0
  %2651 = vmatpush2.msra.mxu0 %v2441
  %2652 = vmatprep.subr.mxu0 0.0
  %2653 = vmatpush2.msra.mxu0 %v2440
  %2654 = vmatprep.subr.mxu0 0.0
  %2655 = vmatpush2.msra.mxu0 %v2439
  %2656 = vmatprep.subr.mxu0 0.0
  %2657 = vmatpush2.msra.mxu0 %v2438
  %2658 = vmatprep.subr.mxu0 0.0
  %2659 = vmatpush2.msra.mxu0 %v2437
  %2660 = vmatprep.subr.mxu0 0.0
  %2661 = vmatpush2.msra.mxu0 %v2436
  %2662 = vmatprep.subr.mxu0 0.0
  %2663 = vmatpush2.msra.mxu0 %v2435
  %2664 = vmatprep.subr.mxu0 0.0
  %2665 = vmatpush2.msra.mxu0 %v2434
  %2666 = vmatprep.subr.mxu0 0.0
  %2667 = vmatpush2.msra.mxu0 %v2433
  %2668 = vmatprep.subr.mxu0 0.0
  %2669 = vmatpush2.msra.mxu0 %v2432
  %2670 = vmatprep.subr.mxu0 0.0
  %2671 = vmatpush2.msra.mxu0 %v2431
  %2672 = vmatprep.subr.mxu0 0.0
  %2673 = vmatpush2.msra.mxu0 %v2430
  %2674 = vmatprep.subr.mxu0 0.0
  %2675 = vmatpush2.msra.mxu0 %v2429
  %2676 = vmatprep.subr.mxu0 0.0
  %2677 = vmatpush2.msra.mxu0 %v2428
  %2678 = vmatprep.subr.mxu0 0.0
  %2679 = vmatpush2.msra.mxu0 %v2427
  %2680 = vmatprep.subr.mxu0 0.0
  %2681 = vmatpush2.msra.mxu0 %v2426
  %2682 = vmatprep.mubr.f32.mxu0 %v2317
  %2683 = vmatmul.mubr.f32.gmra.mxu0 %v2316
  %v2684 = vpop.f32.mrf.mxu0
  %v2685 = vadd.f32 %v2580, %v2684
  %v2686 = vpop.f32.mrf.mxu0
  %2687 = vmatprep.mubr.f32.mxu0 %v2325
  %2688 = vmatmul.mubr.f32.gmra.mxu0 %v2324
  %v2689 = vpop.f32.mrf.mxu0
  %v2690 = vadd.f32 %v2585, %v2689
  %v2691 = vpop.f32.mrf.mxu0
  %2692 = vmatprep.mubr.f32.mxu0 %v2333
  %2693 = vmatmul.mubr.f32.gmra.mxu0 %v2332
  %v2694 = vpop.f32.mrf.mxu0
  %v2695 = vadd.f32 %v2590, %v2694
  %v2696 = vpop.f32.mrf.mxu0
  %2697 = vmatprep.mubr.f32.mxu0 %v2341
  %2698 = vmatmul.mubr.f32.gmra.mxu0 %v2340
  %v2699 = vpop.f32.mrf.mxu0
  %v2700 = vadd.f32 %v2595, %v2699
  %v2701 = vpop.f32.mrf.mxu0
  %2702 = vmatprep.mubr.f32.mxu0 %v2349
  %2703 = vmatmul.mubr.f32.gmra.mxu0 %v2348
  %v2704 = vpop.f32.mrf.mxu0
  %v2705 = vadd.f32 %v2600, %v2704
  %v2706 = vpop.f32.mrf.mxu0
  %2707 = vmatprep.mubr.f32.mxu0 %v2357
  %2708 = vmatmul.mubr.f32.gmra.mxu0 %v2356
  %v2709 = vpop.f32.mrf.mxu0
  %v2710 = vadd.f32 %v2605, %v2709
  %v2711 = vpop.f32.mrf.mxu0
  %2712 = vmatprep.mubr.f32.mxu0 %v2365
  %2713 = vmatmul.mubr.f32.gmra.mxu0 %v2364
  %v2714 = vpop.f32.mrf.mxu0
  %v2715 = vadd.f32 %v2610, %v2714
  %v2716 = vpop.f32.mrf.mxu0
  %2717 = vmatprep.mubr.f32.mxu0 %v2373
  %2718 = vmatmul.mubr.f32.gmra.mxu0 %v2372
  %v2719 = vpop.f32.mrf.mxu0
  %v2720 = vadd.f32 %v2615, %v2719
  %v2721 = vpop.f32.mrf.mxu0
  %2722 = vdwg.mxu0
  %2723 = vmatprep.subr.mxu0 0.0
  %2724 = vmatpush1.msra.mxu0 %v2457
  %2725 = vmatprep.subr.mxu0 0.0
  %2726 = vmatpush1.msra.mxu0 %v2456
  %2727 = vmatprep.subr.mxu0 0.0
  %2728 = vmatpush1.msra.mxu0 %v2455
  %2729 = vmatprep.subr.mxu0 0.0
  %2730 = vmatpush1.msra.mxu0 %v2454
  %2731 = vmatprep.subr.mxu0 0.0
  %2732 = vmatpush1.msra.mxu0 %v2453
  %2733 = vmatprep.subr.mxu0 0.0
  %2734 = vmatpush1.msra.mxu0 %v2452
  %2735 = vmatprep.subr.mxu0 0.0
  %2736 = vmatpush1.msra.mxu0 %v2451
  %2737 = vmatprep.subr.mxu0 0.0
  %2738 = vmatpush1.msra.mxu0 %v2450
  %2739 = vmatprep.subr.mxu0 0.0
  %2740 = vmatpush1.msra.mxu0 %v2449
  %2741 = vmatprep.subr.mxu0 0.0
  %2742 = vmatpush1.msra.mxu0 %v2448
  %2743 = vmatprep.subr.mxu0 0.0
  %2744 = vmatpush1.msra.mxu0 %v2447
  %2745 = vmatprep.subr.mxu0 0.0
  %2746 = vmatpush1.msra.mxu0 %v2446
  %2747 = vmatprep.subr.mxu0 0.0
  %2748 = vmatpush1.msra.mxu0 %v2445
  %2749 = vmatprep.subr.mxu0 0.0
  %2750 = vmatpush1.msra.mxu0 %v2444
  %2751 = vmatprep.subr.mxu0 0.0
  %2752 = vmatpush1.msra.mxu0 %v2443
  %2753 = vmatprep.subr.mxu0 0.0
  %2754 = vmatpush1.msra.mxu0 %v2442
  %2755 = vmatprep.subr.mxu0 0.0
  %2756 = vmatpush2.msra.mxu0 %v2473
  %2757 = vmatprep.subr.mxu0 0.0
  %2758 = vmatpush2.msra.mxu0 %v2472
  %2759 = vmatprep.subr.mxu0 0.0
  %2760 = vmatpush2.msra.mxu0 %v2471
  %2761 = vmatprep.subr.mxu0 0.0
  %2762 = vmatpush2.msra.mxu0 %v2470
  %2763 = vmatprep.subr.mxu0 0.0
  %2764 = vmatpush2.msra.mxu0 %v2469
  %2765 = vmatprep.subr.mxu0 0.0
  %2766 = vmatpush2.msra.mxu0 %v2468
  %2767 = vmatprep.subr.mxu0 0.0
  %2768 = vmatpush2.msra.mxu0 %v2467
  %2769 = vmatprep.subr.mxu0 0.0
  %2770 = vmatpush2.msra.mxu0 %v2466
  %2771 = vmatprep.subr.mxu0 0.0
  %2772 = vmatpush2.msra.mxu0 %v2465
  %2773 = vmatprep.subr.mxu0 0.0
  %2774 = vmatpush2.msra.mxu0 %v2464
  %2775 = vmatprep.subr.mxu0 0.0
  %2776 = vmatpush2.msra.mxu0 %v2463
  %2777 = vmatprep.subr.mxu0 0.0
  %2778 = vmatpush2.msra.mxu0 %v2462
  %2779 = vmatprep.subr.mxu0 0.0
  %2780 = vmatpush2.msra.mxu0 %v2461
  %2781 = vmatprep.subr.mxu0 0.0
  %2782 = vmatpush2.msra.mxu0 %v2460
  %2783 = vmatprep.subr.mxu0 0.0
  %2784 = vmatpush2.msra.mxu0 %v2459
  %2785 = vmatprep.subr.mxu0 0.0
  %2786 = vmatpush2.msra.mxu0 %v2458
  %2787 = vmatprep.mubr.f32.mxu0 %v2319
  %2788 = vmatmul.mubr.f32.gmra.mxu0 %v2318
  %v2789 = vpop.f32.mrf.mxu0
  %v2790 = vadd.f32 %v2685, %v2789
  %v2791 = vpop.f32.mrf.mxu0
  %2792 = vmatprep.mubr.f32.mxu0 %v2327
  %2793 = vmatmul.mubr.f32.gmra.mxu0 %v2326
  %v2794 = vpop.f32.mrf.mxu0
  %v2795 = vadd.f32 %v2690, %v2794
  %v2796 = vpop.f32.mrf.mxu0
  %2797 = vmatprep.mubr.f32.mxu0 %v2335
  %2798 = vmatmul.mubr.f32.gmra.mxu0 %v2334
  %v2799 = vpop.f32.mrf.mxu0
  %v2800 = vadd.f32 %v2695, %v2799
  %v2801 = vpop.f32.mrf.mxu0
  %2802 = vmatprep.mubr.f32.mxu0 %v2343
  %2803 = vmatmul.mubr.f32.gmra.mxu0 %v2342
  %v2804 = vpop.f32.mrf.mxu0
  %v2805 = vadd.f32 %v2700, %v2804
  %v2806 = vpop.f32.mrf.mxu0
  %2807 = vmatprep.mubr.f32.mxu0 %v2351
  %2808 = vmatmul.mubr.f32.gmra.mxu0 %v2350
  %v2809 = vpop.f32.mrf.mxu0
  %v2810 = vadd.f32 %v2705, %v2809
  %v2811 = vpop.f32.mrf.mxu0
  %2812 = vmatprep.mubr.f32.mxu0 %v2359
  %2813 = vmatmul.mubr.f32.gmra.mxu0 %v2358
  %v2814 = vpop.f32.mrf.mxu0
  %v2815 = vadd.f32 %v2710, %v2814
  %v2816 = vpop.f32.mrf.mxu0
  %2817 = vmatprep.mubr.f32.mxu0 %v2367
  %2818 = vmatmul.mubr.f32.gmra.mxu0 %v2366
  %v2819 = vpop.f32.mrf.mxu0
  %v2820 = vadd.f32 %v2715, %v2819
  %v2821 = vpop.f32.mrf.mxu0
  %2822 = vmatprep.mubr.f32.mxu0 %v2375
  %2823 = vmatmul.mubr.f32.gmra.mxu0 %v2374
  %v2824 = vpop.f32.mrf.mxu0
  %v2825 = vadd.f32 %v2720, %v2824
  %v2826 = vpop.f32.mrf.mxu0
  %2827 = vdwg.mxu0
  %2828 = vmatprep.subr.mxu0 0.0
  %2829 = vmatpush1.msra.mxu0 %v2489
  %2830 = vmatprep.subr.mxu0 0.0
  %2831 = vmatpush1.msra.mxu0 %v2488
  %2832 = vmatprep.subr.mxu0 0.0
  %2833 = vmatpush1.msra.mxu0 %v2487
  %2834 = vmatprep.subr.mxu0 0.0
  %2835 = vmatpush1.msra.mxu0 %v2486
  %2836 = vmatprep.subr.mxu0 0.0
  %2837 = vmatpush1.msra.mxu0 %v2485
  %2838 = vmatprep.subr.mxu0 0.0
  %2839 = vmatpush1.msra.mxu0 %v2484
  %2840 = vmatprep.subr.mxu0 0.0
  %2841 = vmatpush1.msra.mxu0 %v2483
  %2842 = vmatprep.subr.mxu0 0.0
  %2843 = vmatpush1.msra.mxu0 %v2482
  %2844 = vmatprep.subr.mxu0 0.0
  %2845 = vmatpush1.msra.mxu0 %v2481
  %2846 = vmatprep.subr.mxu0 0.0
  %2847 = vmatpush1.msra.mxu0 %v2480
  %2848 = vmatprep.subr.mxu0 0.0
  %2849 = vmatpush1.msra.mxu0 %v2479
  %2850 = vmatprep.subr.mxu0 0.0
  %2851 = vmatpush1.msra.mxu0 %v2478
  %2852 = vmatprep.subr.mxu0 0.0
  %2853 = vmatpush1.msra.mxu0 %v2477
  %2854 = vmatprep.subr.mxu0 0.0
  %2855 = vmatpush1.msra.mxu0 %v2476
  %2856 = vmatprep.subr.mxu0 0.0
  %2857 = vmatpush1.msra.mxu0 %v2475
  %2858 = vmatprep.subr.mxu0 0.0
  %2859 = vmatpush1.msra.mxu0 %v2474
  %2860 = vmatprep.subr.mxu0 0.0
  %2861 = vmatpush2.msra.mxu0 %v2505
  %2862 = vmatprep.subr.mxu0 0.0
  %2863 = vmatpush2.msra.mxu0 %v2504
  %2864 = vmatprep.subr.mxu0 0.0
  %2865 = vmatpush2.msra.mxu0 %v2503
  %2866 = vmatprep.subr.mxu0 0.0
  %2867 = vmatpush2.msra.mxu0 %v2502
  %2868 = vmatprep.subr.mxu0 0.0
  %2869 = vmatpush2.msra.mxu0 %v2501
  %2870 = vmatprep.subr.mxu0 0.0
  %2871 = vmatpush2.msra.mxu0 %v2500
  %2872 = vmatprep.subr.mxu0 0.0
  %2873 = vmatpush2.msra.mxu0 %v2499
  %2874 = vmatprep.subr.mxu0 0.0
  %2875 = vmatpush2.msra.mxu0 %v2498
  %2876 = vmatprep.subr.mxu0 0.0
  %2877 = vmatpush2.msra.mxu0 %v2497
  %2878 = vmatprep.subr.mxu0 0.0
  %2879 = vmatpush2.msra.mxu0 %v2496
  %2880 = vmatprep.subr.mxu0 0.0
  %2881 = vmatpush2.msra.mxu0 %v2495
  %2882 = vmatprep.subr.mxu0 0.0
  %2883 = vmatpush2.msra.mxu0 %v2494
  %2884 = vmatprep.subr.mxu0 0.0
  %2885 = vmatpush2.msra.mxu0 %v2493
  %2886 = vmatprep.subr.mxu0 0.0
  %2887 = vmatpush2.msra.mxu0 %v2492
  %2888 = vmatprep.subr.mxu0 0.0
  %2889 = vmatpush2.msra.mxu0 %v2491
  %2890 = vmatprep.subr.mxu0 0.0
  %2891 = vmatpush2.msra.mxu0 %v2490
  %2892 = vmatprep.mubr.f32.mxu0 %v2321
  %2893 = vmatmul.mubr.f32.gmra.mxu0 %v2320
  %v2894 = vpop.f32.mrf.mxu0
  %v2895 = vadd.f32 %v2790, %v2894
  %v2896 = vpop.f32.mrf.mxu0
  %2897 = vmatprep.mubr.f32.mxu0 %v2329
  %2898 = vmatmul.mubr.f32.gmra.mxu0 %v2328
  %v2899 = vpop.f32.mrf.mxu0
  %v2900 = vadd.f32 %v2795, %v2899
  %v2901 = vpop.f32.mrf.mxu0
  %2902 = vmatprep.mubr.f32.mxu0 %v2337
  %2903 = vmatmul.mubr.f32.gmra.mxu0 %v2336
  %v2904 = vpop.f32.mrf.mxu0
  %v2905 = vadd.f32 %v2800, %v2904
  %v2906 = vpop.f32.mrf.mxu0
  %2907 = vmatprep.mubr.f32.mxu0 %v2345
  %2908 = vmatmul.mubr.f32.gmra.mxu0 %v2344
  %v2909 = vpop.f32.mrf.mxu0
  %v2910 = vadd.f32 %v2805, %v2909
  %v2911 = vpop.f32.mrf.mxu0
  %2912 = vmatprep.mubr.f32.mxu0 %v2353
  %2913 = vmatmul.mubr.f32.gmra.mxu0 %v2352
  %v2914 = vpop.f32.mrf.mxu0
  %v2915 = vadd.f32 %v2810, %v2914
  %v2916 = vpop.f32.mrf.mxu0
  %2917 = vmatprep.mubr.f32.mxu0 %v2361
  %2918 = vmatmul.mubr.f32.gmra.mxu0 %v2360
  %v2919 = vpop.f32.mrf.mxu0
  %v2920 = vadd.f32 %v2815, %v2919
  %v2921 = vpop.f32.mrf.mxu0
  %2922 = vmatprep.mubr.f32.mxu0 %v2369
  %2923 = vmatmul.mubr.f32.gmra.mxu0 %v2368
  %v2924 = vpop.f32.mrf.mxu0
  %v2925 = vadd.f32 %v2820, %v2924
  %v2926 = vpop.f32.mrf.mxu0
  %2927 = vmatprep.mubr.f32.mxu0 %v2377
  %2928 = vmatmul.mubr.f32.gmra.mxu0 %v2376
  %v2929 = vpop.f32.mrf.mxu0
  %v2930 = vadd.f32 %v2825, %v2929
  %v2931 = vpop.f32.mrf.mxu0
  %2932 = vdwg.mxu0
  %vm2933 = vcmask 130048
  %2934 = vst.msk [vmem:[%s5] sm:$0xff] %vm2933, %v2895
  %2935 = vst.msk [vmem:[%s5 + $0x8] sm:$0xff] %vm2933, %v2900
  %2936 = vst.msk [vmem:[%s5 + $0x10] sm:$0xff] %vm2933, %v2905
  %2937 = vst.msk [vmem:[%s5 + $0x18] sm:$0xff] %vm2933, %v2910
  %2938 = vst.msk [vmem:[%s5 + $0x20] sm:$0xff] %vm2933, %v2915
  %2939 = vst.msk [vmem:[%s5 + $0x28] sm:$0xff] %vm2933, %v2920
  %2940 = vst.msk [vmem:[%s5 + $0x30] sm:$0xff] %vm2933, %v2925
  %2941 = vst.msk [vmem:[%s5 + $0x38] sm:$0xff] %vm2933, %v2930
  // Predicated region
  $region22: #{fno_forward.11} parent=0 // pred_check
    _
  $region23: #{fno_forward.11} parent=0 // pred_check_branch
    %2943 = sbr.rel (0) target = $region25
  $region24: #{fno_forward.11} parent=0 // pred_region
    _
  $region25: #{fno_forward.11} parent=0 // pred_fallthru
    _
  // Predicated region
  $region26: #{fno_forward.11} parent=0 // pred_check
    _
  $region27: #{fno_forward.11} parent=0 // pred_check_branch
    %2945 = sbr.rel (0) target = $region29
  $region28: #{fno_forward.11} parent=0 // pred_region
    _
  $region29: #{fno_forward.11} parent=0 // pred_fallthru
    _

</llo_original>
